<compile_context>
chip_gen: v5e
topology: v5e:2x2
jax: 0.10.0
libtpu: 0.0.40
codegen_flags: <defaults>
</compile_context>

<pallas_src>
import functools

import numpy as np
import jax
import jax.numpy as jnp
from jax.experimental import pallas as pl
from jax.experimental.pallas import tpu as pltpu

LN_EPS = 1e-5       # torch InstanceNorm1d default eps
SUBSET_EPS = 1e-4   # eps used by the reference for subset_size


def _rownorm(x):
    """InstanceNorm1d (affine=False) as applied in the module: per-row normalization
    over the last (feature) dim with biased variance."""
    mu = jnp.mean(x, axis=-1, keepdims=True)
    xc = x - mu
    var = jnp.mean(xc * xc, axis=-1, keepdims=True)
    return xc * jax.lax.rsqrt(var + LN_EPS)


def _kernel(vf_ref, mcol_ref, mrow_ref, eloh_ref, subs_ref, midx_ref, mint_ref,
            fpack_ref, wf_ref, wh_ref, bc_ref, w1_ref, dpack_ref, w2a_ref, w2b_ref,
            probs_ref, spect_ref):
    vf = vf_ref[...]          # (Bt, A, G)
    mcol = mcol_ref[...]      # (Bt, A, 1)   vertex mask, column layout
    mrow = mrow_ref[...]      # (Bt, 1, A)   vertex mask, row layout
    eloh = eloh_ref[...]      # (Bt, A, E)   per-atom element one-hot
    subs = subs_ref[...]      # (Bt, S, A)   atom subsets
    midx = midx_ref[...]      # (Bt, S, P)   peak spectrum-bin indices (int32)
    mint = mint_ref[...]      # (Bt, S, P)   peak intensities

    Bt, S, _ = subs.shape
    G = vf.shape[-1]
    E = eloh.shape[-1]
    P = midx.shape[-1]
    NB = spect_ref.shape[-1]
    N = Bt * S

    expand = fpack_ref[0:E, :]        # (E, F_PAD)  replicate element count over its field
    pos = fpack_ref[E:E + 1, :]       # (1, F_PAD)  within-field slot index (+inf on padding)

    # ---- masking + subset-weighted vertex reduction (batched MXU matmuls) ----
    mvf = vf * mcol                                               # masked vertex features
    subm = subs * mrow                                            # masked subsets
    sws = jnp.einsum('bsa,bag->bsg', subm, mvf,
                     preferred_element_type=jnp.float32)          # (Bt, S, G)
    counts = jnp.einsum('bsa,bae->bse', subs, eloh,
                        preferred_element_type=jnp.float32)       # (Bt, S, E) element counts

    ssize = jnp.sum(subm, axis=-1, keepdims=True) + SUBSET_EPS    # (Bt, S, 1)
    swm = (sws / ssize).reshape(N, G)                             # sample-weighted mean
    h0 = _rownorm(swm)                                            # subset_weighted_norm

    # ---- StructuredOneHot (accumulated encoding) ----
    # TODO(synk): StructuredOneHot source not provided; assuming accumulated
    # ("thermometer") encoding: within each field, slot j = 1 iff j <= element count.
    counts_exp = jnp.dot(counts.reshape(N, E), expand,
                         preferred_element_type=jnp.float32)      # (N, F_PAD)
    foh = (pos <= counts_exp).astype(jnp.float32)                 # (N, F_PAD)

    # ---- combine_layers (Linear on concat([formula_oh, subset_normed])) + ReLU ----
    combined = jax.nn.relu(
        jnp.dot(foh, wf_ref[...], preferred_element_type=jnp.float32)
        + jnp.dot(h0, wh_ref[...], preferred_element_type=jnp.float32)
        + bc_ref[...])                                            # (N, G)
    x = _rownorm(combined)                                        # norm_post_combine

    # ---- MLP head ----
    b1 = dpack_ref[0:1, :]
    b2a = dpack_ref[1:2, :]
    b2b = dpack_ref[2:3, :]
    ws = dpack_ref[3:4, :]                                        # (1, D) score weight
    x = jax.nn.relu(jnp.dot(x, w1_ref[...], preferred_element_type=jnp.float32) + b1)
    t = jax.nn.leaky_relu(jnp.dot(x, w2a_ref[...], preferred_element_type=jnp.float32) + b2a,
                          negative_slope=0.01)
    t = jax.nn.leaky_relu(jnp.dot(t, w2b_ref[...], preferred_element_type=jnp.float32) + b2b,
                          negative_slope=0.01)
    x = jax.nn.relu(t)
    x = _rownorm(x)                                               # norm_pre_score, (N, D)

    # ---- scores + softmax over subsets, kept lane-dense (S on the lane axis) ----
    # f_combine_score bias omitted: adding a constant to every score is a no-op
    # under the subset softmax.
    D = ws.shape[-1]
    x3 = x.reshape(Bt, S, D)
    ws_b = jnp.broadcast_to(ws[None, :, :], (Bt, 1, D))
    scores = jnp.einsum('bud,bsd->bus', ws_b, x3,
                        preferred_element_type=jnp.float32)       # (Bt, 1, S)
    m = jnp.max(scores, axis=-1, keepdims=True)
    e = jnp.exp(scores - m)
    probs = e / jnp.sum(e, axis=-1, keepdims=True)                # (Bt, 1, S)

    # ---- in-kernel sparse mass matrix + MXU contraction with the probs ----
    # mm[b, s, n] = sum_p intensity[b, s, p] * [mass_idx[b, s, p] == n]
    iota_nb = jax.lax.broadcasted_iota(jnp.int32, (1, 1, NB), 2)
    mm = jnp.zeros((Bt, S, NB), jnp.float32)
    for p in range(P):                                            # static unroll, P is small
        hit = (midx[:, :, p:p + 1] == iota_nb).astype(jnp.float32)
        mm = mm + hit * mint[:, :, p:p + 1]
    spect = jnp.einsum('bus,bsn->bun', probs, mm,
                       preferred_element_type=jnp.float32)        # (Bt, 1, NB)

    probs_ref[...] = probs
    spect_ref[...] = spect


def subsets_forward(vert_feat, vert_mask, vert_element_oh, atom_subsets,
                    atom_subsets_peaks_mass_idx, atom_subsets_peaks_intensity,
                    params, *, num_bins, block_b=None):
    B, A, G = vert_feat.shape
    S = atom_subsets.shape[1]
    Bt = B if block_b is None else int(block_b)
    assert B % Bt == 0, "batch size must be divisible by block_b"

    mask_f = vert_mask.astype(jnp.float32)
    per_batch_arrays = [
        vert_feat.astype(jnp.float32),                # (B, A, G)
        mask_f[:, :, None],                           # (B, A, 1)
        mask_f[:, None, :],                           # (B, 1, A)
        vert_element_oh.astype(jnp.float32),          # (B, A, E)
        atom_subsets.astype(jnp.float32),             # (B, S, A)
        atom_subsets_peaks_mass_idx.astype(jnp.int32),   # (B, S, P)
        atom_subsets_peaks_intensity.astype(jnp.float32),  # (B, S, P)
    ]
    shared_arrays = [
        params["fpack"], params["wf"], params["wh"], params["bc"],
        params["w1"], params["dpack"], params["w2a"], params["w2b"],
    ]

    def batch_spec(a):
        nd = a.ndim
        return pl.BlockSpec((Bt,) + tuple(a.shape[1:]),
                            lambda b, _nd=nd: (b,) + (0,) * (_nd - 1))

    def shared_spec(a):
        nd = a.ndim
        return pl.BlockSpec(tuple(a.shape), lambda b, _nd=nd: (0,) * _nd)

    in_specs = ([batch_spec(a) for a in per_batch_arrays]
                + [shared_spec(a) for a in shared_arrays])

    out_shape = (jax.ShapeDtypeStruct((B, 1, S), jnp.float32),
                 jax.ShapeDtypeStruct((B, 1, num_bins), jnp.float32))
    out_specs = [pl.BlockSpec((Bt, 1, S), lambda b: (b, 0, 0)),
                 pl.BlockSpec((Bt, 1, num_bins), lambda b: (b, 0, 0))]

    probs3, spect3 = pl.pallas_call(
        _kernel,
        out_shape=out_shape,
        grid_spec=pltpu.PrefetchScalarGridSpec(
            num_scalar_prefetch=0,
            grid=(B // Bt,),
            in_specs=in_specs,
            out_specs=out_specs),
        compiler_params=pltpu.CompilerParams(
            dimension_semantics=("parallel",)),   # batch blocks are independent
    )(*per_batch_arrays, *shared_arrays)

    return {"spect_out": spect3[:, 0, :], "subset_probs": probs3[:, 0, :]}


def init_params(key, g_feat, internal_d, oh_sizes):
    """Synthetic deterministic parameters matching the module's layer shapes.
    The formula-encoding width is zero-padded up to a multiple of 128 lanes."""
    E = len(oh_sizes)
    f_enc = int(np.sum(oh_sizes))
    f_pad = int(np.ceil(f_enc / 128.0)) * 128
    keys = jax.random.split(key, 10)

    def w(k, shape, scale=0.1):
        return jax.random.normal(k, shape, dtype=jnp.float32) * scale

    # combine_layers: Linear(f_enc + g_feat, g_feat) split into formula / feature halves.
    wf = jnp.zeros((f_pad, g_feat), jnp.float32).at[:f_enc].set(w(keys[0], (f_enc, g_feat)))
    params = {
        "wf": wf,                                      # (F_PAD, G)
        "wh": w(keys[1], (g_feat, g_feat)),            # (G, G)
        "bc": w(keys[2], (1, g_feat), 0.01),           # combine bias
        "w1": w(keys[3], (g_feat, internal_d)),        # f_combine_l1
        "w2a": w(keys[4], (internal_d, internal_d), 0.05),  # f_combine_l2[0]
        "w2b": w(keys[5], (internal_d, internal_d), 0.05),  # f_combine_l2[1]
        # packed D-sized vectors: rows = [b1, b2a, b2b, ws(score weight)]
        "dpack": jnp.stack([
            w(keys[6], (internal_d,), 0.01),
            w(keys[7], (internal_d,), 0.01),
            w(keys[8], (internal_d,), 0.01),
            w(keys[9], (internal_d,), 0.1),
        ], axis=0),
    }

    # StructuredOneHot helpers, lane-padded to f_pad:
    #  expand replicates each element count across its field's slots,
    #  pos holds the within-field slot index (huge value on padding so it never fires).
    expand = np.zeros((E, f_pad), np.float32)
    pos = np.full((1, f_pad), 1e9, np.float32)
    off = 0
    for e, s in enumerate(oh_sizes):
        expand[e, off:off + s] = 1.0
        pos[0, off:off + s] = np.arange(s, dtype=np.float32)
        off += s
    params["fpack"] = jnp.asarray(np.concatenate([expand, pos], axis=0))  # (E+1, F_PAD)
    return params


if __name__ == "__main__":
    B, A, G = 4, 16, 32          # BATCH_N, ATOM_N, G_F
    S = 64                       # SUBSET_SAMPLES_N
    OH_SIZES = [20, 20, 20, 20, 20]
    E = len(OH_SIZES)
    D = 128                      # internal_d (small for the demo)
    P = 3                        # peaks per subset
    NUM_BINS = 256               # spect_bin.get_num_bins()
    BLOCK_B = 2                  # batch elements per grid step

    key = jax.random.PRNGKey(0)
    kp, kv, km, ke, ks, kmi, kin = jax.random.split(key, 7)

    params = init_params(kp, G, D, OH_SIZES)

    vert_feat = jax.random.normal(kv, (B, A, G), dtype=jnp.float32)
    vert_mask = (jax.random.uniform(km, (B, A)) < 0.8).astype(jnp.float32)
    elem_idx = jax.random.randint(ke, (B, A), 0, E)
    vert_element_oh = jax.nn.one_hot(elem_idx, E, dtype=jnp.float32)
    atom_subsets = (jax.random.uniform(ks, (B, S, A)) < 0.5).astype(jnp.float32)
    peaks_mass_idx = jax.random.randint(kmi, (B, S, P), 5, NUM_BINS - 5).astype(jnp.int32)
    peaks_intensity = jax.random.uniform(kin, (B, S, P), dtype=jnp.float32)

    fwd = jax.jit(functools.partial(subsets_forward, num_bins=NUM_BINS, block_b=BLOCK_B))
    out = fwd(vert_feat, vert_mask, vert_element_oh, atom_subsets,
              peaks_mass_idx, peaks_intensity, params)
    jax.block_until_ready(out)

    spect = out["spect_out"]
    probs = out["subset_probs"]
    assert spect.shape == (B, NUM_BINS)
    assert probs.shape == (B, S)
    assert bool(jnp.all(jnp.isfinite(spect)))
    assert bool(jnp.all(jnp.isfinite(probs)))
    # softmax rows sum to ~1
    assert bool(jnp.all(jnp.abs(jnp.sum(probs, axis=-1) - 1.0) < 1e-4))
    # spectrum total mass == sum_s probs[s] * sum_p intensity[s,p] (all peaks in range)
    expected_total = jnp.sum(probs * jnp.sum(peaks_intensity, axis=-1), axis=-1)
    assert bool(jnp.all(jnp.abs(jnp.sum(spect, axis=-1) - expected_total) < 5e-3))
    print("KERNEL_OK")
</pallas_src>

<mosaic_0001>
module attributes {stable_mosaic.version = 11 : i64} {
  func.func @_kernel(%arg0: i32, %arg1: memref<2x16x32xf32, #tpu.memory_space<vmem>>, %arg2: memref<2x16x1xf32, #tpu.memory_space<vmem>>, %arg3: memref<2x1x16xf32, #tpu.memory_space<vmem>>, %arg4: memref<2x16x5xf32, #tpu.memory_space<vmem>>, %arg5: memref<2x64x16xf32, #tpu.memory_space<vmem>>, %arg6: memref<2x64x3xi32, #tpu.memory_space<vmem>>, %arg7: memref<2x64x3xf32, #tpu.memory_space<vmem>>, %arg8: memref<6x128xf32, #tpu.memory_space<vmem>>, %arg9: memref<128x32xf32, #tpu.memory_space<vmem>>, %arg10: memref<32x32xf32, #tpu.memory_space<vmem>>, %arg11: memref<1x32xf32, #tpu.memory_space<vmem>>, %arg12: memref<32x128xf32, #tpu.memory_space<vmem>>, %arg13: memref<4x128xf32, #tpu.memory_space<vmem>>, %arg14: memref<128x128xf32, #tpu.memory_space<vmem>>, %arg15: memref<128x128xf32, #tpu.memory_space<vmem>>, %arg16: memref<2x1x64xf32, #tpu.memory_space<vmem>>, %arg17: memref<2x1x256xf32, #tpu.memory_space<vmem>>) attributes {dimension_semantics = [#tpu.dimension_semantics<parallel>], iteration_bounds = array<i64: 2>, scalar_prefetch = 0 : i64, scratch_operands = 0 : i64, tpu.core_type = #tpu.core_type<tc>, window_params = [{transform_indices = @transform_0, window_bounds = array<i64: 2, 16, 32>}, {transform_indices = @transform_1, window_bounds = array<i64: 2, 16, 1>}, {transform_indices = @transform_2, window_bounds = array<i64: 2, 1, 16>}, {transform_indices = @transform_3, window_bounds = array<i64: 2, 16, 5>}, {transform_indices = @transform_4, window_bounds = array<i64: 2, 64, 16>}, {transform_indices = @transform_5, window_bounds = array<i64: 2, 64, 3>}, {transform_indices = @transform_6, window_bounds = array<i64: 2, 64, 3>}, {pipeline_mode = #tpu.pipeline_mode<synchronous>, transform_indices = @transform_7, window_bounds = array<i64: 6, 128>}, {pipeline_mode = #tpu.pipeline_mode<synchronous>, transform_indices = @transform_8, window_bounds = array<i64: 128, 32>}, {pipeline_mode = #tpu.pipeline_mode<synchronous>, transform_indices = @transform_9, window_bounds = array<i64: 32, 32>}, {pipeline_mode = #tpu.pipeline_mode<synchronous>, transform_indices = @transform_10, window_bounds = array<i64: 1, 32>}, {pipeline_mode = #tpu.pipeline_mode<synchronous>, transform_indices = @transform_11, window_bounds = array<i64: 32, 128>}, {pipeline_mode = #tpu.pipeline_mode<synchronous>, transform_indices = @transform_12, window_bounds = array<i64: 4, 128>}, {pipeline_mode = #tpu.pipeline_mode<synchronous>, transform_indices = @transform_13, window_bounds = array<i64: 128, 128>}, {pipeline_mode = #tpu.pipeline_mode<synchronous>, transform_indices = @transform_14, window_bounds = array<i64: 128, 128>}, {transform_indices = @transform_15, window_bounds = array<i64: 2, 1, 64>}, {transform_indices = @transform_16, window_bounds = array<i64: 2, 1, 256>}]} {
    %c0 = arith.constant 0 : index
    %c0_0 = arith.constant 0 : index
    %c0_1 = arith.constant 0 : index
    %0 = vector.load %arg1[%c0, %c0_0, %c0_1] : memref<2x16x32xf32, #tpu.memory_space<vmem>>, vector<2x16x32xf32>
    %c0_2 = arith.constant 0 : index
    %c0_3 = arith.constant 0 : index
    %c0_4 = arith.constant 0 : index
    %1 = vector.load %arg2[%c0_2, %c0_3, %c0_4] : memref<2x16x1xf32, #tpu.memory_space<vmem>>, vector<2x16x1xf32>
    %c0_5 = arith.constant 0 : index
    %c0_6 = arith.constant 0 : index
    %c0_7 = arith.constant 0 : index
    %2 = vector.load %arg3[%c0_5, %c0_6, %c0_7] : memref<2x1x16xf32, #tpu.memory_space<vmem>>, vector<2x1x16xf32>
    %c0_8 = arith.constant 0 : index
    %c0_9 = arith.constant 0 : index
    %c0_10 = arith.constant 0 : index
    %3 = vector.load %arg4[%c0_8, %c0_9, %c0_10] : memref<2x16x5xf32, #tpu.memory_space<vmem>>, vector<2x16x5xf32>
    %c0_11 = arith.constant 0 : index
    %c0_12 = arith.constant 0 : index
    %c0_13 = arith.constant 0 : index
    %4 = vector.load %arg5[%c0_11, %c0_12, %c0_13] : memref<2x64x16xf32, #tpu.memory_space<vmem>>, vector<2x64x16xf32>
    %c0_14 = arith.constant 0 : index
    %c0_15 = arith.constant 0 : index
    %c0_16 = arith.constant 0 : index
    %5 = vector.load %arg6[%c0_14, %c0_15, %c0_16] : memref<2x64x3xi32, #tpu.memory_space<vmem>>, vector<2x64x3xi32>
    %c0_17 = arith.constant 0 : index
    %c0_18 = arith.constant 0 : index
    %c0_19 = arith.constant 0 : index
    %6 = vector.load %arg7[%c0_17, %c0_18, %c0_19] : memref<2x64x3xf32, #tpu.memory_space<vmem>>, vector<2x64x3xf32>
    %c0_20 = arith.constant 0 : index
    %c0_21 = arith.constant 0 : index
    %7 = vector.load %arg8[%c0_20, %c0_21] : memref<6x128xf32, #tpu.memory_space<vmem>>, vector<5x128xf32>
    %c5 = arith.constant 5 : index
    %c0_22 = arith.constant 0 : index
    %8 = vector.load %arg8[%c5, %c0_22] : memref<6x128xf32, #tpu.memory_space<vmem>>, vector<1x128xf32>
    %9 = vector.broadcast %1 : vector<2x16x1xf32> to vector<2x16x32xf32>
    %10 = arith.mulf %0, %9 : vector<2x16x32xf32>
    %11 = vector.broadcast %2 : vector<2x1x16xf32> to vector<2x64x16xf32>
    %12 = arith.mulf %4, %11 : vector<2x64x16xf32>
    "tpu.trace_start"() <{level = 10 : i32, message = "bsa,bag->bsg"}> : () -> ()
    %cst = arith.constant dense<0.000000e+00> : vector<2x64x32xf32>
    %13 = tpu.matmul %12, %10, %cst {dimension_numbers = #tpu.dot_dimension_numbers<[2], [1], [1], [2], [0, 0, 0, 1, 1, 2], [0], [0]>} : vector<2x64x16xf32>, vector<2x16x32xf32>, vector<2x64x32xf32> -> vector<2x64x32xf32>
    "tpu.trace_stop"() : () -> ()
    "tpu.trace_start"() <{level = 10 : i32, message = "bsa,bae->bse"}> : () -> ()
    %cst_23 = arith.constant dense<0.000000e+00> : vector<2x64x5xf32>
    %14 = tpu.matmul %4, %3, %cst_23 {dimension_numbers = #tpu.dot_dimension_numbers<[2], [1], [1], [2], [0, 0, 0, 1, 1, 2], [0], [0]>} : vector<2x64x16xf32>, vector<2x16x5xf32>, vector<2x64x5xf32> -> vector<2x64x5xf32>
    "tpu.trace_stop"() : () -> ()
    %cst_24 = arith.constant dense<0.000000e+00> : vector<2x64xf32>
    %15 = vector.multi_reduction <add>, %12, %cst_24 [2] : vector<2x64x16xf32> to vector<2x64xf32>
    %16 = vector.shape_cast %15 : vector<2x64xf32> to vector<2x64x1xf32>
    %cst_25 = arith.constant 9.99999974E-5 : f32
    %17 = vector.broadcast %cst_25 : f32 to vector<2x64x1xf32>
    %18 = arith.addf %16, %17 : vector<2x64x1xf32>
    %19 = vector.broadcast %18 : vector<2x64x1xf32> to vector<2x64x32xf32>
    %20 = arith.divf %13, %19 : vector<2x64x32xf32>
    %21 = vector.shape_cast %20 : vector<2x64x32xf32> to vector<128x32xf32>
    %cst_26 = arith.constant dense<0.000000e+00> : vector<128xf32>
    %22 = vector.multi_reduction <add>, %21, %cst_26 [1] : vector<128x32xf32> to vector<128xf32>
    %23 = vector.shape_cast %22 : vector<128xf32> to vector<128x1xf32>
    %cst_27 = arith.constant 3.200000e+01 : f32
    %24 = vector.broadcast %cst_27 : f32 to vector<128x1xf32>
    %25 = arith.divf %23, %24 : vector<128x1xf32>
    %26 = vector.broadcast %25 : vector<128x1xf32> to vector<128x32xf32>
    %27 = arith.subf %21, %26 : vector<128x32xf32>
    %28 = arith.mulf %27, %27 : vector<128x32xf32>
    %cst_28 = arith.constant dense<0.000000e+00> : vector<128xf32>
    %29 = vector.multi_reduction <add>, %28, %cst_28 [1] : vector<128x32xf32> to vector<128xf32>
    %30 = vector.shape_cast %29 : vector<128xf32> to vector<128x1xf32>
    %cst_29 = arith.constant 3.200000e+01 : f32
    %31 = vector.broadcast %cst_29 : f32 to vector<128x1xf32>
    %32 = arith.divf %30, %31 : vector<128x1xf32>
    %cst_30 = arith.constant 9.99999974E-6 : f32
    %33 = vector.broadcast %cst_30 : f32 to vector<128x1xf32>
    %34 = arith.addf %32, %33 : vector<128x1xf32>
    %35 = math.rsqrt %34 : vector<128x1xf32>
    %36 = vector.broadcast %35 : vector<128x1xf32> to vector<128x32xf32>
    %37 = arith.mulf %27, %36 : vector<128x32xf32>
    %38 = vector.shape_cast %14 : vector<2x64x5xf32> to vector<128x5xf32>
    %cst_31 = arith.constant dense<0.000000e+00> : vector<128x128xf32>
    %39 = tpu.matmul %38, %7, %cst_31 {dimension_numbers = #tpu.dot_dimension_numbers<[1], [0], [0], [1], [0, 0, 1, 1], [], []>} : vector<128x5xf32>, vector<5x128xf32>, vector<128x128xf32> -> vector<128x128xf32>
    %40 = vector.broadcast %8 : vector<1x128xf32> to vector<128x128xf32>
    %41 = arith.cmpf ole, %40, %39 : vector<128x128xf32>
    %42 = arith.extui %41 : vector<128x128xi1> to vector<128x128xi32>
    %43 = arith.sitofp %42 : vector<128x128xi32> to vector<128x128xf32>
    %c0_32 = arith.constant 0 : index
    %c0_33 = arith.constant 0 : index
    %44 = vector.load %arg9[%c0_32, %c0_33] : memref<128x32xf32, #tpu.memory_space<vmem>>, vector<128x32xf32>
    %cst_34 = arith.constant dense<0.000000e+00> : vector<128x32xf32>
    %45 = tpu.matmul %43, %44, %cst_34 {dimension_numbers = #tpu.dot_dimension_numbers<[1], [0], [0], [1], [0, 0, 1, 1], [], []>} : vector<128x128xf32>, vector<128x32xf32>, vector<128x32xf32> -> vector<128x32xf32>
    %c0_35 = arith.constant 0 : index
    %c0_36 = arith.constant 0 : index
    %46 = vector.load %arg10[%c0_35, %c0_36] : memref<32x32xf32, #tpu.memory_space<vmem>>, vector<32x32xf32>
    %cst_37 = arith.constant dense<0.000000e+00> : vector<128x32xf32>
    %47 = tpu.matmul %37, %46, %cst_37 {dimension_numbers = #tpu.dot_dimension_numbers<[1], [0], [0], [1], [0, 0, 1, 1], [], []>} : vector<128x32xf32>, vector<32x32xf32>, vector<128x32xf32> -> vector<128x32xf32>
    %48 = arith.addf %45, %47 : vector<128x32xf32>
    %c0_38 = arith.constant 0 : index
    %c0_39 = arith.constant 0 : index
    %49 = vector.load %arg11[%c0_38, %c0_39] : memref<1x32xf32, #tpu.memory_space<vmem>>, vector<1x32xf32>
    %50 = vector.broadcast %49 : vector<1x32xf32> to vector<128x32xf32>
    %51 = arith.addf %48, %50 : vector<128x32xf32>
    %cst_40 = arith.constant 0.000000e+00 : f32
    %52 = vector.broadcast %cst_40 : f32 to vector<128x32xf32>
    %53 = arith.maximumf %51, %52 : vector<128x32xf32>
    %cst_41 = arith.constant dense<0.000000e+00> : vector<128xf32>
    %54 = vector.multi_reduction <add>, %53, %cst_41 [1] : vector<128x32xf32> to vector<128xf32>
    %55 = vector.shape_cast %54 : vector<128xf32> to vector<128x1xf32>
    %cst_42 = arith.constant 3.200000e+01 : f32
    %56 = vector.broadcast %cst_42 : f32 to vector<128x1xf32>
    %57 = arith.divf %55, %56 : vector<128x1xf32>
    %58 = vector.broadcast %57 : vector<128x1xf32> to vector<128x32xf32>
    %59 = arith.subf %53, %58 : vector<128x32xf32>
    %60 = arith.mulf %59, %59 : vector<128x32xf32>
    %cst_43 = arith.constant dense<0.000000e+00> : vector<128xf32>
    %61 = vector.multi_reduction <add>, %60, %cst_43 [1] : vector<128x32xf32> to vector<128xf32>
    %62 = vector.shape_cast %61 : vector<128xf32> to vector<128x1xf32>
    %cst_44 = arith.constant 3.200000e+01 : f32
    %63 = vector.broadcast %cst_44 : f32 to vector<128x1xf32>
    %64 = arith.divf %62, %63 : vector<128x1xf32>
    %cst_45 = arith.constant 9.99999974E-6 : f32
    %65 = vector.broadcast %cst_45 : f32 to vector<128x1xf32>
    %66 = arith.addf %64, %65 : vector<128x1xf32>
    %67 = math.rsqrt %66 : vector<128x1xf32>
    %68 = vector.broadcast %67 : vector<128x1xf32> to vector<128x32xf32>
    %69 = arith.mulf %59, %68 : vector<128x32xf32>
    %c0_46 = arith.constant 0 : index
    %c0_47 = arith.constant 0 : index
    %70 = vector.load %arg13[%c0_46, %c0_47] : memref<4x128xf32, #tpu.memory_space<vmem>>, vector<1x128xf32>
    %c1 = arith.constant 1 : index
    %c0_48 = arith.constant 0 : index
    %71 = vector.load %arg13[%c1, %c0_48] : memref<4x128xf32, #tpu.memory_space<vmem>>, vector<1x128xf32>
    %c2 = arith.constant 2 : index
    %c0_49 = arith.constant 0 : index
    %72 = vector.load %arg13[%c2, %c0_49] : memref<4x128xf32, #tpu.memory_space<vmem>>, vector<1x128xf32>
    %c3 = arith.constant 3 : index
    %c0_50 = arith.constant 0 : index
    %73 = vector.load %arg13[%c3, %c0_50] : memref<4x128xf32, #tpu.memory_space<vmem>>, vector<1x128xf32>
    %c0_51 = arith.constant 0 : index
    %c0_52 = arith.constant 0 : index
    %74 = vector.load %arg12[%c0_51, %c0_52] : memref<32x128xf32, #tpu.memory_space<vmem>>, vector<32x128xf32>
    %cst_53 = arith.constant dense<0.000000e+00> : vector<128x128xf32>
    %75 = tpu.matmul %69, %74, %cst_53 {dimension_numbers = #tpu.dot_dimension_numbers<[1], [0], [0], [1], [0, 0, 1, 1], [], []>} : vector<128x32xf32>, vector<32x128xf32>, vector<128x128xf32> -> vector<128x128xf32>
    %76 = vector.broadcast %70 : vector<1x128xf32> to vector<128x128xf32>
    %77 = arith.addf %75, %76 : vector<128x128xf32>
    %cst_54 = arith.constant 0.000000e+00 : f32
    %78 = vector.broadcast %cst_54 : f32 to vector<128x128xf32>
    %79 = arith.maximumf %77, %78 : vector<128x128xf32>
    %c0_55 = arith.constant 0 : index
    %c0_56 = arith.constant 0 : index
    %80 = vector.load %arg14[%c0_55, %c0_56] : memref<128x128xf32, #tpu.memory_space<vmem>>, vector<128x128xf32>
    %cst_57 = arith.constant dense<0.000000e+00> : vector<128x128xf32>
    %81 = tpu.matmul %79, %80, %cst_57 {dimension_numbers = #tpu.dot_dimension_numbers<[1], [0], [0], [1], [0, 0, 1, 1], [], []>} : vector<128x128xf32>, vector<128x128xf32>, vector<128x128xf32> -> vector<128x128xf32>
    %82 = vector.broadcast %71 : vector<1x128xf32> to vector<128x128xf32>
    %83 = arith.addf %81, %82 : vector<128x128xf32>
    %cst_58 = arith.constant 0.00999999977 : f32
    %cst_59 = arith.constant 0.000000e+00 : f32
    %84 = vector.broadcast %cst_59 : f32 to vector<128x128xf32>
    %85 = arith.cmpf oge, %83, %84 : vector<128x128xf32>
    %86 = vector.broadcast %cst_58 : f32 to vector<128x128xf32>
    %87 = arith.mulf %86, %83 : vector<128x128xf32>
    %88 = arith.select %85, %83, %87 : vector<128x128xi1>, vector<128x128xf32>
    %c0_60 = arith.constant 0 : index
    %c0_61 = arith.constant 0 : index
    %89 = vector.load %arg15[%c0_60, %c0_61] : memref<128x128xf32, #tpu.memory_space<vmem>>, vector<128x128xf32>
    %cst_62 = arith.constant dense<0.000000e+00> : vector<128x128xf32>
    %90 = tpu.matmul %88, %89, %cst_62 {dimension_numbers = #tpu.dot_dimension_numbers<[1], [0], [0], [1], [0, 0, 1, 1], [], []>} : vector<128x128xf32>, vector<128x128xf32>, vector<128x128xf32> -> vector<128x128xf32>
    %91 = vector.broadcast %72 : vector<1x128xf32> to vector<128x128xf32>
    %92 = arith.addf %90, %91 : vector<128x128xf32>
    %cst_63 = arith.constant 0.00999999977 : f32
    %cst_64 = arith.constant 0.000000e+00 : f32
    %93 = vector.broadcast %cst_64 : f32 to vector<128x128xf32>
    %94 = arith.cmpf oge, %92, %93 : vector<128x128xf32>
    %95 = vector.broadcast %cst_63 : f32 to vector<128x128xf32>
    %96 = arith.mulf %95, %92 : vector<128x128xf32>
    %97 = arith.select %94, %92, %96 : vector<128x128xi1>, vector<128x128xf32>
    %cst_65 = arith.constant 0.000000e+00 : f32
    %98 = vector.broadcast %cst_65 : f32 to vector<128x128xf32>
    %99 = arith.maximumf %97, %98 : vector<128x128xf32>
    %cst_66 = arith.constant dense<0.000000e+00> : vector<128xf32>
    %100 = vector.multi_reduction <add>, %99, %cst_66 [1] : vector<128x128xf32> to vector<128xf32>
    %101 = vector.shape_cast %100 : vector<128xf32> to vector<128x1xf32>
    %cst_67 = arith.constant 1.280000e+02 : f32
    %102 = vector.broadcast %cst_67 : f32 to vector<128x1xf32>
    %103 = arith.divf %101, %102 : vector<128x1xf32>
    %104 = vector.broadcast %103 : vector<128x1xf32> to vector<128x128xf32>
    %105 = arith.subf %99, %104 : vector<128x128xf32>
    %106 = arith.mulf %105, %105 : vector<128x128xf32>
    %cst_68 = arith.constant dense<0.000000e+00> : vector<128xf32>
    %107 = vector.multi_reduction <add>, %106, %cst_68 [1] : vector<128x128xf32> to vector<128xf32>
    %108 = vector.shape_cast %107 : vector<128xf32> to vector<128x1xf32>
    %cst_69 = arith.constant 1.280000e+02 : f32
    %109 = vector.broadcast %cst_69 : f32 to vector<128x1xf32>
    %110 = arith.divf %108, %109 : vector<128x1xf32>
    %cst_70 = arith.constant 9.99999974E-6 : f32
    %111 = vector.broadcast %cst_70 : f32 to vector<128x1xf32>
    %112 = arith.addf %110, %111 : vector<128x1xf32>
    %113 = math.rsqrt %112 : vector<128x1xf32>
    %114 = vector.broadcast %113 : vector<128x1xf32> to vector<128x128xf32>
    %115 = arith.mulf %105, %114 : vector<128x128xf32>
    %116 = vector.shape_cast %115 : vector<128x128xf32> to vector<2x64x128xf32>
    %117 = vector.shape_cast %73 : vector<1x128xf32> to vector<1x1x128xf32>
    %118 = vector.shape_cast %117 : vector<1x1x128xf32> to vector<1x1x128xf32>
    %119 = vector.broadcast %118 : vector<1x1x128xf32> to vector<2x1x128xf32>
    "tpu.trace_start"() <{level = 10 : i32, message = "bud,bsd->bus"}> : () -> ()
    %cst_71 = arith.constant dense<0.000000e+00> : vector<2x1x64xf32>
    %120 = tpu.matmul %119, %116, %cst_71 {dimension_numbers = #tpu.dot_dimension_numbers<[2], [2], [1], [1], [0, 0, 0, 1, 1, 1], [0], [0]>} : vector<2x1x128xf32>, vector<2x64x128xf32>, vector<2x1x64xf32> -> vector<2x1x64xf32>
    "tpu.trace_stop"() : () -> ()
    %cst_72 = arith.constant dense<0xFF800000> : vector<2x1xf32>
    %121 = vector.multi_reduction <maximumf>, %120, %cst_72 [2] : vector<2x1x64xf32> to vector<2x1xf32>
    %122 = vector.shape_cast %121 : vector<2x1xf32> to vector<2x1x1xf32>
    %123 = vector.broadcast %122 : vector<2x1x1xf32> to vector<2x1x64xf32>
    %124 = arith.subf %120, %123 : vector<2x1x64xf32>
    %125 = math.exp %124 : vector<2x1x64xf32>
    %cst_73 = arith.constant dense<0.000000e+00> : vector<2x1xf32>
    %126 = vector.multi_reduction <add>, %125, %cst_73 [2] : vector<2x1x64xf32> to vector<2x1xf32>
    %127 = vector.shape_cast %126 : vector<2x1xf32> to vector<2x1x1xf32>
    %128 = vector.broadcast %127 : vector<2x1x1xf32> to vector<2x1x64xf32>
    %129 = arith.divf %125, %128 : vector<2x1x64xf32>
    %130 = tpu.iota {dimensions = array<i32: 2>} : vector<1x1x256xi32>
    %cst_74 = arith.constant 0.000000e+00 : f32
    %131 = vector.broadcast %cst_74 : f32 to vector<2x64x256xf32>
    %132 = vector.extract_strided_slice %5 {offsets = [0, 0, 0], sizes = [2, 64, 1], strides = [1, 1, 1]} : vector<2x64x3xi32> to vector<2x64x1xi32>
    %133 = vector.broadcast %132 : vector<2x64x1xi32> to vector<2x64x256xi32>
    %134 = vector.broadcast %130 : vector<1x1x256xi32> to vector<2x64x256xi32>
    %135 = arith.cmpi eq, %133, %134 : vector<2x64x256xi32>
    %136 = arith.extui %135 : vector<2x64x256xi1> to vector<2x64x256xi32>
    %137 = arith.sitofp %136 : vector<2x64x256xi32> to vector<2x64x256xf32>
    %138 = vector.extract_strided_slice %6 {offsets = [0, 0, 0], sizes = [2, 64, 1], strides = [1, 1, 1]} : vector<2x64x3xf32> to vector<2x64x1xf32>
    %139 = vector.broadcast %138 : vector<2x64x1xf32> to vector<2x64x256xf32>
    %140 = arith.mulf %137, %139 : vector<2x64x256xf32>
    %141 = arith.addf %131, %140 : vector<2x64x256xf32>
    %142 = vector.extract_strided_slice %5 {offsets = [0, 0, 1], sizes = [2, 64, 1], strides = [1, 1, 1]} : vector<2x64x3xi32> to vector<2x64x1xi32>
    %143 = vector.broadcast %142 : vector<2x64x1xi32> to vector<2x64x256xi32>
    %144 = vector.broadcast %130 : vector<1x1x256xi32> to vector<2x64x256xi32>
    %145 = arith.cmpi eq, %143, %144 : vector<2x64x256xi32>
    %146 = arith.extui %145 : vector<2x64x256xi1> to vector<2x64x256xi32>
    %147 = arith.sitofp %146 : vector<2x64x256xi32> to vector<2x64x256xf32>
    %148 = vector.extract_strided_slice %6 {offsets = [0, 0, 1], sizes = [2, 64, 1], strides = [1, 1, 1]} : vector<2x64x3xf32> to vector<2x64x1xf32>
    %149 = vector.broadcast %148 : vector<2x64x1xf32> to vector<2x64x256xf32>
    %150 = arith.mulf %147, %149 : vector<2x64x256xf32>
    %151 = arith.addf %141, %150 : vector<2x64x256xf32>
    %152 = vector.extract_strided_slice %5 {offsets = [0, 0, 2], sizes = [2, 64, 1], strides = [1, 1, 1]} : vector<2x64x3xi32> to vector<2x64x1xi32>
    %153 = vector.broadcast %152 : vector<2x64x1xi32> to vector<2x64x256xi32>
    %154 = vector.broadcast %130 : vector<1x1x256xi32> to vector<2x64x256xi32>
    %155 = arith.cmpi eq, %153, %154 : vector<2x64x256xi32>
    %156 = arith.extui %155 : vector<2x64x256xi1> to vector<2x64x256xi32>
    %157 = arith.sitofp %156 : vector<2x64x256xi32> to vector<2x64x256xf32>
    %158 = vector.extract_strided_slice %6 {offsets = [0, 0, 2], sizes = [2, 64, 1], strides = [1, 1, 1]} : vector<2x64x3xf32> to vector<2x64x1xf32>
    %159 = vector.broadcast %158 : vector<2x64x1xf32> to vector<2x64x256xf32>
    %160 = arith.mulf %157, %159 : vector<2x64x256xf32>
    %161 = arith.addf %151, %160 : vector<2x64x256xf32>
    "tpu.trace_start"() <{level = 10 : i32, message = "bus,bsn->bun"}> : () -> ()
    %cst_75 = arith.constant dense<0.000000e+00> : vector<2x1x256xf32>
    %162 = tpu.matmul %129, %161, %cst_75 {dimension_numbers = #tpu.dot_dimension_numbers<[2], [1], [1], [2], [0, 0, 0, 1, 1, 2], [0], [0]>} : vector<2x1x64xf32>, vector<2x64x256xf32>, vector<2x1x256xf32> -> vector<2x1x256xf32>
    "tpu.trace_stop"() : () -> ()
    %c0_76 = arith.constant 0 : index
    %c0_77 = arith.constant 0 : index
    %c0_78 = arith.constant 0 : index
    %163 = vector.load %arg16[%c0_76, %c0_77, %c0_78] : memref<2x1x64xf32, #tpu.memory_space<vmem>>, vector<2x1x64xf32>
    tpu.vector_store %arg16[%c0_76, %c0_77, %c0_78], %129 {strides = array<i32>} : memref<2x1x64xf32, #tpu.memory_space<vmem>>, vector<2x1x64xf32>,
    %c0_79 = arith.constant 0 : index
    %c0_80 = arith.constant 0 : index
    %c0_81 = arith.constant 0 : index
    %164 = vector.load %arg17[%c0_79, %c0_80, %c0_81] : memref<2x1x256xf32, #tpu.memory_space<vmem>>, vector<2x1x256xf32>
    tpu.vector_store %arg17[%c0_79, %c0_80, %c0_81], %162 {strides = array<i32>} : memref<2x1x256xf32, #tpu.memory_space<vmem>>, vector<2x1x256xf32>,
    return
  }
  func.func @transform_0(%arg0: i32) -> (i32, i32, i32) {
    %c0_i32 = arith.constant 0 : i32
    %c0_i32_0 = arith.constant 0 : i32
    %c0_i32_1 = arith.constant 0 : i32
    return %arg0, %c0_i32, %c0_i32_0 : i32, i32, i32
  }
  func.func @transform_1(%arg0: i32) -> (i32, i32, i32) {
    %c0_i32 = arith.constant 0 : i32
    %c0_i32_0 = arith.constant 0 : i32
    %c0_i32_1 = arith.constant 0 : i32
    return %arg0, %c0_i32, %c0_i32_0 : i32, i32, i32
  }
  func.func @transform_2(%arg0: i32) -> (i32, i32, i32) {
    %c0_i32 = arith.constant 0 : i32
    %c0_i32_0 = arith.constant 0 : i32
    %c0_i32_1 = arith.constant 0 : i32
    return %arg0, %c0_i32, %c0_i32_0 : i32, i32, i32
  }
  func.func @transform_3(%arg0: i32) -> (i32, i32, i32) {
    %c0_i32 = arith.constant 0 : i32
    %c0_i32_0 = arith.constant 0 : i32
    %c0_i32_1 = arith.constant 0 : i32
    return %arg0, %c0_i32, %c0_i32_0 : i32, i32, i32
  }
  func.func @transform_4(%arg0: i32) -> (i32, i32, i32) {
    %c0_i32 = arith.constant 0 : i32
    %c0_i32_0 = arith.constant 0 : i32
    %c0_i32_1 = arith.constant 0 : i32
    return %arg0, %c0_i32, %c0_i32_0 : i32, i32, i32
  }
  func.func @transform_5(%arg0: i32) -> (i32, i32, i32) {
    %c0_i32 = arith.constant 0 : i32
    %c0_i32_0 = arith.constant 0 : i32
    %c0_i32_1 = arith.constant 0 : i32
    return %arg0, %c0_i32, %c0_i32_0 : i32, i32, i32
  }
  func.func @transform_6(%arg0: i32) -> (i32, i32, i32) {
    %c0_i32 = arith.constant 0 : i32
    %c0_i32_0 = arith.constant 0 : i32
    %c0_i32_1 = arith.constant 0 : i32
    return %arg0, %c0_i32, %c0_i32_0 : i32, i32, i32
  }
  func.func @transform_7(%arg0: i32) -> (i32, i32) {
    %c0_i32 = arith.constant 0 : i32
    %c0_i32_0 = arith.constant 0 : i32
    %c0_i32_1 = arith.constant 0 : i32
    return %c0_i32, %c0_i32_0 : i32, i32
  }
  func.func @transform_8(%arg0: i32) -> (i32, i32) {
    %c0_i32 = arith.constant 0 : i32
    %c0_i32_0 = arith.constant 0 : i32
    %c0_i32_1 = arith.constant 0 : i32
    return %c0_i32, %c0_i32_0 : i32, i32
  }
  func.func @transform_9(%arg0: i32) -> (i32, i32) {
    %c0_i32 = arith.constant 0 : i32
    %c0_i32_0 = arith.constant 0 : i32
    %c0_i32_1 = arith.constant 0 : i32
    return %c0_i32, %c0_i32_0 : i32, i32
  }
  func.func @transform_10(%arg0: i32) -> (i32, i32) {
    %c0_i32 = arith.constant 0 : i32
    %c0_i32_0 = arith.constant 0 : i32
    %c0_i32_1 = arith.constant 0 : i32
    return %c0_i32, %c0_i32_0 : i32, i32
  }
  func.func @transform_11(%arg0: i32) -> (i32, i32) {
    %c0_i32 = arith.constant 0 : i32
    %c0_i32_0 = arith.constant 0 : i32
    %c0_i32_1 = arith.constant 0 : i32
    return %c0_i32, %c0_i32_0 : i32, i32
  }
  func.func @transform_12(%arg0: i32) -> (i32, i32) {
    %c0_i32 = arith.constant 0 : i32
    %c0_i32_0 = arith.constant 0 : i32
    %c0_i32_1 = arith.constant 0 : i32
    return %c0_i32, %c0_i32_0 : i32, i32
  }
  func.func @transform_13(%arg0: i32) -> (i32, i32) {
    %c0_i32 = arith.constant 0 : i32
    %c0_i32_0 = arith.constant 0 : i32
    %c0_i32_1 = arith.constant 0 : i32
    return %c0_i32, %c0_i32_0 : i32, i32
  }
  func.func @transform_14(%arg0: i32) -> (i32, i32) {
    %c0_i32 = arith.constant 0 : i32
    %c0_i32_0 = arith.constant 0 : i32
    %c0_i32_1 = arith.constant 0 : i32
    return %c0_i32, %c0_i32_0 : i32, i32
  }
  func.func @transform_15(%arg0: i32) -> (i32, i32, i32) {
    %c0_i32 = arith.constant 0 : i32
    %c0_i32_0 = arith.constant 0 : i32
    %c0_i32_1 = arith.constant 0 : i32
    return %arg0, %c0_i32, %c0_i32_0 : i32, i32, i32
  }
  func.func @transform_16(%arg0: i32) -> (i32, i32, i32) {
    %c0_i32 = arith.constant 0 : i32
    %c0_i32_0 = arith.constant 0 : i32
    %c0_i32_1 = arith.constant 0 : i32
    return %arg0, %c0_i32, %c0_i32_0 : i32, i32, i32
  }
}

</mosaic_0001>

<llo_original>
// kernel: subsets_forward.1
$region0: #{subsets_forward.1}
  #allocation0 [shape = 'u32[]', space=smem, size = 0x4, offset = 0x4, fixed_abs, tag = 'smem constant byte address 0x4 - core index']
  #allocation1 [shape = 'u32[72,128]{1,0:T(1,128)}', space=vmem, size = 0x9000, scoped, tag = 'internal scratch']
  %s0 = inlined_call_operand.vmem [shape: f32[4,16,32], index: 0, kind: input, shape index: {}]
  %s1 = inlined_call_operand.vmem [shape: f32[4,16,1], index: 1, kind: input, shape index: {}]
  %s2 = inlined_call_operand.vmem [shape: f32[4,1,16], index: 2, kind: input, shape index: {}]
  %s3 = inlined_call_operand.vmem [shape: f32[4,16,5], index: 3, kind: input, shape index: {}]
  %s4 = inlined_call_operand.vmem [shape: f32[4,64,16], index: 4, kind: input, shape index: {}]
  %s5 = inlined_call_operand.vmem [shape: s32[4,64,3], index: 5, kind: input, shape index: {}]
  %s6 = inlined_call_operand.vmem [shape: f32[4,64,3], index: 6, kind: input, shape index: {}]
  %s7 = inlined_call_operand.vmem [shape: f32[6,128], index: 7, kind: input, shape index: {}]
  %s8 = inlined_call_operand.vmem [shape: f32[128,32], index: 8, kind: input, shape index: {}]
  %s9 = inlined_call_operand.vmem [shape: f32[32,32], index: 9, kind: input, shape index: {}]
  %s10 = inlined_call_operand.vmem [shape: f32[1,32], index: 10, kind: input, shape index: {}]
  %s11 = inlined_call_operand.vmem [shape: f32[32,128], index: 11, kind: input, shape index: {}]
  %s12 = inlined_call_operand.vmem [shape: f32[4,128], index: 12, kind: input, shape index: {}]
  %s13 = inlined_call_operand.vmem [shape: f32[128,128], index: 13, kind: input, shape index: {}]
  %s14 = inlined_call_operand.vmem [shape: f32[128,128], index: 14, kind: input, shape index: {}]
  %s15 = inlined_call_operand.hbm [shape: f32[4,1,64], index: 15, kind: output, shape index: {0}]
  %s16 = inlined_call_operand.vmem [shape: f32[4,1,256], index: 16, kind: output, shape index: {1}]
  %17 = xla_tuple %s15, %s16
  %s18 = sld [smem:[#allocation0]]
  $region101: #{subsets_forward.1} parent=0
    _
  %s20 = ssub.s32 1, %s18
  %s21 = scalar_select 0, %s20, %s18
  $region1: #{subsets_forward.1} parent=0
    #allocation2 [shape = 'u8[2048]{0}', space=vmem, size = 0x800, scoped, tag = 'output window, operand 0']
    #allocation3 [shape = 's32[2]{0}', space=sflag, size = 0x8, scoped, tag = 'scoped memory for subsets_forward.1']
    %22 = vsyncpa [#allocation3], 0
    %s23 = scalar_lea.sflag [#allocation3], 1
    %24 = vsyncpa %s23, 0
    loop: start=0, step=1, limit=4
    $region2: #{subsets_forward.1} parent=1 // loop_pre_header
      _
    $region3: #{subsets_forward.1} parent=1 // loop_header
      %s26 = sphi 0, %s30
      %p27 = scmp.ge.s32.totalorder %s26, 4
      %s36 = sphi 0, %s38
      %s39 = sphi 0, %s36
      %s40 = sphi 0, %s39
      %s56 = sphi 0, %s40
      %s62 = sphi 0, %s64
      %s65 = sphi 0, %s62
      %s66 = sphi 0, %s65
      %s82 = sphi 0, %s66
      %s88 = sphi 0, %s90
      %s91 = sphi 0, %s88
      %s92 = sphi 0, %s91
      %s108 = sphi 0, %s92
      %s114 = sphi 0, %s116
      %s117 = sphi 0, %s114
      %s118 = sphi 0, %s117
      %s134 = sphi 0, %s118
      %s140 = sphi 0, %s142
      %s143 = sphi 0, %s140
      %s144 = sphi 0, %s143
      %s160 = sphi 0, %s144
      %s166 = sphi 0, %s168
      %s169 = sphi 0, %s166
      %s170 = sphi 0, %s169
      %s186 = sphi 0, %s170
      %s192 = sphi 0, %s194
      %s195 = sphi 0, %s192
      %s196 = sphi 0, %s195
      %s212 = sphi 0, %s196
      %s216 = sphi 0, %s216
      %s218 = sphi 0, %s216
      %s219 = sphi 0, %s218
      %s233 = sphi 0, %s219
      %s237 = sphi 0, %s237
      %s239 = sphi 0, %s237
      %s240 = sphi 0, %s239
      %s254 = sphi 0, %s240
      %s258 = sphi 0, %s258
      %s260 = sphi 0, %s258
      %s261 = sphi 0, %s260
      %s275 = sphi 0, %s261
      %s279 = sphi 0, %s279
      %s281 = sphi 0, %s279
      %s282 = sphi 0, %s281
      %s296 = sphi 0, %s282
      %s300 = sphi 0, %s300
      %s302 = sphi 0, %s300
      %s303 = sphi 0, %s302
      %s317 = sphi 0, %s303
      %s321 = sphi 0, %s321
      %s323 = sphi 0, %s321
      %s324 = sphi 0, %s323
      %s338 = sphi 0, %s324
      %s342 = sphi 0, %s342
      %s344 = sphi 0, %s342
      %s345 = sphi 0, %s344
      %s359 = sphi 0, %s345
      %s363 = sphi 0, %s363
      %s365 = sphi 0, %s363
      %s366 = sphi 0, %s365
      %s380 = sphi 0, %s366
      %s386 = sphi 0, %s388
      %s389 = sphi 0, %s386
      %s390 = sphi 0, %s389
      %s406 = sphi 0, %s390
      %s412 = sphi 0, %s414
      %s415 = sphi 0, %s412
      %s416 = sphi 0, %s415
      %s432 = sphi 0, %s416
    $region4: #{subsets_forward.1} parent=1 // loop_header_branch
      %29 = sbr.rel (%p27) target = $region8
    $region5: #{subsets_forward.1} parent=1 // loop_body
      %s31 = ssub.s32 %s26, 1
      %s32 = ssub.s32 %s26, 2
      %s33 = sadd.s32 %s26, 1
      %s34 = ssub.s32 %s26, %s33
      %p35 = scmp.eq.s32.totalorder %s34, 0
      %s37 = sadd.s32 %s36, 1
      %s38 = scalar_select %p35, %s36, %s37
      %p41 = pneg %p35
      %p42 = scmp.eq.s32.totalorder %s26, 1
      %p43 = por %p41, %p42
      %p44 = scmp.ne.s32.totalorder %s36, %s39
      %p45 = scmp.eq.s32.totalorder %s26, 0
      %p46 = por %p44, %p45
      %p47 = scmp.ne.s32.totalorder %s36, %s39
      %p48 = scmp.eq.s32.totalorder %s31, 1
      %p49 = por %p47, %p48
      %p50 = scmp.ne.s32.totalorder %s39, %s40
      %p51 = scmp.eq.s32.totalorder %s31, 0
      %p52 = por %p50, %p51
      %p53 = scmp.ne.s32.totalorder %s39, %s40
      %p54 = scmp.eq.s32.totalorder %s32, 1
      %p55 = por %p53, %p54
      %p57 = scmp.ne.s32.totalorder %s40, %s56
      %p58 = scmp.eq.s32.totalorder %s32, 0
      %p59 = por %p57, %p58
      %s60 = ssub.s32 %s26, %s33
      %p61 = scmp.eq.s32.totalorder %s60, 0
      %s63 = sadd.s32 %s62, 1
      %s64 = scalar_select %p61, %s62, %s63
      %p67 = pneg %p61
      %p68 = scmp.eq.s32.totalorder %s26, 1
      %p69 = por %p67, %p68
      %p70 = scmp.ne.s32.totalorder %s62, %s65
      %p71 = scmp.eq.s32.totalorder %s26, 0
      %p72 = por %p70, %p71
      %p73 = scmp.ne.s32.totalorder %s62, %s65
      %p74 = scmp.eq.s32.totalorder %s31, 1
      %p75 = por %p73, %p74
      %p76 = scmp.ne.s32.totalorder %s65, %s66
      %p77 = scmp.eq.s32.totalorder %s31, 0
      %p78 = por %p76, %p77
      %p79 = scmp.ne.s32.totalorder %s65, %s66
      %p80 = scmp.eq.s32.totalorder %s32, 1
      %p81 = por %p79, %p80
      %p83 = scmp.ne.s32.totalorder %s66, %s82
      %p84 = scmp.eq.s32.totalorder %s32, 0
      %p85 = por %p83, %p84
      %s86 = ssub.s32 %s26, %s33
      %p87 = scmp.eq.s32.totalorder %s86, 0
      %s89 = sadd.s32 %s88, 1
      %s90 = scalar_select %p87, %s88, %s89
      %p93 = pneg %p87
      %p94 = scmp.eq.s32.totalorder %s26, 1
      %p95 = por %p93, %p94
      %p96 = scmp.ne.s32.totalorder %s88, %s91
      %p97 = scmp.eq.s32.totalorder %s26, 0
      %p98 = por %p96, %p97
      %p99 = scmp.ne.s32.totalorder %s88, %s91
      %p100 = scmp.eq.s32.totalorder %s31, 1
      %p101 = por %p99, %p100
      %p102 = scmp.ne.s32.totalorder %s91, %s92
      %p103 = scmp.eq.s32.totalorder %s31, 0
      %p104 = por %p102, %p103
      %p105 = scmp.ne.s32.totalorder %s91, %s92
      %p106 = scmp.eq.s32.totalorder %s32, 1
      %p107 = por %p105, %p106
      %p109 = scmp.ne.s32.totalorder %s92, %s108
      %p110 = scmp.eq.s32.totalorder %s32, 0
      %p111 = por %p109, %p110
      %s112 = ssub.s32 %s26, %s33
      %p113 = scmp.eq.s32.totalorder %s112, 0
      %s115 = sadd.s32 %s114, 1
      %s116 = scalar_select %p113, %s114, %s115
      %p119 = pneg %p113
      %p120 = scmp.eq.s32.totalorder %s26, 1
      %p121 = por %p119, %p120
      %p122 = scmp.ne.s32.totalorder %s114, %s117
      %p123 = scmp.eq.s32.totalorder %s26, 0
      %p124 = por %p122, %p123
      %p125 = scmp.ne.s32.totalorder %s114, %s117
      %p126 = scmp.eq.s32.totalorder %s31, 1
      %p127 = por %p125, %p126
      %p128 = scmp.ne.s32.totalorder %s117, %s118
      %p129 = scmp.eq.s32.totalorder %s31, 0
      %p130 = por %p128, %p129
      %p131 = scmp.ne.s32.totalorder %s117, %s118
      %p132 = scmp.eq.s32.totalorder %s32, 1
      %p133 = por %p131, %p132
      %p135 = scmp.ne.s32.totalorder %s118, %s134
      %p136 = scmp.eq.s32.totalorder %s32, 0
      %p137 = por %p135, %p136
      %s138 = ssub.s32 %s26, %s33
      %p139 = scmp.eq.s32.totalorder %s138, 0
      %s141 = sadd.s32 %s140, 1
      %s142 = scalar_select %p139, %s140, %s141
      %p145 = pneg %p139
      %p146 = scmp.eq.s32.totalorder %s26, 1
      %p147 = por %p145, %p146
      %p148 = scmp.ne.s32.totalorder %s140, %s143
      %p149 = scmp.eq.s32.totalorder %s26, 0
      %p150 = por %p148, %p149
      %p151 = scmp.ne.s32.totalorder %s140, %s143
      %p152 = scmp.eq.s32.totalorder %s31, 1
      %p153 = por %p151, %p152
      %p154 = scmp.ne.s32.totalorder %s143, %s144
      %p155 = scmp.eq.s32.totalorder %s31, 0
      %p156 = por %p154, %p155
      %p157 = scmp.ne.s32.totalorder %s143, %s144
      %p158 = scmp.eq.s32.totalorder %s32, 1
      %p159 = por %p157, %p158
      %p161 = scmp.ne.s32.totalorder %s144, %s160
      %p162 = scmp.eq.s32.totalorder %s32, 0
      %p163 = por %p161, %p162
      %s164 = ssub.s32 %s26, %s33
      %p165 = scmp.eq.s32.totalorder %s164, 0
      %s167 = sadd.s32 %s166, 1
      %s168 = scalar_select %p165, %s166, %s167
      %p171 = pneg %p165
      %p172 = scmp.eq.s32.totalorder %s26, 1
      %p173 = por %p171, %p172
      %p174 = scmp.ne.s32.totalorder %s166, %s169
      %p175 = scmp.eq.s32.totalorder %s26, 0
      %p176 = por %p174, %p175
      %p177 = scmp.ne.s32.totalorder %s166, %s169
      %p178 = scmp.eq.s32.totalorder %s31, 1
      %p179 = por %p177, %p178
      %p180 = scmp.ne.s32.totalorder %s169, %s170
      %p181 = scmp.eq.s32.totalorder %s31, 0
      %p182 = por %p180, %p181
      %p183 = scmp.ne.s32.totalorder %s169, %s170
      %p184 = scmp.eq.s32.totalorder %s32, 1
      %p185 = por %p183, %p184
      %p187 = scmp.ne.s32.totalorder %s170, %s186
      %p188 = scmp.eq.s32.totalorder %s32, 0
      %p189 = por %p187, %p188
      %s190 = ssub.s32 %s26, %s33
      %p191 = scmp.eq.s32.totalorder %s190, 0
      %s193 = sadd.s32 %s192, 1
      %s194 = scalar_select %p191, %s192, %s193
      %p197 = pneg %p191
      %p198 = scmp.eq.s32.totalorder %s26, 1
      %p199 = por %p197, %p198
      %p200 = scmp.ne.s32.totalorder %s192, %s195
      %p201 = scmp.eq.s32.totalorder %s26, 0
      %p202 = por %p200, %p201
      %p203 = scmp.ne.s32.totalorder %s192, %s195
      %p204 = scmp.eq.s32.totalorder %s31, 1
      %p205 = por %p203, %p204
      %p206 = scmp.ne.s32.totalorder %s195, %s196
      %p207 = scmp.eq.s32.totalorder %s31, 0
      %p208 = por %p206, %p207
      %p209 = scmp.ne.s32.totalorder %s195, %s196
      %p210 = scmp.eq.s32.totalorder %s32, 1
      %p211 = por %p209, %p210
      %p213 = scmp.ne.s32.totalorder %s196, %s212
      %p214 = scmp.eq.s32.totalorder %s32, 0
      %p215 = por %p213, %p214
      %s217 = sadd.s32 %s216, 1
      %p220 = scmp.eq.s32.totalorder %s26, 1
      %p221 = scmp.ne.s32.totalorder %s216, %s218
      %p222 = scmp.eq.s32.totalorder %s26, 0
      %p223 = por %p221, %p222
      %p224 = scmp.ne.s32.totalorder %s216, %s218
      %p225 = scmp.eq.s32.totalorder %s31, 1
      %p226 = por %p224, %p225
      %p227 = scmp.ne.s32.totalorder %s218, %s219
      %p228 = scmp.eq.s32.totalorder %s31, 0
      %p229 = por %p227, %p228
      %p230 = scmp.ne.s32.totalorder %s218, %s219
      %p231 = scmp.eq.s32.totalorder %s32, 1
      %p232 = por %p230, %p231
      %p234 = scmp.ne.s32.totalorder %s219, %s233
      %p235 = scmp.eq.s32.totalorder %s32, 0
      %p236 = por %p234, %p235
      %s238 = sadd.s32 %s237, 1
      %p241 = scmp.eq.s32.totalorder %s26, 1
      %p242 = scmp.ne.s32.totalorder %s237, %s239
      %p243 = scmp.eq.s32.totalorder %s26, 0
      %p244 = por %p242, %p243
      %p245 = scmp.ne.s32.totalorder %s237, %s239
      %p246 = scmp.eq.s32.totalorder %s31, 1
      %p247 = por %p245, %p246
      %p248 = scmp.ne.s32.totalorder %s239, %s240
      %p249 = scmp.eq.s32.totalorder %s31, 0
      %p250 = por %p248, %p249
      %p251 = scmp.ne.s32.totalorder %s239, %s240
      %p252 = scmp.eq.s32.totalorder %s32, 1
      %p253 = por %p251, %p252
      %p255 = scmp.ne.s32.totalorder %s240, %s254
      %p256 = scmp.eq.s32.totalorder %s32, 0
      %p257 = por %p255, %p256
      %s259 = sadd.s32 %s258, 1
      %p262 = scmp.eq.s32.totalorder %s26, 1
      %p263 = scmp.ne.s32.totalorder %s258, %s260
      %p264 = scmp.eq.s32.totalorder %s26, 0
      %p265 = por %p263, %p264
      %p266 = scmp.ne.s32.totalorder %s258, %s260
      %p267 = scmp.eq.s32.totalorder %s31, 1
      %p268 = por %p266, %p267
      %p269 = scmp.ne.s32.totalorder %s260, %s261
      %p270 = scmp.eq.s32.totalorder %s31, 0
      %p271 = por %p269, %p270
      %p272 = scmp.ne.s32.totalorder %s260, %s261
      %p273 = scmp.eq.s32.totalorder %s32, 1
      %p274 = por %p272, %p273
      %p276 = scmp.ne.s32.totalorder %s261, %s275
      %p277 = scmp.eq.s32.totalorder %s32, 0
      %p278 = por %p276, %p277
      %s280 = sadd.s32 %s279, 1
      %p283 = scmp.eq.s32.totalorder %s26, 1
      %p284 = scmp.ne.s32.totalorder %s279, %s281
      %p285 = scmp.eq.s32.totalorder %s26, 0
      %p286 = por %p284, %p285
      %p287 = scmp.ne.s32.totalorder %s279, %s281
      %p288 = scmp.eq.s32.totalorder %s31, 1
      %p289 = por %p287, %p288
      %p290 = scmp.ne.s32.totalorder %s281, %s282
      %p291 = scmp.eq.s32.totalorder %s31, 0
      %p292 = por %p290, %p291
      %p293 = scmp.ne.s32.totalorder %s281, %s282
      %p294 = scmp.eq.s32.totalorder %s32, 1
      %p295 = por %p293, %p294
      %p297 = scmp.ne.s32.totalorder %s282, %s296
      %p298 = scmp.eq.s32.totalorder %s32, 0
      %p299 = por %p297, %p298
      %s301 = sadd.s32 %s300, 1
      %p304 = scmp.eq.s32.totalorder %s26, 1
      %p305 = scmp.ne.s32.totalorder %s300, %s302
      %p306 = scmp.eq.s32.totalorder %s26, 0
      %p307 = por %p305, %p306
      %p308 = scmp.ne.s32.totalorder %s300, %s302
      %p309 = scmp.eq.s32.totalorder %s31, 1
      %p310 = por %p308, %p309
      %p311 = scmp.ne.s32.totalorder %s302, %s303
      %p312 = scmp.eq.s32.totalorder %s31, 0
      %p313 = por %p311, %p312
      %p314 = scmp.ne.s32.totalorder %s302, %s303
      %p315 = scmp.eq.s32.totalorder %s32, 1
      %p316 = por %p314, %p315
      %p318 = scmp.ne.s32.totalorder %s303, %s317
      %p319 = scmp.eq.s32.totalorder %s32, 0
      %p320 = por %p318, %p319
      %s322 = sadd.s32 %s321, 1
      %p325 = scmp.eq.s32.totalorder %s26, 1
      %p326 = scmp.ne.s32.totalorder %s321, %s323
      %p327 = scmp.eq.s32.totalorder %s26, 0
      %p328 = por %p326, %p327
      %p329 = scmp.ne.s32.totalorder %s321, %s323
      %p330 = scmp.eq.s32.totalorder %s31, 1
      %p331 = por %p329, %p330
      %p332 = scmp.ne.s32.totalorder %s323, %s324
      %p333 = scmp.eq.s32.totalorder %s31, 0
      %p334 = por %p332, %p333
      %p335 = scmp.ne.s32.totalorder %s323, %s324
      %p336 = scmp.eq.s32.totalorder %s32, 1
      %p337 = por %p335, %p336
      %p339 = scmp.ne.s32.totalorder %s324, %s338
      %p340 = scmp.eq.s32.totalorder %s32, 0
      %p341 = por %p339, %p340
      %s343 = sadd.s32 %s342, 1
      %p346 = scmp.eq.s32.totalorder %s26, 1
      %p347 = scmp.ne.s32.totalorder %s342, %s344
      %p348 = scmp.eq.s32.totalorder %s26, 0
      %p349 = por %p347, %p348
      %p350 = scmp.ne.s32.totalorder %s342, %s344
      %p351 = scmp.eq.s32.totalorder %s31, 1
      %p352 = por %p350, %p351
      %p353 = scmp.ne.s32.totalorder %s344, %s345
      %p354 = scmp.eq.s32.totalorder %s31, 0
      %p355 = por %p353, %p354
      %p356 = scmp.ne.s32.totalorder %s344, %s345
      %p357 = scmp.eq.s32.totalorder %s32, 1
      %p358 = por %p356, %p357
      %p360 = scmp.ne.s32.totalorder %s345, %s359
      %p361 = scmp.eq.s32.totalorder %s32, 0
      %p362 = por %p360, %p361
      %s364 = sadd.s32 %s363, 1
      %p367 = scmp.eq.s32.totalorder %s26, 1
      %p368 = scmp.ne.s32.totalorder %s363, %s365
      %p369 = scmp.eq.s32.totalorder %s26, 0
      %p370 = por %p368, %p369
      %p371 = scmp.ne.s32.totalorder %s363, %s365
      %p372 = scmp.eq.s32.totalorder %s31, 1
      %p373 = por %p371, %p372
      %p374 = scmp.ne.s32.totalorder %s365, %s366
      %p375 = scmp.eq.s32.totalorder %s31, 0
      %p376 = por %p374, %p375
      %p377 = scmp.ne.s32.totalorder %s365, %s366
      %p378 = scmp.eq.s32.totalorder %s32, 1
      %p379 = por %p377, %p378
      %p381 = scmp.ne.s32.totalorder %s366, %s380
      %p382 = scmp.eq.s32.totalorder %s32, 0
      %p383 = por %p381, %p382
      %s384 = ssub.s32 %s26, %s33
      %p385 = scmp.eq.s32.totalorder %s384, 0
      %s387 = sadd.s32 %s386, 1
      %s388 = scalar_select %p385, %s386, %s387
      %p391 = pneg %p385
      %p392 = scmp.eq.s32.totalorder %s26, 1
      %p393 = por %p391, %p392
      %p394 = scmp.ne.s32.totalorder %s386, %s389
      %p395 = scmp.eq.s32.totalorder %s26, 0
      %p396 = por %p394, %p395
      %p397 = scmp.ne.s32.totalorder %s386, %s389
      %p398 = scmp.eq.s32.totalorder %s31, 1
      %p399 = por %p397, %p398
      %p400 = scmp.ne.s32.totalorder %s389, %s390
      %p401 = scmp.eq.s32.totalorder %s31, 0
      %p402 = por %p400, %p401
      %p403 = scmp.ne.s32.totalorder %s389, %s390
      %p404 = scmp.eq.s32.totalorder %s32, 1
      %p405 = por %p403, %p404
      %p407 = scmp.ne.s32.totalorder %s390, %s406
      %p408 = scmp.eq.s32.totalorder %s32, 0
      %p409 = por %p407, %p408
      %s410 = ssub.s32 %s26, %s33
      %p411 = scmp.eq.s32.totalorder %s410, 0
      %s413 = sadd.s32 %s412, 1
      %s414 = scalar_select %p411, %s412, %s413
      %p417 = pneg %p411
      %p418 = scmp.eq.s32.totalorder %s26, 1
      %p419 = por %p417, %p418
      %p420 = scmp.ne.s32.totalorder %s412, %s415
      %p421 = scmp.eq.s32.totalorder %s26, 0
      %p422 = por %p420, %p421
      %p423 = scmp.ne.s32.totalorder %s412, %s415
      %p424 = scmp.eq.s32.totalorder %s31, 1
      %p425 = por %p423, %p424
      %p426 = scmp.ne.s32.totalorder %s415, %s416
      %p427 = scmp.eq.s32.totalorder %s31, 0
      %p428 = por %p426, %p427
      %p429 = scmp.ne.s32.totalorder %s415, %s416
      %p430 = scmp.eq.s32.totalorder %s32, 1
      %p431 = por %p429, %p430
      %p433 = scmp.ne.s32.totalorder %s416, %s432
      %p434 = scmp.eq.s32.totalorder %s32, 0
      %p435 = por %p433, %p434
      %p436 = scmp.le.s32.totalorder 1, %s26
      %p437 = scmp.lt.s32.totalorder %s26, 3
      %p438 = pnand %p436, %p437
      %p439 = pneg %p438
      // Predicated region
      $region9: #{subsets_forward.1} parent=5 // pred_check
        _
      $region10: #{subsets_forward.1} parent=5 // pred_check_branch
        %441 = sbr.rel (%p438) target = $region12
      $region11: #{subsets_forward.1} parent=5 // pred_region
        %s442 = ssub.s32 %s26, 1
        // Predicated region
        $region13: #{subsets_forward.1} parent=11 // pred_check
          %p443 = pneg %p229
        $region14: #{subsets_forward.1} parent=11 // pred_check_branch
          %445 = sbr.rel (%p443) target = $region16
        $region15: #{subsets_forward.1} parent=11 // pred_region
          _
        $region16: #{subsets_forward.1} parent=11 // pred_fallthru
          _
        // Predicated region
        $region17: #{subsets_forward.1} parent=11 // pred_check
          %p446 = pneg %p250
        $region18: #{subsets_forward.1} parent=11 // pred_check_branch
          %448 = sbr.rel (%p446) target = $region20
        $region19: #{subsets_forward.1} parent=11 // pred_region
          _
        $region20: #{subsets_forward.1} parent=11 // pred_fallthru
          _
        // Predicated region
        $region21: #{subsets_forward.1} parent=11 // pred_check
          %p449 = pneg %p271
        $region22: #{subsets_forward.1} parent=11 // pred_check_branch
          %451 = sbr.rel (%p449) target = $region24
        $region23: #{subsets_forward.1} parent=11 // pred_region
          _
        $region24: #{subsets_forward.1} parent=11 // pred_fallthru
          _
        // Predicated region
        $region25: #{subsets_forward.1} parent=11 // pred_check
          %p452 = pneg %p292
        $region26: #{subsets_forward.1} parent=11 // pred_check_branch
          %454 = sbr.rel (%p452) target = $region28
        $region27: #{subsets_forward.1} parent=11 // pred_region
          _
        $region28: #{subsets_forward.1} parent=11 // pred_fallthru
          _
        // Predicated region
        $region29: #{subsets_forward.1} parent=11 // pred_check
          %p455 = pneg %p313
        $region30: #{subsets_forward.1} parent=11 // pred_check_branch
          %457 = sbr.rel (%p455) target = $region32
        $region31: #{subsets_forward.1} parent=11 // pred_region
          _
        $region32: #{subsets_forward.1} parent=11 // pred_fallthru
          _
        // Predicated region
        $region33: #{subsets_forward.1} parent=11 // pred_check
          %p458 = pneg %p334
        $region34: #{subsets_forward.1} parent=11 // pred_check_branch
          %460 = sbr.rel (%p458) target = $region36
        $region35: #{subsets_forward.1} parent=11 // pred_region
          _
        $region36: #{subsets_forward.1} parent=11 // pred_fallthru
          _
        // Predicated region
        $region37: #{subsets_forward.1} parent=11 // pred_check
          %p461 = pneg %p355
        $region38: #{subsets_forward.1} parent=11 // pred_check_branch
          %463 = sbr.rel (%p461) target = $region40
        $region39: #{subsets_forward.1} parent=11 // pred_region
          _
        $region40: #{subsets_forward.1} parent=11 // pred_fallthru
          _
        // Predicated region
        $region41: #{subsets_forward.1} parent=11 // pred_check
          %p464 = pneg %p376
        $region42: #{subsets_forward.1} parent=11 // pred_check_branch
          %466 = sbr.rel (%p464) target = $region44
        $region43: #{subsets_forward.1} parent=11 // pred_region
          _
        $region44: #{subsets_forward.1} parent=11 // pred_fallthru
          _
      $region12: #{subsets_forward.1} parent=5 // pred_fallthru
        _
      %p467 = scmp.lt.s32.totalorder %s26, 2
      // Predicated region
      $region45: #{subsets_forward.1} parent=5 // pred_check
        %p468 = pneg %p467
      $region46: #{subsets_forward.1} parent=5 // pred_check_branch
        %470 = sbr.rel (%p468) target = $region48
      $region47: #{subsets_forward.1} parent=5 // pred_region
        // Predicated region
        $region49: #{subsets_forward.1} parent=47 // pred_check
          %p471 = pneg %p46
        $region50: #{subsets_forward.1} parent=47 // pred_check_branch
          %473 = sbr.rel (%p471) target = $region52
        $region51: #{subsets_forward.1} parent=47 // pred_region
          %s474 = smul.u32 2, %s26
          %p475 = scmp.lt.s32.totalorder %s474, 3
          %s476 = scalar_select %p475, %s474, 3
          %s477 = smul.addr %s476, 2
          %s478 = smul.addr %s477, 8
          %s479 = scalar_lea.vmem %s0, %s478
          %s480 = smul.u32 2, %s26
        $region52: #{subsets_forward.1} parent=47 // pred_fallthru
          _
        // Predicated region
        $region53: #{subsets_forward.1} parent=47 // pred_check
          %p481 = pneg %p72
        $region54: #{subsets_forward.1} parent=47 // pred_check_branch
          %483 = sbr.rel (%p481) target = $region56
        $region55: #{subsets_forward.1} parent=47 // pred_region
          %s484 = smul.u32 2, %s26
          %p485 = scmp.lt.s32.totalorder %s484, 3
          %s486 = scalar_select %p485, %s484, 3
          %s487 = smul.addr %s486, 2
          %s488 = smul.addr %s487, 8
          %s489 = scalar_lea.vmem %s1, %s488
          %s490 = smul.u32 2, %s26
        $region56: #{subsets_forward.1} parent=47 // pred_fallthru
          _
        // Predicated region
        $region57: #{subsets_forward.1} parent=47 // pred_check
          %p491 = pneg %p98
        $region58: #{subsets_forward.1} parent=47 // pred_check_branch
          %493 = sbr.rel (%p491) target = $region60
        $region59: #{subsets_forward.1} parent=47 // pred_region
          %s494 = smul.u32 2, %s26
          %p495 = scmp.lt.s32.totalorder %s494, 3
          %s496 = scalar_select %p495, %s494, 3
          %s497 = scalar_lea.vmem %s2, %s496
          %s498 = smul.u32 2, %s26
        $region60: #{subsets_forward.1} parent=47 // pred_fallthru
          _
        // Predicated region
        $region61: #{subsets_forward.1} parent=47 // pred_check
          %p499 = pneg %p124
        $region62: #{subsets_forward.1} parent=47 // pred_check_branch
          %501 = sbr.rel (%p499) target = $region64
        $region63: #{subsets_forward.1} parent=47 // pred_region
          %s502 = smul.u32 2, %s26
          %p503 = scmp.lt.s32.totalorder %s502, 3
          %s504 = scalar_select %p503, %s502, 3
          %s505 = smul.addr %s504, 2
          %s506 = smul.addr %s505, 8
          %s507 = scalar_lea.vmem %s3, %s506
          %s508 = smul.u32 2, %s26
        $region64: #{subsets_forward.1} parent=47 // pred_fallthru
          _
        // Predicated region
        $region65: #{subsets_forward.1} parent=47 // pred_check
          %p509 = pneg %p150
        $region66: #{subsets_forward.1} parent=47 // pred_check_branch
          %511 = sbr.rel (%p509) target = $region68
        $region67: #{subsets_forward.1} parent=47 // pred_region
          %s512 = smul.u32 2, %s26
          %p513 = scmp.lt.s32.totalorder %s512, 3
          %s514 = scalar_select %p513, %s512, 3
          %s515 = smul.addr %s514, 8
          %s516 = smul.addr %s515, 8
          %s517 = scalar_lea.vmem %s4, %s516
          %s518 = smul.u32 2, %s26
        $region68: #{subsets_forward.1} parent=47 // pred_fallthru
          _
        // Predicated region
        $region69: #{subsets_forward.1} parent=47 // pred_check
          %p519 = pneg %p176
        $region70: #{subsets_forward.1} parent=47 // pred_check_branch
          %521 = sbr.rel (%p519) target = $region72
        $region71: #{subsets_forward.1} parent=47 // pred_region
          %s522 = smul.u32 2, %s26
          %p523 = scmp.lt.s32.totalorder %s522, 3
          %s524 = scalar_select %p523, %s522, 3
          %s525 = smul.addr %s524, 8
          %s526 = smul.addr %s525, 8
          %s527 = scalar_lea.vmem %s5, %s526
          %s528 = smul.u32 2, %s26
        $region72: #{subsets_forward.1} parent=47 // pred_fallthru
          _
        // Predicated region
        $region73: #{subsets_forward.1} parent=47 // pred_check
          %p529 = pneg %p202
        $region74: #{subsets_forward.1} parent=47 // pred_check_branch
          %531 = sbr.rel (%p529) target = $region76
        $region75: #{subsets_forward.1} parent=47 // pred_region
          %s532 = smul.u32 2, %s26
          %p533 = scmp.lt.s32.totalorder %s532, 3
          %s534 = scalar_select %p533, %s532, 3
          %s535 = smul.addr %s534, 8
          %s536 = smul.addr %s535, 8
          %s537 = scalar_lea.vmem %s6, %s536
          %s538 = smul.u32 2, %s26
        $region76: #{subsets_forward.1} parent=47 // pred_fallthru
          _
      $region48: #{subsets_forward.1} parent=5 // pred_fallthru
        _
      %p539 = scmp.le.s32.totalorder 1, %s26
      %p540 = scmp.lt.s32.totalorder %s26, 3
      %p541 = pnand %p539, %p540
      %p542 = pneg %p541
      // Predicated region
      $region77: #{subsets_forward.1} parent=5 // pred_check
        _
      $region78: #{subsets_forward.1} parent=5 // pred_check_branch
        %544 = sbr.rel (%p541) target = $region80
      $region79: #{subsets_forward.1} parent=5 // pred_region
        %s545 = ssub.s32 %s26, 1
        %s546 = smul.u32 2, %s31
        %p547 = scmp.lt.s32.totalorder %s546, 3
        %s548 = scalar_select %p547, %s546, 3
        %s549 = smul.addr %s548, 2
        %s550 = smul.addr %s549, 8
        %s551 = scalar_lea.vmem %s0, %s550
        %p552 = pneg %p52
        %p553 = pneg %p49
        %s554 = smul.u32 2, %s31
        %p555 = scmp.lt.s32.totalorder %s554, 3
        %s556 = scalar_select %p555, %s554, 3
        %s557 = smul.addr %s556, 2
        %s558 = smul.addr %s557, 8
        %s559 = scalar_lea.vmem %s1, %s558
        %p560 = pneg %p78
        %p561 = pneg %p75
        %s562 = smul.u32 2, %s31
        %p563 = scmp.lt.s32.totalorder %s562, 3
        %s564 = scalar_select %p563, %s562, 3
        %s565 = scalar_lea.vmem %s2, %s564
        %p566 = pneg %p104
        %p567 = pneg %p101
        %s568 = smul.u32 2, %s31
        %p569 = scmp.lt.s32.totalorder %s568, 3
        %s570 = scalar_select %p569, %s568, 3
        %s571 = smul.addr %s570, 2
        %s572 = smul.addr %s571, 8
        %s573 = scalar_lea.vmem %s3, %s572
        %p574 = pneg %p130
        %p575 = pneg %p127
        %s576 = smul.u32 2, %s31
        %p577 = scmp.lt.s32.totalorder %s576, 3
        %s578 = scalar_select %p577, %s576, 3
        %s579 = smul.addr %s578, 8
        %s580 = smul.addr %s579, 8
        %s581 = scalar_lea.vmem %s4, %s580
        %p582 = pneg %p156
        %p583 = pneg %p153
        %s584 = smul.u32 2, %s31
        %p585 = scmp.lt.s32.totalorder %s584, 3
        %s586 = scalar_select %p585, %s584, 3
        %s587 = smul.addr %s586, 8
        %s588 = smul.addr %s587, 8
        %s589 = scalar_lea.vmem %s5, %s588
        %p590 = pneg %p182
        %p591 = pneg %p179
        %s592 = smul.u32 2, %s31
        %p593 = scmp.lt.s32.totalorder %s592, 3
        %s594 = scalar_select %p593, %s592, 3
        %s595 = smul.addr %s594, 8
        %s596 = smul.addr %s595, 8
        %s597 = scalar_lea.vmem %s6, %s596
        %p598 = pneg %p208
        %p599 = pneg %p205
        %p600 = pneg %p229
        %p601 = pneg %p226
        %p602 = pneg %p250
        %p603 = pneg %p247
        %p604 = pneg %p271
        %p605 = pneg %p268
        %p606 = pneg %p292
        %p607 = pneg %p289
        %p608 = pneg %p313
        %p609 = pneg %p310
        %p610 = pneg %p334
        %p611 = pneg %p331
        %p612 = pneg %p355
        %p613 = pneg %p352
        %p614 = pneg %p376
        %p615 = pneg %p373
        %p616 = pneg %p402
        %p617 = pneg %p399
        %s618 = sand.u32 %s389, 1
        %s619 = scalar_lea.sflag [#allocation3], %s618
        %s620 = sand.u32 %s389, 1
        %s621 = smul.addr %s620, 2
        %s622 = scalar_lea.vmem [#allocation2], %s621
        %p623 = pneg %p428
        %p624 = pneg %p425
        %s625 = smul.u32 2, %s31
        %p626 = scmp.lt.s32.totalorder %s625, 3
        %s627 = scalar_select %p626, %s625, 3
        %s628 = smul.addr %s627, 2
        %s629 = scalar_lea.vmem %s16, %s628
        %s630 = smul.u32 2, %s31
        %p631 = scmp.lt.s32.totalorder %s630, 3
        %s632 = scalar_select %p631, %s630, 3
        %s633 = smul.addr %s632, 2
        %s634 = smul.addr %s633, 8
        %s635 = scalar_lea.vmem %s0, %s634
        %s636 = smul.u32 2, %s31
        %s637 = smul.u32 2, %s31
        %p638 = scmp.lt.s32.totalorder %s637, 3
        %s639 = scalar_select %p638, %s637, 3
        %s640 = smul.addr %s639, 2
        %s641 = smul.addr %s640, 8
        %s642 = scalar_lea.vmem %s1, %s641
        %s643 = smul.u32 2, %s31
        %s644 = smul.u32 2, %s31
        %p645 = scmp.lt.s32.totalorder %s644, 3
        %s646 = scalar_select %p645, %s644, 3
        %s647 = scalar_lea.vmem %s2, %s646
        %s648 = smul.u32 2, %s31
        %s649 = smul.u32 2, %s31
        %p650 = scmp.lt.s32.totalorder %s649, 3
        %s651 = scalar_select %p650, %s649, 3
        %s652 = smul.addr %s651, 2
        %s653 = smul.addr %s652, 8
        %s654 = scalar_lea.vmem %s3, %s653
        %s655 = smul.u32 2, %s31
        %s656 = smul.u32 2, %s31
        %p657 = scmp.lt.s32.totalorder %s656, 3
        %s658 = scalar_select %p657, %s656, 3
        %s659 = smul.addr %s658, 8
        %s660 = smul.addr %s659, 8
        %s661 = scalar_lea.vmem %s4, %s660
        %s662 = smul.u32 2, %s31
        %s663 = smul.u32 2, %s31
        %p664 = scmp.lt.s32.totalorder %s663, 3
        %s665 = scalar_select %p664, %s663, 3
        %s666 = smul.addr %s665, 8
        %s667 = smul.addr %s666, 8
        %s668 = scalar_lea.vmem %s5, %s667
        %s669 = smul.u32 2, %s31
        %s670 = smul.u32 2, %s31
        %p671 = scmp.lt.s32.totalorder %s670, 3
        %s672 = scalar_select %p671, %s670, 3
        %s673 = smul.addr %s672, 8
        %s674 = smul.addr %s673, 8
        %s675 = scalar_lea.vmem %s6, %s674
        %s676 = smul.u32 2, %s31
        %s677 = smul.u32 2, %s31
        %s678 = smul.u32 2, %s31
        %p679 = scmp.lt.s32.totalorder %s678, 3
        %s680 = scalar_select %p679, %s678, 3
        %s681 = smul.addr %s680, 2
        %s682 = scalar_lea.vmem %s16, %s681
        %s683 = smul.u32 2, %s31
        %v684 = vld [vmem:[%s635] sm:$0xff]
        %v685 = vld [vmem:[%s635 + $0x8] sm:$0xff]
        %v686 = vld [vmem:[%s635 + $0x10] sm:$0xff]
        %v687 = vld [vmem:[%s635 + $0x18] sm:$0xff]
        %v688 = vld [vmem:[%s642] sm:$0xff]
        %v689 = vld [vmem:[%s642 + $0x8] sm:$0xff]
        %v690 = vld [vmem:[%s642 + $0x10] sm:$0xff]
        %v691 = vld [vmem:[%s642 + $0x18] sm:$0xff]
        %v692 = vld [vmem:[%s647] sm:$0x1]
        %v693 = vld [vmem:[%s647 + $0x1] sm:$0x1]
        %v694 = vld [vmem:[%s654] sm:$0xff]
        %v695 = vld [vmem:[%s654 + $0x8] sm:$0xff]
        %v696 = vld [vmem:[%s654 + $0x10] sm:$0xff]
        %v697 = vld [vmem:[%s654 + $0x18] sm:$0xff]
        %v698 = vld [vmem:[%s661] sm:$0xff]
        %v699 = vld [vmem:[%s661 + $0x8] sm:$0xff]
        %v700 = vld [vmem:[%s661 + $0x10] sm:$0xff]
        %v701 = vld [vmem:[%s661 + $0x18] sm:$0xff]
        %v702 = vld [vmem:[%s661 + $0x20] sm:$0xff]
        %v703 = vld [vmem:[%s661 + $0x28] sm:$0xff]
        %v704 = vld [vmem:[%s661 + $0x30] sm:$0xff]
        %v705 = vld [vmem:[%s661 + $0x38] sm:$0xff]
        %v706 = vld [vmem:[%s661 + $0x40] sm:$0xff]
        %v707 = vld [vmem:[%s661 + $0x48] sm:$0xff]
        %v708 = vld [vmem:[%s661 + $0x50] sm:$0xff]
        %v709 = vld [vmem:[%s661 + $0x58] sm:$0xff]
        %v710 = vld [vmem:[%s661 + $0x60] sm:$0xff]
        %v711 = vld [vmem:[%s661 + $0x68] sm:$0xff]
        %v712 = vld [vmem:[%s661 + $0x70] sm:$0xff]
        %v713 = vld [vmem:[%s661 + $0x78] sm:$0xff]
        %v714 = vld [vmem:[%s668] sm:$0xff]
        %v715 = vld [vmem:[%s668 + $0x8] sm:$0xff]
        %v716 = vld [vmem:[%s668 + $0x10] sm:$0xff]
        %v717 = vld [vmem:[%s668 + $0x18] sm:$0xff]
        %v718 = vld [vmem:[%s668 + $0x20] sm:$0xff]
        %v719 = vld [vmem:[%s668 + $0x28] sm:$0xff]
        %v720 = vld [vmem:[%s668 + $0x30] sm:$0xff]
        %v721 = vld [vmem:[%s668 + $0x38] sm:$0xff]
        %v722 = vld [vmem:[%s668 + $0x40] sm:$0xff]
        %v723 = vld [vmem:[%s668 + $0x48] sm:$0xff]
        %v724 = vld [vmem:[%s668 + $0x50] sm:$0xff]
        %v725 = vld [vmem:[%s668 + $0x58] sm:$0xff]
        %v726 = vld [vmem:[%s668 + $0x60] sm:$0xff]
        %v727 = vld [vmem:[%s668 + $0x68] sm:$0xff]
        %v728 = vld [vmem:[%s668 + $0x70] sm:$0xff]
        %v729 = vld [vmem:[%s668 + $0x78] sm:$0xff]
        %v730 = vld [vmem:[%s675] sm:$0xff]
        %v731 = vld [vmem:[%s675 + $0x8] sm:$0xff]
        %v732 = vld [vmem:[%s675 + $0x10] sm:$0xff]
        %v733 = vld [vmem:[%s675 + $0x18] sm:$0xff]
        %v734 = vld [vmem:[%s675 + $0x20] sm:$0xff]
        %v735 = vld [vmem:[%s675 + $0x28] sm:$0xff]
        %v736 = vld [vmem:[%s675 + $0x30] sm:$0xff]
        %v737 = vld [vmem:[%s675 + $0x38] sm:$0xff]
        %v738 = vld [vmem:[%s675 + $0x40] sm:$0xff]
        %v739 = vld [vmem:[%s675 + $0x48] sm:$0xff]
        %v740 = vld [vmem:[%s675 + $0x50] sm:$0xff]
        %v741 = vld [vmem:[%s675 + $0x58] sm:$0xff]
        %v742 = vld [vmem:[%s675 + $0x60] sm:$0xff]
        %v743 = vld [vmem:[%s675 + $0x68] sm:$0xff]
        %v744 = vld [vmem:[%s675 + $0x70] sm:$0xff]
        %v745 = vld [vmem:[%s675 + $0x78] sm:$0xff]
        %v746 = vld [vmem:[%s7] sm:$0x1f]
        %v747 = vld [vmem:[%s7 + $0x5] sm:$0x1]
        %749 = vset.pattern.permute.xlu0 0
        %750 = vperm.xlu0 %749, %v688
        %v751 = vpop.permute.xlu0 %750
        %754 = vset.pattern.permute.xlu0 0
        %755 = vperm.xlu0 %754, %v689
        %v756 = vpop.permute.xlu0 %755
        %759 = vset.pattern.permute.xlu0 0
        %760 = vperm.xlu0 %759, %v690
        %v761 = vpop.permute.xlu0 %760
        %764 = vset.pattern.permute.xlu0 0
        %765 = vperm.xlu0 %764, %v691
        %v766 = vpop.permute.xlu0 %765
        %v768 = vmul.f32 %v684, %v751
        %v769 = vmul.f32 %v685, %v756
        %v770 = vmul.f32 %v686, %v761
        %v771 = vmul.f32 %v687, %v766
        %v774 = vperm.slane %v692, 0
        %v775 = vperm.slane %v693, 0
        %v778 = vmul.f32 %v698, %v774
        %v779 = vmul.f32 %v699, %v774
        %v780 = vmul.f32 %v700, %v774
        %v781 = vmul.f32 %v701, %v774
        %v782 = vmul.f32 %v702, %v774
        %v783 = vmul.f32 %v703, %v774
        %v784 = vmul.f32 %v704, %v774
        %v785 = vmul.f32 %v705, %v774
        %v786 = vmul.f32 %v706, %v775
        %v787 = vmul.f32 %v707, %v775
        %v788 = vmul.f32 %v708, %v775
        %v789 = vmul.f32 %v709, %v775
        %v790 = vmul.f32 %v710, %v775
        %v791 = vmul.f32 %v711, %v775
        %v792 = vmul.f32 %v712, %v775
        %v793 = vmul.f32 %v713, %v775
        %vm794 = vcmask 130048
        %v796 = vsel %vm794, %v778, 0
        %v799 = vsel %vm794, %v779, 0
        %v802 = vsel %vm794, %v780, 0
        %v805 = vsel %vm794, %v781, 0
        %v808 = vsel %vm794, %v782, 0
        %v811 = vsel %vm794, %v783, 0
        %v814 = vsel %vm794, %v784, 0
        %v817 = vsel %vm794, %v785, 0
        %819 = vmatpush.msra.mxu0 0.0
        %820 = vmatpush.msra.mxu0 0.0
        %821 = vmatpush.msra.mxu0 0.0
        %822 = vmatpush.msra.mxu0 0.0
        %823 = vmatpush.msra.mxu0 0.0
        %824 = vmatpush.msra.mxu0 0.0
        %825 = vmatpush.msra.mxu0 0.0
        %826 = vmatpush.msra.mxu0 0.0
        %827 = vmatpush.msra.mxu0 0.0
        %828 = vmatpush.msra.mxu0 0.0
        %829 = vmatpush.msra.mxu0 0.0
        %830 = vmatpush.msra.mxu0 0.0
        %831 = vmatpush.msra.mxu0 0.0
        %832 = vmatpush.msra.mxu0 0.0
        %833 = vmatpush.msra.mxu0 %v769
        %834 = vmatpush.msra.mxu0 %v768
        %835 = vmatmul.f32.gmra.mxu0 %v796
        %v836 = vpop.f32.mrf.mxu0
        %v837 = vadd.f32 0.0, %v836
        %838 = vmatmul.f32.gmra.mxu0 %v799
        %v839 = vpop.f32.mrf.mxu0
        %v840 = vadd.f32 0.0, %v839
        %841 = vmatmul.f32.gmra.mxu0 %v802
        %v842 = vpop.f32.mrf.mxu0
        %v843 = vadd.f32 0.0, %v842
        %844 = vmatmul.f32.gmra.mxu0 %v805
        %v845 = vpop.f32.mrf.mxu0
        %v846 = vadd.f32 0.0, %v845
        %847 = vmatmul.f32.gmra.mxu0 %v808
        %v848 = vpop.f32.mrf.mxu0
        %v849 = vadd.f32 0.0, %v848
        %850 = vmatmul.f32.gmra.mxu0 %v811
        %v851 = vpop.f32.mrf.mxu0
        %v852 = vadd.f32 0.0, %v851
        %853 = vmatmul.f32.gmra.mxu0 %v814
        %v854 = vpop.f32.mrf.mxu0
        %v855 = vadd.f32 0.0, %v854
        %856 = vmatmul.f32.gmra.mxu0 %v817
        %v857 = vpop.f32.mrf.mxu0
        %v858 = vadd.f32 0.0, %v857
        %859 = vdwg.mxu0
        %v861 = vsel %vm794, %v786, 0
        %v864 = vsel %vm794, %v787, 0
        %v867 = vsel %vm794, %v788, 0
        %v870 = vsel %vm794, %v789, 0
        %v873 = vsel %vm794, %v790, 0
        %v876 = vsel %vm794, %v791, 0
        %v879 = vsel %vm794, %v792, 0
        %v882 = vsel %vm794, %v793, 0
        %884 = vmatpush.msra.mxu0 0.0
        %885 = vmatpush.msra.mxu0 0.0
        %886 = vmatpush.msra.mxu0 0.0
        %887 = vmatpush.msra.mxu0 0.0
        %888 = vmatpush.msra.mxu0 0.0
        %889 = vmatpush.msra.mxu0 0.0
        %890 = vmatpush.msra.mxu0 0.0
        %891 = vmatpush.msra.mxu0 0.0
        %892 = vmatpush.msra.mxu0 0.0
        %893 = vmatpush.msra.mxu0 0.0
        %894 = vmatpush.msra.mxu0 0.0
        %895 = vmatpush.msra.mxu0 0.0
        %896 = vmatpush.msra.mxu0 0.0
        %897 = vmatpush.msra.mxu0 0.0
        %898 = vmatpush.msra.mxu0 %v771
        %899 = vmatpush.msra.mxu0 %v770
        %900 = vmatmul.f32.gmra.mxu0 %v861
        %v901 = vpop.f32.mrf.mxu0
        %v902 = vadd.f32 0.0, %v901
        %903 = vmatmul.f32.gmra.mxu0 %v864
        %v904 = vpop.f32.mrf.mxu0
        %v905 = vadd.f32 0.0, %v904
        %906 = vmatmul.f32.gmra.mxu0 %v867
        %v907 = vpop.f32.mrf.mxu0
        %v908 = vadd.f32 0.0, %v907
        %909 = vmatmul.f32.gmra.mxu0 %v870
        %v910 = vpop.f32.mrf.mxu0
        %v911 = vadd.f32 0.0, %v910
        %912 = vmatmul.f32.gmra.mxu0 %v873
        %v913 = vpop.f32.mrf.mxu0
        %v914 = vadd.f32 0.0, %v913
        %915 = vmatmul.f32.gmra.mxu0 %v876
        %v916 = vpop.f32.mrf.mxu0
        %v917 = vadd.f32 0.0, %v916
        %918 = vmatmul.f32.gmra.mxu0 %v879
        %v919 = vpop.f32.mrf.mxu0
        %v920 = vadd.f32 0.0, %v919
        %921 = vmatmul.f32.gmra.mxu0 %v882
        %v922 = vpop.f32.mrf.mxu0
        %v923 = vadd.f32 0.0, %v922
        %924 = vdwg.mxu0
        %v926 = vsel %vm794, %v698, 0
        %v929 = vsel %vm794, %v699, 0
        %v932 = vsel %vm794, %v700, 0
        %v935 = vsel %vm794, %v701, 0
        %v938 = vsel %vm794, %v702, 0
        %v941 = vsel %vm794, %v703, 0
        %v944 = vsel %vm794, %v704, 0
        %v947 = vsel %vm794, %v705, 0
        %949 = vmatpush.msra.mxu0 0.0
        %950 = vmatpush.msra.mxu0 0.0
        %951 = vmatpush.msra.mxu0 0.0
        %952 = vmatpush.msra.mxu0 0.0
        %953 = vmatpush.msra.mxu0 0.0
        %954 = vmatpush.msra.mxu0 0.0
        %955 = vmatpush.msra.mxu0 0.0
        %956 = vmatpush.msra.mxu0 0.0
        %957 = vmatpush.msra.mxu0 0.0
        %958 = vmatpush.msra.mxu0 0.0
        %959 = vmatpush.msra.mxu0 0.0
        %960 = vmatpush.msra.mxu0 0.0
        %961 = vmatpush.msra.mxu0 0.0
        %962 = vmatpush.msra.mxu0 0.0
        %963 = vmatpush.msra.mxu0 %v695
        %964 = vmatpush.msra.mxu0 %v694
        %965 = vmatmul.f32.gmra.mxu0 %v926
        %v966 = vpop.f32.mrf.mxu0
        %v967 = vadd.f32 0.0, %v966
        %968 = vmatmul.f32.gmra.mxu0 %v929
        %v969 = vpop.f32.mrf.mxu0
        %v970 = vadd.f32 0.0, %v969
        %971 = vmatmul.f32.gmra.mxu0 %v932
        %v972 = vpop.f32.mrf.mxu0
        %v973 = vadd.f32 0.0, %v972
        %974 = vmatmul.f32.gmra.mxu0 %v935
        %v975 = vpop.f32.mrf.mxu0
        %v976 = vadd.f32 0.0, %v975
        %977 = vmatmul.f32.gmra.mxu0 %v938
        %v978 = vpop.f32.mrf.mxu0
        %v979 = vadd.f32 0.0, %v978
        %980 = vmatmul.f32.gmra.mxu0 %v941
        %v981 = vpop.f32.mrf.mxu0
        %v982 = vadd.f32 0.0, %v981
        %983 = vmatmul.f32.gmra.mxu0 %v944
        %v984 = vpop.f32.mrf.mxu0
        %v985 = vadd.f32 0.0, %v984
        %986 = vmatmul.f32.gmra.mxu0 %v947
        %v987 = vpop.f32.mrf.mxu0
        %v988 = vadd.f32 0.0, %v987
        %989 = vdwg.mxu0
        %v991 = vsel %vm794, %v706, 0
        %v994 = vsel %vm794, %v707, 0
        %v997 = vsel %vm794, %v708, 0
        %v1000 = vsel %vm794, %v709, 0
        %v1003 = vsel %vm794, %v710, 0
        %v1006 = vsel %vm794, %v711, 0
        %v1009 = vsel %vm794, %v712, 0
        %v1012 = vsel %vm794, %v713, 0
        %1014 = vmatpush.msra.mxu0 0.0
        %1015 = vmatpush.msra.mxu0 0.0
        %1016 = vmatpush.msra.mxu0 0.0
        %1017 = vmatpush.msra.mxu0 0.0
        %1018 = vmatpush.msra.mxu0 0.0
        %1019 = vmatpush.msra.mxu0 0.0
        %1020 = vmatpush.msra.mxu0 0.0
        %1021 = vmatpush.msra.mxu0 0.0
        %1022 = vmatpush.msra.mxu0 0.0
        %1023 = vmatpush.msra.mxu0 0.0
        %1024 = vmatpush.msra.mxu0 0.0
        %1025 = vmatpush.msra.mxu0 0.0
        %1026 = vmatpush.msra.mxu0 0.0
        %1027 = vmatpush.msra.mxu0 0.0
        %1028 = vmatpush.msra.mxu0 %v697
        %1029 = vmatpush.msra.mxu0 %v696
        %1030 = vmatmul.f32.gmra.mxu0 %v991
        %v1031 = vpop.f32.mrf.mxu0
        %v1032 = vadd.f32 0.0, %v1031
        %1033 = vmatmul.f32.gmra.mxu0 %v994
        %v1034 = vpop.f32.mrf.mxu0
        %v1035 = vadd.f32 0.0, %v1034
        %1036 = vmatmul.f32.gmra.mxu0 %v997
        %v1037 = vpop.f32.mrf.mxu0
        %v1038 = vadd.f32 0.0, %v1037
        %1039 = vmatmul.f32.gmra.mxu0 %v1000
        %v1040 = vpop.f32.mrf.mxu0
        %v1041 = vadd.f32 0.0, %v1040
        %1042 = vmatmul.f32.gmra.mxu0 %v1003
        %v1043 = vpop.f32.mrf.mxu0
        %v1044 = vadd.f32 0.0, %v1043
        %1045 = vmatmul.f32.gmra.mxu0 %v1006
        %v1046 = vpop.f32.mrf.mxu0
        %v1047 = vadd.f32 0.0, %v1046
        %1048 = vmatmul.f32.gmra.mxu0 %v1009
        %v1049 = vpop.f32.mrf.mxu0
        %v1050 = vadd.f32 0.0, %v1049
        %1051 = vmatmul.f32.gmra.mxu0 %v1012
        %v1052 = vpop.f32.mrf.mxu0
        %v1053 = vadd.f32 0.0, %v1052
        %1054 = vdwg.mxu0
        %v1055 = vsel %vm794, %v778, 0.0
        %1056 = vadd.xlane.f32.xlu0 %v1055
        %v1057 = vpop.xlane.xlu0 %1056
        %v1058 = vsel %vm794, %v779, 0.0
        %1059 = vadd.xlane.f32.xlu0 %v1058
        %v1060 = vpop.xlane.xlu0 %1059
        %v1061 = vsel %vm794, %v780, 0.0
        %1062 = vadd.xlane.f32.xlu0 %v1061
        %v1063 = vpop.xlane.xlu0 %1062
        %v1064 = vsel %vm794, %v781, 0.0
        %1065 = vadd.xlane.f32.xlu0 %v1064
        %v1066 = vpop.xlane.xlu0 %1065
        %v1067 = vsel %vm794, %v782, 0.0
        %1068 = vadd.xlane.f32.xlu0 %v1067
        %v1069 = vpop.xlane.xlu0 %1068
        %v1070 = vsel %vm794, %v783, 0.0
        %1071 = vadd.xlane.f32.xlu0 %v1070
        %v1072 = vpop.xlane.xlu0 %1071
        %v1073 = vsel %vm794, %v784, 0.0
        %1074 = vadd.xlane.f32.xlu0 %v1073
        %v1075 = vpop.xlane.xlu0 %1074
        %v1076 = vsel %vm794, %v785, 0.0
        %1077 = vadd.xlane.f32.xlu0 %v1076
        %v1078 = vpop.xlane.xlu0 %1077
        %v1079 = vsel %vm794, %v786, 0.0
        %1080 = vadd.xlane.f32.xlu0 %v1079
        %v1081 = vpop.xlane.xlu0 %1080
        %v1082 = vsel %vm794, %v787, 0.0
        %1083 = vadd.xlane.f32.xlu0 %v1082
        %v1084 = vpop.xlane.xlu0 %1083
        %v1085 = vsel %vm794, %v788, 0.0
        %1086 = vadd.xlane.f32.xlu0 %v1085
        %v1087 = vpop.xlane.xlu0 %1086
        %v1088 = vsel %vm794, %v789, 0.0
        %1089 = vadd.xlane.f32.xlu0 %v1088
        %v1090 = vpop.xlane.xlu0 %1089
        %v1091 = vsel %vm794, %v790, 0.0
        %1092 = vadd.xlane.f32.xlu0 %v1091
        %v1093 = vpop.xlane.xlu0 %1092
        %v1094 = vsel %vm794, %v791, 0.0
        %1095 = vadd.xlane.f32.xlu0 %v1094
        %v1096 = vpop.xlane.xlu0 %1095
        %v1097 = vsel %vm794, %v792, 0.0
        %1098 = vadd.xlane.f32.xlu0 %v1097
        %v1099 = vpop.xlane.xlu0 %1098
        %v1100 = vsel %vm794, %v793, 0.0
        %1101 = vadd.xlane.f32.xlu0 %v1100
        %v1102 = vpop.xlane.xlu0 %1101
        %v1103 = vadd.f32 %v1057, 0.0001
        %v1104 = vadd.f32 %v1060, 0.0001
        %v1105 = vadd.f32 %v1063, 0.0001
        %v1106 = vadd.f32 %v1066, 0.0001
        %v1107 = vadd.f32 %v1069, 0.0001
        %v1108 = vadd.f32 %v1072, 0.0001
        %v1109 = vadd.f32 %v1075, 0.0001
        %v1110 = vadd.f32 %v1078, 0.0001
        %v1111 = vadd.f32 %v1081, 0.0001
        %v1112 = vadd.f32 %v1084, 0.0001
        %v1113 = vadd.f32 %v1087, 0.0001
        %v1114 = vadd.f32 %v1090, 0.0001
        %v1115 = vadd.f32 %v1093, 0.0001
        %v1116 = vadd.f32 %v1096, 0.0001
        %v1117 = vadd.f32 %v1099, 0.0001
        %v1118 = vadd.f32 %v1102, 0.0001
        %v1119 = vrcp.pop %v1103
        %v1120 = vmul.f32 %v1103, %v1119
        %v1121 = vsub.f32 1.0, %v1120
        %v1122 = vmul.f32 %v1119, %v1121
        %v1123 = vadd.f32 %v1119, %v1122
        %vm1124 = vweird.f32 %v1103
        %vm1125 = vweird.f32 %v1119
        %vm1126 = vmor %vm1124, %vm1125
        %v1127 = vsel %vm1126, %v1119, %v1123
        %v1128 = vand.u32 2147483647, %v1103
        %vm1129 = vcmp.eq.f32.partialorder %v1128, 8.507059e+37
        %v1130 = vand.u32 %v1103, 2147483648
        %v1131 = vor.u32 1.1754944e-38, %v1130
        %v1132 = vsel %vm1129, %v1131, %v1127
        %v1133 = vmul.f32 %v837, %v1132
        %v1134 = vrcp.pop %v1104
        %v1135 = vmul.f32 %v1104, %v1134
        %v1136 = vsub.f32 1.0, %v1135
        %v1137 = vmul.f32 %v1134, %v1136
        %v1138 = vadd.f32 %v1134, %v1137
        %vm1139 = vweird.f32 %v1104
        %vm1140 = vweird.f32 %v1134
        %vm1141 = vmor %vm1139, %vm1140
        %v1142 = vsel %vm1141, %v1134, %v1138
        %v1143 = vand.u32 2147483647, %v1104
        %vm1144 = vcmp.eq.f32.partialorder %v1143, 8.507059e+37
        %v1145 = vand.u32 %v1104, 2147483648
        %v1146 = vor.u32 1.1754944e-38, %v1145
        %v1147 = vsel %vm1144, %v1146, %v1142
        %v1148 = vmul.f32 %v840, %v1147
        %v1149 = vrcp.pop %v1105
        %v1150 = vmul.f32 %v1105, %v1149
        %v1151 = vsub.f32 1.0, %v1150
        %v1152 = vmul.f32 %v1149, %v1151
        %v1153 = vadd.f32 %v1149, %v1152
        %vm1154 = vweird.f32 %v1105
        %vm1155 = vweird.f32 %v1149
        %vm1156 = vmor %vm1154, %vm1155
        %v1157 = vsel %vm1156, %v1149, %v1153
        %v1158 = vand.u32 2147483647, %v1105
        %vm1159 = vcmp.eq.f32.partialorder %v1158, 8.507059e+37
        %v1160 = vand.u32 %v1105, 2147483648
        %v1161 = vor.u32 1.1754944e-38, %v1160
        %v1162 = vsel %vm1159, %v1161, %v1157
        %v1163 = vmul.f32 %v843, %v1162
        %v1164 = vrcp.pop %v1106
        %v1165 = vmul.f32 %v1106, %v1164
        %v1166 = vsub.f32 1.0, %v1165
        %v1167 = vmul.f32 %v1164, %v1166
        %v1168 = vadd.f32 %v1164, %v1167
        %vm1169 = vweird.f32 %v1106
        %vm1170 = vweird.f32 %v1164
        %vm1171 = vmor %vm1169, %vm1170
        %v1172 = vsel %vm1171, %v1164, %v1168
        %v1173 = vand.u32 2147483647, %v1106
        %vm1174 = vcmp.eq.f32.partialorder %v1173, 8.507059e+37
        %v1175 = vand.u32 %v1106, 2147483648
        %v1176 = vor.u32 1.1754944e-38, %v1175
        %v1177 = vsel %vm1174, %v1176, %v1172
        %v1178 = vmul.f32 %v846, %v1177
        %v1179 = vrcp.pop %v1107
        %v1180 = vmul.f32 %v1107, %v1179
        %v1181 = vsub.f32 1.0, %v1180
        %v1182 = vmul.f32 %v1179, %v1181
        %v1183 = vadd.f32 %v1179, %v1182
        %vm1184 = vweird.f32 %v1107
        %vm1185 = vweird.f32 %v1179
        %vm1186 = vmor %vm1184, %vm1185
        %v1187 = vsel %vm1186, %v1179, %v1183
        %v1188 = vand.u32 2147483647, %v1107
        %vm1189 = vcmp.eq.f32.partialorder %v1188, 8.507059e+37
        %v1190 = vand.u32 %v1107, 2147483648
        %v1191 = vor.u32 1.1754944e-38, %v1190
        %v1192 = vsel %vm1189, %v1191, %v1187
        %v1193 = vmul.f32 %v849, %v1192
        %v1194 = vrcp.pop %v1108
        %v1195 = vmul.f32 %v1108, %v1194
        %v1196 = vsub.f32 1.0, %v1195
        %v1197 = vmul.f32 %v1194, %v1196
        %v1198 = vadd.f32 %v1194, %v1197
        %vm1199 = vweird.f32 %v1108
        %vm1200 = vweird.f32 %v1194
        %vm1201 = vmor %vm1199, %vm1200
        %v1202 = vsel %vm1201, %v1194, %v1198
        %v1203 = vand.u32 2147483647, %v1108
        %vm1204 = vcmp.eq.f32.partialorder %v1203, 8.507059e+37
        %v1205 = vand.u32 %v1108, 2147483648
        %v1206 = vor.u32 1.1754944e-38, %v1205
        %v1207 = vsel %vm1204, %v1206, %v1202
        %v1208 = vmul.f32 %v852, %v1207
        %v1209 = vrcp.pop %v1109
        %v1210 = vmul.f32 %v1109, %v1209
        %v1211 = vsub.f32 1.0, %v1210
        %v1212 = vmul.f32 %v1209, %v1211
        %v1213 = vadd.f32 %v1209, %v1212
        %vm1214 = vweird.f32 %v1109
        %vm1215 = vweird.f32 %v1209
        %vm1216 = vmor %vm1214, %vm1215
        %v1217 = vsel %vm1216, %v1209, %v1213
        %v1218 = vand.u32 2147483647, %v1109
        %vm1219 = vcmp.eq.f32.partialorder %v1218, 8.507059e+37
        %v1220 = vand.u32 %v1109, 2147483648
        %v1221 = vor.u32 1.1754944e-38, %v1220
        %v1222 = vsel %vm1219, %v1221, %v1217
        %v1223 = vmul.f32 %v855, %v1222
        %v1224 = vrcp.pop %v1110
        %v1225 = vmul.f32 %v1110, %v1224
        %v1226 = vsub.f32 1.0, %v1225
        %v1227 = vmul.f32 %v1224, %v1226
        %v1228 = vadd.f32 %v1224, %v1227
        %vm1229 = vweird.f32 %v1110
        %vm1230 = vweird.f32 %v1224
        %vm1231 = vmor %vm1229, %vm1230
        %v1232 = vsel %vm1231, %v1224, %v1228
        %v1233 = vand.u32 2147483647, %v1110
        %vm1234 = vcmp.eq.f32.partialorder %v1233, 8.507059e+37
        %v1235 = vand.u32 %v1110, 2147483648
        %v1236 = vor.u32 1.1754944e-38, %v1235
        %v1237 = vsel %vm1234, %v1236, %v1232
        %v1238 = vmul.f32 %v858, %v1237
        %v1239 = vrcp.pop %v1111
        %v1240 = vmul.f32 %v1111, %v1239
        %v1241 = vsub.f32 1.0, %v1240
        %v1242 = vmul.f32 %v1239, %v1241
        %v1243 = vadd.f32 %v1239, %v1242
        %vm1244 = vweird.f32 %v1111
        %vm1245 = vweird.f32 %v1239
        %vm1246 = vmor %vm1244, %vm1245
        %v1247 = vsel %vm1246, %v1239, %v1243
        %v1248 = vand.u32 2147483647, %v1111
        %vm1249 = vcmp.eq.f32.partialorder %v1248, 8.507059e+37
        %v1250 = vand.u32 %v1111, 2147483648
        %v1251 = vor.u32 1.1754944e-38, %v1250
        %v1252 = vsel %vm1249, %v1251, %v1247
        %v1253 = vmul.f32 %v902, %v1252
        %v1254 = vrcp.pop %v1112
        %v1255 = vmul.f32 %v1112, %v1254
        %v1256 = vsub.f32 1.0, %v1255
        %v1257 = vmul.f32 %v1254, %v1256
        %v1258 = vadd.f32 %v1254, %v1257
        %vm1259 = vweird.f32 %v1112
        %vm1260 = vweird.f32 %v1254
        %vm1261 = vmor %vm1259, %vm1260
        %v1262 = vsel %vm1261, %v1254, %v1258
        %v1263 = vand.u32 2147483647, %v1112
        %vm1264 = vcmp.eq.f32.partialorder %v1263, 8.507059e+37
        %v1265 = vand.u32 %v1112, 2147483648
        %v1266 = vor.u32 1.1754944e-38, %v1265
        %v1267 = vsel %vm1264, %v1266, %v1262
        %v1268 = vmul.f32 %v905, %v1267
        %v1269 = vrcp.pop %v1113
        %v1270 = vmul.f32 %v1113, %v1269
        %v1271 = vsub.f32 1.0, %v1270
        %v1272 = vmul.f32 %v1269, %v1271
        %v1273 = vadd.f32 %v1269, %v1272
        %vm1274 = vweird.f32 %v1113
        %vm1275 = vweird.f32 %v1269
        %vm1276 = vmor %vm1274, %vm1275
        %v1277 = vsel %vm1276, %v1269, %v1273
        %v1278 = vand.u32 2147483647, %v1113
        %vm1279 = vcmp.eq.f32.partialorder %v1278, 8.507059e+37
        %v1280 = vand.u32 %v1113, 2147483648
        %v1281 = vor.u32 1.1754944e-38, %v1280
        %v1282 = vsel %vm1279, %v1281, %v1277
        %v1283 = vmul.f32 %v908, %v1282
        %v1284 = vrcp.pop %v1114
        %v1285 = vmul.f32 %v1114, %v1284
        %v1286 = vsub.f32 1.0, %v1285
        %v1287 = vmul.f32 %v1284, %v1286
        %v1288 = vadd.f32 %v1284, %v1287
        %vm1289 = vweird.f32 %v1114
        %vm1290 = vweird.f32 %v1284
        %vm1291 = vmor %vm1289, %vm1290
        %v1292 = vsel %vm1291, %v1284, %v1288
        %v1293 = vand.u32 2147483647, %v1114
        %vm1294 = vcmp.eq.f32.partialorder %v1293, 8.507059e+37
        %v1295 = vand.u32 %v1114, 2147483648
        %v1296 = vor.u32 1.1754944e-38, %v1295
        %v1297 = vsel %vm1294, %v1296, %v1292
        %v1298 = vmul.f32 %v911, %v1297
        %v1299 = vrcp.pop %v1115
        %v1300 = vmul.f32 %v1115, %v1299
        %v1301 = vsub.f32 1.0, %v1300
        %v1302 = vmul.f32 %v1299, %v1301
        %v1303 = vadd.f32 %v1299, %v1302
        %vm1304 = vweird.f32 %v1115
        %vm1305 = vweird.f32 %v1299
        %vm1306 = vmor %vm1304, %vm1305
        %v1307 = vsel %vm1306, %v1299, %v1303
        %v1308 = vand.u32 2147483647, %v1115
        %vm1309 = vcmp.eq.f32.partialorder %v1308, 8.507059e+37
        %v1310 = vand.u32 %v1115, 2147483648
        %v1311 = vor.u32 1.1754944e-38, %v1310
        %v1312 = vsel %vm1309, %v1311, %v1307
        %v1313 = vmul.f32 %v914, %v1312
        %v1314 = vrcp.pop %v1116
        %v1315 = vmul.f32 %v1116, %v1314
        %v1316 = vsub.f32 1.0, %v1315
        %v1317 = vmul.f32 %v1314, %v1316
        %v1318 = vadd.f32 %v1314, %v1317
        %vm1319 = vweird.f32 %v1116
        %vm1320 = vweird.f32 %v1314
        %vm1321 = vmor %vm1319, %vm1320
        %v1322 = vsel %vm1321, %v1314, %v1318
        %v1323 = vand.u32 2147483647, %v1116
        %vm1324 = vcmp.eq.f32.partialorder %v1323, 8.507059e+37
        %v1325 = vand.u32 %v1116, 2147483648
        %v1326 = vor.u32 1.1754944e-38, %v1325
        %v1327 = vsel %vm1324, %v1326, %v1322
        %v1328 = vmul.f32 %v917, %v1327
        %v1329 = vrcp.pop %v1117
        %v1330 = vmul.f32 %v1117, %v1329
        %v1331 = vsub.f32 1.0, %v1330
        %v1332 = vmul.f32 %v1329, %v1331
        %v1333 = vadd.f32 %v1329, %v1332
        %vm1334 = vweird.f32 %v1117
        %vm1335 = vweird.f32 %v1329
        %vm1336 = vmor %vm1334, %vm1335
        %v1337 = vsel %vm1336, %v1329, %v1333
        %v1338 = vand.u32 2147483647, %v1117
        %vm1339 = vcmp.eq.f32.partialorder %v1338, 8.507059e+37
        %v1340 = vand.u32 %v1117, 2147483648
        %v1341 = vor.u32 1.1754944e-38, %v1340
        %v1342 = vsel %vm1339, %v1341, %v1337
        %v1343 = vmul.f32 %v920, %v1342
        %v1344 = vrcp.pop %v1118
        %v1345 = vmul.f32 %v1118, %v1344
        %v1346 = vsub.f32 1.0, %v1345
        %v1347 = vmul.f32 %v1344, %v1346
        %v1348 = vadd.f32 %v1344, %v1347
        %vm1349 = vweird.f32 %v1118
        %vm1350 = vweird.f32 %v1344
        %vm1351 = vmor %vm1349, %vm1350
        %v1352 = vsel %vm1351, %v1344, %v1348
        %v1353 = vand.u32 2147483647, %v1118
        %vm1354 = vcmp.eq.f32.partialorder %v1353, 8.507059e+37
        %v1355 = vand.u32 %v1118, 2147483648
        %v1356 = vor.u32 1.1754944e-38, %v1355
        %v1357 = vsel %vm1354, %v1356, %v1352
        %v1358 = vmul.f32 %v923, %v1357
        %vm1359 = vcmask 261120
        %v1360 = vsel %vm1359, %v1133, 0.0
        %1361 = vadd.xlane.f32.xlu0 %v1360
        %v1362 = vpop.xlane.xlu0 %1361
        %v1363 = vsel %vm1359, %v1148, 0.0
        %1364 = vadd.xlane.f32.xlu0 %v1363
        %v1365 = vpop.xlane.xlu0 %1364
        %v1366 = vsel %vm1359, %v1163, 0.0
        %1367 = vadd.xlane.f32.xlu0 %v1366
        %v1368 = vpop.xlane.xlu0 %1367
        %v1369 = vsel %vm1359, %v1178, 0.0
        %1370 = vadd.xlane.f32.xlu0 %v1369
        %v1371 = vpop.xlane.xlu0 %1370
        %v1372 = vsel %vm1359, %v1193, 0.0
        %1373 = vadd.xlane.f32.xlu0 %v1372
        %v1374 = vpop.xlane.xlu0 %1373
        %v1375 = vsel %vm1359, %v1208, 0.0
        %1376 = vadd.xlane.f32.xlu0 %v1375
        %v1377 = vpop.xlane.xlu0 %1376
        %v1378 = vsel %vm1359, %v1223, 0.0
        %1379 = vadd.xlane.f32.xlu0 %v1378
        %v1380 = vpop.xlane.xlu0 %1379
        %v1381 = vsel %vm1359, %v1238, 0.0
        %1382 = vadd.xlane.f32.xlu0 %v1381
        %v1383 = vpop.xlane.xlu0 %1382
        %v1384 = vsel %vm1359, %v1253, 0.0
        %1385 = vadd.xlane.f32.xlu0 %v1384
        %v1386 = vpop.xlane.xlu0 %1385
        %v1387 = vsel %vm1359, %v1268, 0.0
        %1388 = vadd.xlane.f32.xlu0 %v1387
        %v1389 = vpop.xlane.xlu0 %1388
        %v1390 = vsel %vm1359, %v1283, 0.0
        %1391 = vadd.xlane.f32.xlu0 %v1390
        %v1392 = vpop.xlane.xlu0 %1391
        %v1393 = vsel %vm1359, %v1298, 0.0
        %1394 = vadd.xlane.f32.xlu0 %v1393
        %v1395 = vpop.xlane.xlu0 %1394
        %v1396 = vsel %vm1359, %v1313, 0.0
        %1397 = vadd.xlane.f32.xlu0 %v1396
        %v1398 = vpop.xlane.xlu0 %1397
        %v1399 = vsel %vm1359, %v1328, 0.0
        %1400 = vadd.xlane.f32.xlu0 %v1399
        %v1401 = vpop.xlane.xlu0 %1400
        %v1402 = vsel %vm1359, %v1343, 0.0
        %1403 = vadd.xlane.f32.xlu0 %v1402
        %v1404 = vpop.xlane.xlu0 %1403
        %v1405 = vsel %vm1359, %v1358, 0.0
        %1406 = vadd.xlane.f32.xlu0 %v1405
        %v1407 = vpop.xlane.xlu0 %1406
        %v1408 = vrcp.pop 32.0
        %v1409 = vmul.f32 32.0, %v1408
        %v1410 = vsub.f32 1.0, %v1409
        %v1411 = vmul.f32 %v1408, %v1410
        %v1412 = vadd.f32 %v1408, %v1411
        %vm1413 = vweird.f32 %v1408
        %v1414 = vsel %vm1413, %v1408, %v1412
        %v1415 = vmul.f32 %v1362, %v1414
        %v1416 = vmul.f32 %v1365, %v1414
        %v1417 = vmul.f32 %v1368, %v1414
        %v1418 = vmul.f32 %v1371, %v1414
        %v1419 = vmul.f32 %v1374, %v1414
        %v1420 = vmul.f32 %v1377, %v1414
        %v1421 = vmul.f32 %v1380, %v1414
        %v1422 = vmul.f32 %v1383, %v1414
        %v1423 = vmul.f32 %v1386, %v1414
        %v1424 = vmul.f32 %v1389, %v1414
        %v1425 = vmul.f32 %v1392, %v1414
        %v1426 = vmul.f32 %v1395, %v1414
        %v1427 = vmul.f32 %v1398, %v1414
        %v1428 = vmul.f32 %v1401, %v1414
        %v1429 = vmul.f32 %v1404, %v1414
        %v1430 = vmul.f32 %v1407, %v1414
        %v1431 = vsub.f32 %v1133, %v1415
        %v1432 = vsub.f32 %v1148, %v1416
        %v1433 = vsub.f32 %v1163, %v1417
        %v1434 = vsub.f32 %v1178, %v1418
        %v1435 = vsub.f32 %v1193, %v1419
        %v1436 = vsub.f32 %v1208, %v1420
        %v1437 = vsub.f32 %v1223, %v1421
        %v1438 = vsub.f32 %v1238, %v1422
        %v1439 = vsub.f32 %v1253, %v1423
        %v1440 = vsub.f32 %v1268, %v1424
        %v1441 = vsub.f32 %v1283, %v1425
        %v1442 = vsub.f32 %v1298, %v1426
        %v1443 = vsub.f32 %v1313, %v1427
        %v1444 = vsub.f32 %v1328, %v1428
        %v1445 = vsub.f32 %v1343, %v1429
        %v1446 = vsub.f32 %v1358, %v1430
        %v1447 = vmul.f32 %v1431, %v1431
        %v1448 = vmul.f32 %v1432, %v1432
        %v1449 = vmul.f32 %v1433, %v1433
        %v1450 = vmul.f32 %v1434, %v1434
        %v1451 = vmul.f32 %v1435, %v1435
        %v1452 = vmul.f32 %v1436, %v1436
        %v1453 = vmul.f32 %v1437, %v1437
        %v1454 = vmul.f32 %v1438, %v1438
        %v1455 = vmul.f32 %v1439, %v1439
        %v1456 = vmul.f32 %v1440, %v1440
        %v1457 = vmul.f32 %v1441, %v1441
        %v1458 = vmul.f32 %v1442, %v1442
        %v1459 = vmul.f32 %v1443, %v1443
        %v1460 = vmul.f32 %v1444, %v1444
        %v1461 = vmul.f32 %v1445, %v1445
        %v1462 = vmul.f32 %v1446, %v1446
        %v1463 = vsel %vm1359, %v1447, 0.0
        %1464 = vadd.xlane.f32.xlu0 %v1463
        %v1465 = vpop.xlane.xlu0 %1464
        %v1466 = vsel %vm1359, %v1448, 0.0
        %1467 = vadd.xlane.f32.xlu0 %v1466
        %v1468 = vpop.xlane.xlu0 %1467
        %v1469 = vsel %vm1359, %v1449, 0.0
        %1470 = vadd.xlane.f32.xlu0 %v1469
        %v1471 = vpop.xlane.xlu0 %1470
        %v1472 = vsel %vm1359, %v1450, 0.0
        %1473 = vadd.xlane.f32.xlu0 %v1472
        %v1474 = vpop.xlane.xlu0 %1473
        %v1475 = vsel %vm1359, %v1451, 0.0
        %1476 = vadd.xlane.f32.xlu0 %v1475
        %v1477 = vpop.xlane.xlu0 %1476
        %v1478 = vsel %vm1359, %v1452, 0.0
        %1479 = vadd.xlane.f32.xlu0 %v1478
        %v1480 = vpop.xlane.xlu0 %1479
        %v1481 = vsel %vm1359, %v1453, 0.0
        %1482 = vadd.xlane.f32.xlu0 %v1481
        %v1483 = vpop.xlane.xlu0 %1482
        %v1484 = vsel %vm1359, %v1454, 0.0
        %1485 = vadd.xlane.f32.xlu0 %v1484
        %v1486 = vpop.xlane.xlu0 %1485
        %v1487 = vsel %vm1359, %v1455, 0.0
        %1488 = vadd.xlane.f32.xlu0 %v1487
        %v1489 = vpop.xlane.xlu0 %1488
        %v1490 = vsel %vm1359, %v1456, 0.0
        %1491 = vadd.xlane.f32.xlu0 %v1490
        %v1492 = vpop.xlane.xlu0 %1491
        %v1493 = vsel %vm1359, %v1457, 0.0
        %1494 = vadd.xlane.f32.xlu0 %v1493
        %v1495 = vpop.xlane.xlu0 %1494
        %v1496 = vsel %vm1359, %v1458, 0.0
        %1497 = vadd.xlane.f32.xlu0 %v1496
        %v1498 = vpop.xlane.xlu0 %1497
        %v1499 = vsel %vm1359, %v1459, 0.0
        %1500 = vadd.xlane.f32.xlu0 %v1499
        %v1501 = vpop.xlane.xlu0 %1500
        %v1502 = vsel %vm1359, %v1460, 0.0
        %1503 = vadd.xlane.f32.xlu0 %v1502
        %v1504 = vpop.xlane.xlu0 %1503
        %v1505 = vsel %vm1359, %v1461, 0.0
        %1506 = vadd.xlane.f32.xlu0 %v1505
        %v1507 = vpop.xlane.xlu0 %1506
        %v1508 = vsel %vm1359, %v1462, 0.0
        %1509 = vadd.xlane.f32.xlu0 %v1508
        %v1510 = vpop.xlane.xlu0 %1509
        %v1511 = vmul.f32 %v1465, %v1414
        %v1512 = vmul.f32 %v1468, %v1414
        %v1513 = vmul.f32 %v1471, %v1414
        %v1514 = vmul.f32 %v1474, %v1414
        %v1515 = vmul.f32 %v1477, %v1414
        %v1516 = vmul.f32 %v1480, %v1414
        %v1517 = vmul.f32 %v1483, %v1414
        %v1518 = vmul.f32 %v1486, %v1414
        %v1519 = vmul.f32 %v1489, %v1414
        %v1520 = vmul.f32 %v1492, %v1414
        %v1521 = vmul.f32 %v1495, %v1414
        %v1522 = vmul.f32 %v1498, %v1414
        %v1523 = vmul.f32 %v1501, %v1414
        %v1524 = vmul.f32 %v1504, %v1414
        %v1525 = vmul.f32 %v1507, %v1414
        %v1526 = vmul.f32 %v1510, %v1414
        %v1527 = vadd.f32 %v1511, 1e-05
        %v1528 = vadd.f32 %v1512, 1e-05
        %v1529 = vadd.f32 %v1513, 1e-05
        %v1530 = vadd.f32 %v1514, 1e-05
        %v1531 = vadd.f32 %v1515, 1e-05
        %v1532 = vadd.f32 %v1516, 1e-05
        %v1533 = vadd.f32 %v1517, 1e-05
        %v1534 = vadd.f32 %v1518, 1e-05
        %v1535 = vadd.f32 %v1519, 1e-05
        %v1536 = vadd.f32 %v1520, 1e-05
        %v1537 = vadd.f32 %v1521, 1e-05
        %v1538 = vadd.f32 %v1522, 1e-05
        %v1539 = vadd.f32 %v1523, 1e-05
        %v1540 = vadd.f32 %v1524, 1e-05
        %v1541 = vadd.f32 %v1525, 1e-05
        %v1542 = vadd.f32 %v1526, 1e-05
        %v1543 = vrsqrt.pop %v1527
        %v1544 = vmul.f32 %v1543, %v1527
        %v1545 = vmul.f32 %v1544, %v1543
        %v1546 = vmul.f32 0.5, %v1545
        %v1547 = vsub.f32 1.5, %v1546
        %v1548 = vmul.f32 %v1543, %v1547
        %vm1549 = vweird.f32 %v1527
        %vm1550 = vweird.f32 %v1543
        %vm1551 = vmor %vm1549, %vm1550
        %v1552 = vsel %vm1551, %v1543, %v1548
        %v1553 = vrsqrt.pop %v1528
        %v1554 = vmul.f32 %v1553, %v1528
        %v1555 = vmul.f32 %v1554, %v1553
        %v1556 = vmul.f32 0.5, %v1555
        %v1557 = vsub.f32 1.5, %v1556
        %v1558 = vmul.f32 %v1553, %v1557
        %vm1559 = vweird.f32 %v1528
        %vm1560 = vweird.f32 %v1553
        %vm1561 = vmor %vm1559, %vm1560
        %v1562 = vsel %vm1561, %v1553, %v1558
        %v1563 = vrsqrt.pop %v1529
        %v1564 = vmul.f32 %v1563, %v1529
        %v1565 = vmul.f32 %v1564, %v1563
        %v1566 = vmul.f32 0.5, %v1565
        %v1567 = vsub.f32 1.5, %v1566
        %v1568 = vmul.f32 %v1563, %v1567
        %vm1569 = vweird.f32 %v1529
        %vm1570 = vweird.f32 %v1563
        %vm1571 = vmor %vm1569, %vm1570
        %v1572 = vsel %vm1571, %v1563, %v1568
        %v1573 = vrsqrt.pop %v1530
        %v1574 = vmul.f32 %v1573, %v1530
        %v1575 = vmul.f32 %v1574, %v1573
        %v1576 = vmul.f32 0.5, %v1575
        %v1577 = vsub.f32 1.5, %v1576
        %v1578 = vmul.f32 %v1573, %v1577
        %vm1579 = vweird.f32 %v1530
        %vm1580 = vweird.f32 %v1573
        %vm1581 = vmor %vm1579, %vm1580
        %v1582 = vsel %vm1581, %v1573, %v1578
        %v1583 = vrsqrt.pop %v1531
        %v1584 = vmul.f32 %v1583, %v1531
        %v1585 = vmul.f32 %v1584, %v1583
        %v1586 = vmul.f32 0.5, %v1585
        %v1587 = vsub.f32 1.5, %v1586
        %v1588 = vmul.f32 %v1583, %v1587
        %vm1589 = vweird.f32 %v1531
        %vm1590 = vweird.f32 %v1583
        %vm1591 = vmor %vm1589, %vm1590
        %v1592 = vsel %vm1591, %v1583, %v1588
        %v1593 = vrsqrt.pop %v1532
        %v1594 = vmul.f32 %v1593, %v1532
        %v1595 = vmul.f32 %v1594, %v1593
        %v1596 = vmul.f32 0.5, %v1595
        %v1597 = vsub.f32 1.5, %v1596
        %v1598 = vmul.f32 %v1593, %v1597
        %vm1599 = vweird.f32 %v1532
        %vm1600 = vweird.f32 %v1593
        %vm1601 = vmor %vm1599, %vm1600
        %v1602 = vsel %vm1601, %v1593, %v1598
        %v1603 = vrsqrt.pop %v1533
        %v1604 = vmul.f32 %v1603, %v1533
        %v1605 = vmul.f32 %v1604, %v1603
        %v1606 = vmul.f32 0.5, %v1605
        %v1607 = vsub.f32 1.5, %v1606
        %v1608 = vmul.f32 %v1603, %v1607
        %vm1609 = vweird.f32 %v1533
        %vm1610 = vweird.f32 %v1603
        %vm1611 = vmor %vm1609, %vm1610
        %v1612 = vsel %vm1611, %v1603, %v1608
        %v1613 = vrsqrt.pop %v1534
        %v1614 = vmul.f32 %v1613, %v1534
        %v1615 = vmul.f32 %v1614, %v1613
        %v1616 = vmul.f32 0.5, %v1615
        %v1617 = vsub.f32 1.5, %v1616
        %v1618 = vmul.f32 %v1613, %v1617
        %vm1619 = vweird.f32 %v1534
        %vm1620 = vweird.f32 %v1613
        %vm1621 = vmor %vm1619, %vm1620
        %v1622 = vsel %vm1621, %v1613, %v1618
        %v1623 = vrsqrt.pop %v1535
        %v1624 = vmul.f32 %v1623, %v1535
        %v1625 = vmul.f32 %v1624, %v1623
        %v1626 = vmul.f32 0.5, %v1625
        %v1627 = vsub.f32 1.5, %v1626
        %v1628 = vmul.f32 %v1623, %v1627
        %vm1629 = vweird.f32 %v1535
        %vm1630 = vweird.f32 %v1623
        %vm1631 = vmor %vm1629, %vm1630
        %v1632 = vsel %vm1631, %v1623, %v1628
        %v1633 = vrsqrt.pop %v1536
        %v1634 = vmul.f32 %v1633, %v1536
        %v1635 = vmul.f32 %v1634, %v1633
        %v1636 = vmul.f32 0.5, %v1635
        %v1637 = vsub.f32 1.5, %v1636
        %v1638 = vmul.f32 %v1633, %v1637
        %vm1639 = vweird.f32 %v1536
        %vm1640 = vweird.f32 %v1633
        %vm1641 = vmor %vm1639, %vm1640
        %v1642 = vsel %vm1641, %v1633, %v1638
        %v1643 = vrsqrt.pop %v1537
        %v1644 = vmul.f32 %v1643, %v1537
        %v1645 = vmul.f32 %v1644, %v1643
        %v1646 = vmul.f32 0.5, %v1645
        %v1647 = vsub.f32 1.5, %v1646
        %v1648 = vmul.f32 %v1643, %v1647
        %vm1649 = vweird.f32 %v1537
        %vm1650 = vweird.f32 %v1643
        %vm1651 = vmor %vm1649, %vm1650
        %v1652 = vsel %vm1651, %v1643, %v1648
        %v1653 = vrsqrt.pop %v1538
        %v1654 = vmul.f32 %v1653, %v1538
        %v1655 = vmul.f32 %v1654, %v1653
        %v1656 = vmul.f32 0.5, %v1655
        %v1657 = vsub.f32 1.5, %v1656
        %v1658 = vmul.f32 %v1653, %v1657
        %vm1659 = vweird.f32 %v1538
        %vm1660 = vweird.f32 %v1653
        %vm1661 = vmor %vm1659, %vm1660
        %v1662 = vsel %vm1661, %v1653, %v1658
        %v1663 = vrsqrt.pop %v1539
        %v1664 = vmul.f32 %v1663, %v1539
        %v1665 = vmul.f32 %v1664, %v1663
        %v1666 = vmul.f32 0.5, %v1665
        %v1667 = vsub.f32 1.5, %v1666
        %v1668 = vmul.f32 %v1663, %v1667
        %vm1669 = vweird.f32 %v1539
        %vm1670 = vweird.f32 %v1663
        %vm1671 = vmor %vm1669, %vm1670
        %v1672 = vsel %vm1671, %v1663, %v1668
        %v1673 = vrsqrt.pop %v1540
        %v1674 = vmul.f32 %v1673, %v1540
        %v1675 = vmul.f32 %v1674, %v1673
        %v1676 = vmul.f32 0.5, %v1675
        %v1677 = vsub.f32 1.5, %v1676
        %v1678 = vmul.f32 %v1673, %v1677
        %vm1679 = vweird.f32 %v1540
        %vm1680 = vweird.f32 %v1673
        %vm1681 = vmor %vm1679, %vm1680
        %v1682 = vsel %vm1681, %v1673, %v1678
        %v1683 = vrsqrt.pop %v1541
        %v1684 = vmul.f32 %v1683, %v1541
        %v1685 = vmul.f32 %v1684, %v1683
        %v1686 = vmul.f32 0.5, %v1685
        %v1687 = vsub.f32 1.5, %v1686
        %v1688 = vmul.f32 %v1683, %v1687
        %vm1689 = vweird.f32 %v1541
        %vm1690 = vweird.f32 %v1683
        %vm1691 = vmor %vm1689, %vm1690
        %v1692 = vsel %vm1691, %v1683, %v1688
        %v1693 = vrsqrt.pop %v1542
        %v1694 = vmul.f32 %v1693, %v1542
        %v1695 = vmul.f32 %v1694, %v1693
        %v1696 = vmul.f32 0.5, %v1695
        %v1697 = vsub.f32 1.5, %v1696
        %v1698 = vmul.f32 %v1693, %v1697
        %vm1699 = vweird.f32 %v1542
        %vm1700 = vweird.f32 %v1693
        %vm1701 = vmor %vm1699, %vm1700
        %v1702 = vsel %vm1701, %v1693, %v1698
        %v1703 = vmul.f32 %v1431, %v1552
        %v1704 = vmul.f32 %v1432, %v1562
        %v1705 = vmul.f32 %v1433, %v1572
        %v1706 = vmul.f32 %v1434, %v1582
        %v1707 = vmul.f32 %v1435, %v1592
        %v1708 = vmul.f32 %v1436, %v1602
        %v1709 = vmul.f32 %v1437, %v1612
        %v1710 = vmul.f32 %v1438, %v1622
        %v1711 = vmul.f32 %v1439, %v1632
        %v1712 = vmul.f32 %v1440, %v1642
        %v1713 = vmul.f32 %v1441, %v1652
        %v1714 = vmul.f32 %v1442, %v1662
        %v1715 = vmul.f32 %v1443, %v1672
        %v1716 = vmul.f32 %v1444, %v1682
        %v1717 = vmul.f32 %v1445, %v1692
        %v1718 = vmul.f32 %v1446, %v1702
        %vm1719 = vcmask 39936
        %v1721 = vsel %vm1719, %v967, 0
        %v1724 = vsel %vm1719, %v970, 0
        %v1727 = vsel %vm1719, %v973, 0
        %v1730 = vsel %vm1719, %v976, 0
        %v1733 = vsel %vm1719, %v979, 0
        %v1736 = vsel %vm1719, %v982, 0
        %v1739 = vsel %vm1719, %v985, 0
        %v1742 = vsel %vm1719, %v988, 0
        %v1745 = vsel %vm1719, %v1032, 0
        %v1748 = vsel %vm1719, %v1035, 0
        %v1751 = vsel %vm1719, %v1038, 0
        %v1754 = vsel %vm1719, %v1041, 0
        %v1757 = vsel %vm1719, %v1044, 0
        %v1760 = vsel %vm1719, %v1047, 0
        %v1763 = vsel %vm1719, %v1050, 0
        %v1766 = vsel %vm1719, %v1053, 0
        %vm1768 = vcmask 1044480
        %v1770 = vsel %vm1768, %v746, 0
        %1772 = vmatpush.msra.mxu0 0.0
        %1773 = vmatpush.msra.mxu0 0.0
        %1774 = vmatpush.msra.mxu0 0.0
        %1775 = vmatpush.msra.mxu0 0.0
        %1776 = vmatpush.msra.mxu0 0.0
        %1777 = vmatpush.msra.mxu0 0.0
        %1778 = vmatpush.msra.mxu0 0.0
        %1779 = vmatpush.msra.mxu0 0.0
        %1780 = vmatpush.msra.mxu0 0.0
        %1781 = vmatpush.msra.mxu0 0.0
        %1782 = vmatpush.msra.mxu0 0.0
        %1783 = vmatpush.msra.mxu0 0.0
        %1784 = vmatpush.msra.mxu0 0.0
        %1785 = vmatpush.msra.mxu0 0.0
        %1786 = vmatpush.msra.mxu0 0.0
        %1787 = vmatpush.msra.mxu0 %v1770
        %1788 = vmatmul.f32.gmra.mxu0 %v1721
        %v1789 = vpop.f32.mrf.mxu0
        %v1790 = vadd.f32 0.0, %v1789
        %1791 = vmatmul.f32.gmra.mxu0 %v1724
        %v1792 = vpop.f32.mrf.mxu0
        %v1793 = vadd.f32 0.0, %v1792
        %1794 = vmatmul.f32.gmra.mxu0 %v1727
        %v1795 = vpop.f32.mrf.mxu0
        %v1796 = vadd.f32 0.0, %v1795
        %1797 = vmatmul.f32.gmra.mxu0 %v1730
        %v1798 = vpop.f32.mrf.mxu0
        %v1799 = vadd.f32 0.0, %v1798
        %1800 = vmatmul.f32.gmra.mxu0 %v1733
        %v1801 = vpop.f32.mrf.mxu0
        %v1802 = vadd.f32 0.0, %v1801
        %1803 = vmatmul.f32.gmra.mxu0 %v1736
        %v1804 = vpop.f32.mrf.mxu0
        %v1805 = vadd.f32 0.0, %v1804
        %1806 = vmatmul.f32.gmra.mxu0 %v1739
        %v1807 = vpop.f32.mrf.mxu0
        %v1808 = vadd.f32 0.0, %v1807
        %1809 = vmatmul.f32.gmra.mxu0 %v1742
        %v1810 = vpop.f32.mrf.mxu0
        %v1811 = vadd.f32 0.0, %v1810
        %1812 = vmatmul.f32.gmra.mxu0 %v1745
        %v1813 = vpop.f32.mrf.mxu0
        %v1814 = vadd.f32 0.0, %v1813
        %1815 = vmatmul.f32.gmra.mxu0 %v1748
        %v1816 = vpop.f32.mrf.mxu0
        %v1817 = vadd.f32 0.0, %v1816
        %1818 = vmatmul.f32.gmra.mxu0 %v1751
        %v1819 = vpop.f32.mrf.mxu0
        %v1820 = vadd.f32 0.0, %v1819
        %1821 = vmatmul.f32.gmra.mxu0 %v1754
        %v1822 = vpop.f32.mrf.mxu0
        %v1823 = vadd.f32 0.0, %v1822
        %1824 = vmatmul.f32.gmra.mxu0 %v1757
        %v1825 = vpop.f32.mrf.mxu0
        %v1826 = vadd.f32 0.0, %v1825
        %1827 = vmatmul.f32.gmra.mxu0 %v1760
        %v1828 = vpop.f32.mrf.mxu0
        %v1829 = vadd.f32 0.0, %v1828
        %1830 = vmatmul.f32.gmra.mxu0 %v1763
        %v1831 = vpop.f32.mrf.mxu0
        %v1832 = vadd.f32 0.0, %v1831
        %1833 = vmatmul.f32.gmra.mxu0 %v1766
        %v1834 = vpop.f32.mrf.mxu0
        %v1835 = vadd.f32 0.0, %v1834
        %1836 = vdwg.mxu0
        %v1837 = vperm.slane %v747, 0
        %vm1838 = vcmp.le.f32.partialorder %v1837, %v1790
        %vm1839 = vcmp.le.f32.partialorder %v1837, %v1793
        %vm1840 = vcmp.le.f32.partialorder %v1837, %v1796
        %vm1841 = vcmp.le.f32.partialorder %v1837, %v1799
        %vm1842 = vcmp.le.f32.partialorder %v1837, %v1802
        %vm1843 = vcmp.le.f32.partialorder %v1837, %v1805
        %vm1844 = vcmp.le.f32.partialorder %v1837, %v1808
        %vm1845 = vcmp.le.f32.partialorder %v1837, %v1811
        %vm1846 = vcmp.le.f32.partialorder %v1837, %v1814
        %vm1847 = vcmp.le.f32.partialorder %v1837, %v1817
        %vm1848 = vcmp.le.f32.partialorder %v1837, %v1820
        %vm1849 = vcmp.le.f32.partialorder %v1837, %v1823
        %vm1850 = vcmp.le.f32.partialorder %v1837, %v1826
        %vm1851 = vcmp.le.f32.partialorder %v1837, %v1829
        %vm1852 = vcmp.le.f32.partialorder %v1837, %v1832
        %vm1853 = vcmp.le.f32.partialorder %v1837, %v1835
        %v1854 = vsel %vm1838, 1, 0
        %v1855 = vsel %vm1839, 1, 0
        %v1856 = vsel %vm1840, 1, 0
        %v1857 = vsel %vm1841, 1, 0
        %v1858 = vsel %vm1842, 1, 0
        %v1859 = vsel %vm1843, 1, 0
        %v1860 = vsel %vm1844, 1, 0
        %v1861 = vsel %vm1845, 1, 0
        %v1862 = vsel %vm1846, 1, 0
        %v1863 = vsel %vm1847, 1, 0
        %v1864 = vsel %vm1848, 1, 0
        %v1865 = vsel %vm1849, 1, 0
        %v1866 = vsel %vm1850, 1, 0
        %v1867 = vsel %vm1851, 1, 0
        %v1868 = vsel %vm1852, 1, 0
        %v1869 = vsel %vm1853, 1, 0
        %v1870 = vcvt.s32.f32 %v1854
        %v1871 = vcvt.s32.f32 %v1855
        %v1872 = vcvt.s32.f32 %v1856
        %v1873 = vcvt.s32.f32 %v1857
        %v1874 = vcvt.s32.f32 %v1858
        %v1875 = vcvt.s32.f32 %v1859
        %v1876 = vcvt.s32.f32 %v1860
        %v1877 = vcvt.s32.f32 %v1861
        %v1878 = vcvt.s32.f32 %v1862
        %v1879 = vcvt.s32.f32 %v1863
        %v1880 = vcvt.s32.f32 %v1864
        %v1881 = vcvt.s32.f32 %v1865
        %v1882 = vcvt.s32.f32 %v1866
        %v1883 = vcvt.s32.f32 %v1867
        %v1884 = vcvt.s32.f32 %v1868
        %v1885 = vcvt.s32.f32 %v1869
        %v1886 = vld [vmem:[%s8] sm:$0xff]
        %v1887 = vld [vmem:[%s8 + $0x8] sm:$0xff]
        %v1888 = vld [vmem:[%s8 + $0x10] sm:$0xff]
        %v1889 = vld [vmem:[%s8 + $0x18] sm:$0xff]
        %v1890 = vld [vmem:[%s8 + $0x20] sm:$0xff]
        %v1891 = vld [vmem:[%s8 + $0x28] sm:$0xff]
        %v1892 = vld [vmem:[%s8 + $0x30] sm:$0xff]
        %v1893 = vld [vmem:[%s8 + $0x38] sm:$0xff]
        %v1894 = vld [vmem:[%s8 + $0x40] sm:$0xff]
        %v1895 = vld [vmem:[%s8 + $0x48] sm:$0xff]
        %v1896 = vld [vmem:[%s8 + $0x50] sm:$0xff]
        %v1897 = vld [vmem:[%s8 + $0x58] sm:$0xff]
        %v1898 = vld [vmem:[%s8 + $0x60] sm:$0xff]
        %v1899 = vld [vmem:[%s8 + $0x68] sm:$0xff]
        %v1900 = vld [vmem:[%s8 + $0x70] sm:$0xff]
        %v1901 = vld [vmem:[%s8 + $0x78] sm:$0xff]
        %v1902 = vld [vmem:[%s9] sm:$0xff]
        %v1903 = vld [vmem:[%s9 + $0x8] sm:$0xff]
        %v1904 = vld [vmem:[%s9 + $0x10] sm:$0xff]
        %v1905 = vld [vmem:[%s9 + $0x18] sm:$0xff]
        %v1907 = vsel %vm1359, %v1703, 0
        %v1910 = vsel %vm1359, %v1704, 0
        %v1913 = vsel %vm1359, %v1705, 0
        %v1916 = vsel %vm1359, %v1706, 0
        %v1919 = vsel %vm1359, %v1707, 0
        %v1922 = vsel %vm1359, %v1708, 0
        %v1925 = vsel %vm1359, %v1709, 0
        %v1928 = vsel %vm1359, %v1710, 0
        %v1931 = vsel %vm1359, %v1711, 0
        %v1934 = vsel %vm1359, %v1712, 0
        %v1937 = vsel %vm1359, %v1713, 0
        %v1940 = vsel %vm1359, %v1714, 0
        %v1943 = vsel %vm1359, %v1715, 0
        %v1946 = vsel %vm1359, %v1716, 0
        %v1949 = vsel %vm1359, %v1717, 0
        %v1952 = vsel %vm1359, %v1718, 0
        %1954 = vmatpush.msra.mxu0 0.0
        %1955 = vmatpush.msra.mxu0 0.0
        %1956 = vmatpush.msra.mxu0 0.0
        %1957 = vmatpush.msra.mxu0 0.0
        %1958 = vmatpush.msra.mxu0 0.0
        %1959 = vmatpush.msra.mxu0 0.0
        %1960 = vmatpush.msra.mxu0 0.0
        %1961 = vmatpush.msra.mxu0 0.0
        %1962 = vmatpush.msra.mxu0 0.0
        %1963 = vmatpush.msra.mxu0 0.0
        %1964 = vmatpush.msra.mxu0 0.0
        %1965 = vmatpush.msra.mxu0 0.0
        %1966 = vmatpush.msra.mxu0 %v1905
        %1967 = vmatpush.msra.mxu0 %v1904
        %1968 = vmatpush.msra.mxu0 %v1903
        %1969 = vmatpush.msra.mxu0 %v1902
        %1970 = vmatmul.f32.gmra.mxu0 %v1907
        %v1971 = vpop.f32.mrf.mxu0
        %v1972 = vadd.f32 0.0, %v1971
        %1973 = vmatmul.f32.gmra.mxu0 %v1910
        %v1974 = vpop.f32.mrf.mxu0
        %v1975 = vadd.f32 0.0, %v1974
        %1976 = vmatmul.f32.gmra.mxu0 %v1913
        %v1977 = vpop.f32.mrf.mxu0
        %v1978 = vadd.f32 0.0, %v1977
        %1979 = vmatmul.f32.gmra.mxu0 %v1916
        %v1980 = vpop.f32.mrf.mxu0
        %v1981 = vadd.f32 0.0, %v1980
        %1982 = vmatmul.f32.gmra.mxu0 %v1919
        %v1983 = vpop.f32.mrf.mxu0
        %v1984 = vadd.f32 0.0, %v1983
        %1985 = vmatmul.f32.gmra.mxu0 %v1922
        %v1986 = vpop.f32.mrf.mxu0
        %v1987 = vadd.f32 0.0, %v1986
        %1988 = vmatmul.f32.gmra.mxu0 %v1925
        %v1989 = vpop.f32.mrf.mxu0
        %v1990 = vadd.f32 0.0, %v1989
        %1991 = vmatmul.f32.gmra.mxu0 %v1928
        %v1992 = vpop.f32.mrf.mxu0
        %v1993 = vadd.f32 0.0, %v1992
        %1994 = vmatmul.f32.gmra.mxu0 %v1931
        %v1995 = vpop.f32.mrf.mxu0
        %v1996 = vadd.f32 0.0, %v1995
        %1997 = vmatmul.f32.gmra.mxu0 %v1934
        %v1998 = vpop.f32.mrf.mxu0
        %v1999 = vadd.f32 0.0, %v1998
        %2000 = vmatmul.f32.gmra.mxu0 %v1937
        %v2001 = vpop.f32.mrf.mxu0
        %v2002 = vadd.f32 0.0, %v2001
        %2003 = vmatmul.f32.gmra.mxu0 %v1940
        %v2004 = vpop.f32.mrf.mxu0
        %v2005 = vadd.f32 0.0, %v2004
        %2006 = vmatmul.f32.gmra.mxu0 %v1943
        %v2007 = vpop.f32.mrf.mxu0
        %v2008 = vadd.f32 0.0, %v2007
        %2009 = vmatmul.f32.gmra.mxu0 %v1946
        %v2010 = vpop.f32.mrf.mxu0
        %v2011 = vadd.f32 0.0, %v2010
        %2012 = vmatmul.f32.gmra.mxu0 %v1949
        %v2013 = vpop.f32.mrf.mxu0
        %v2014 = vadd.f32 0.0, %v2013
        %2015 = vmatmul.f32.gmra.mxu0 %v1952
        %v2016 = vpop.f32.mrf.mxu0
        %v2017 = vadd.f32 0.0, %v2016
        %2018 = vdwg.mxu0
        %2019 = vmatpush.msra.mxu0 %v1901
        %2020 = vmatpush.msra.mxu0 %v1900
        %2021 = vmatpush.msra.mxu0 %v1899
        %2022 = vmatpush.msra.mxu0 %v1898
        %2023 = vmatpush.msra.mxu0 %v1897
        %2024 = vmatpush.msra.mxu0 %v1896
        %2025 = vmatpush.msra.mxu0 %v1895
        %2026 = vmatpush.msra.mxu0 %v1894
        %2027 = vmatpush.msra.mxu0 %v1893
        %2028 = vmatpush.msra.mxu0 %v1892
        %2029 = vmatpush.msra.mxu0 %v1891
        %2030 = vmatpush.msra.mxu0 %v1890
        %2031 = vmatpush.msra.mxu0 %v1889
        %2032 = vmatpush.msra.mxu0 %v1888
        %2033 = vmatpush.msra.mxu0 %v1887
        %2034 = vmatpush.msra.mxu0 %v1886
        %2035 = vmatmul.f32.gmra.mxu0 %v1870
        %v2036 = vpop.f32.mrf.mxu0
        %v2037 = vadd.f32 %v1972, %v2036
        %2038 = vmatmul.f32.gmra.mxu0 %v1871
        %v2039 = vpop.f32.mrf.mxu0
        %v2040 = vadd.f32 %v1975, %v2039
        %2041 = vmatmul.f32.gmra.mxu0 %v1872
        %v2042 = vpop.f32.mrf.mxu0
        %v2043 = vadd.f32 %v1978, %v2042
        %2044 = vmatmul.f32.gmra.mxu0 %v1873
        %v2045 = vpop.f32.mrf.mxu0
        %v2046 = vadd.f32 %v1981, %v2045
        %2047 = vmatmul.f32.gmra.mxu0 %v1874
        %v2048 = vpop.f32.mrf.mxu0
        %v2049 = vadd.f32 %v1984, %v2048
        %2050 = vmatmul.f32.gmra.mxu0 %v1875
        %v2051 = vpop.f32.mrf.mxu0
        %v2052 = vadd.f32 %v1987, %v2051
        %2053 = vmatmul.f32.gmra.mxu0 %v1876
        %v2054 = vpop.f32.mrf.mxu0
        %v2055 = vadd.f32 %v1990, %v2054
        %2056 = vmatmul.f32.gmra.mxu0 %v1877
        %v2057 = vpop.f32.mrf.mxu0
        %v2058 = vadd.f32 %v1993, %v2057
        %2059 = vmatmul.f32.gmra.mxu0 %v1878
        %v2060 = vpop.f32.mrf.mxu0
        %v2061 = vadd.f32 %v1996, %v2060
        %2062 = vmatmul.f32.gmra.mxu0 %v1879
        %v2063 = vpop.f32.mrf.mxu0
        %v2064 = vadd.f32 %v1999, %v2063
        %2065 = vmatmul.f32.gmra.mxu0 %v1880
        %v2066 = vpop.f32.mrf.mxu0
        %v2067 = vadd.f32 %v2002, %v2066
        %2068 = vmatmul.f32.gmra.mxu0 %v1881
        %v2069 = vpop.f32.mrf.mxu0
        %v2070 = vadd.f32 %v2005, %v2069
        %2071 = vmatmul.f32.gmra.mxu0 %v1882
        %v2072 = vpop.f32.mrf.mxu0
        %v2073 = vadd.f32 %v2008, %v2072
        %2074 = vmatmul.f32.gmra.mxu0 %v1883
        %v2075 = vpop.f32.mrf.mxu0
        %v2076 = vadd.f32 %v2011, %v2075
        %2077 = vmatmul.f32.gmra.mxu0 %v1884
        %v2078 = vpop.f32.mrf.mxu0
        %v2079 = vadd.f32 %v2014, %v2078
        %2080 = vmatmul.f32.gmra.mxu0 %v1885
        %v2081 = vpop.f32.mrf.mxu0
        %v2082 = vadd.f32 %v2017, %v2081
        %2083 = vdwg.mxu0
        %v2084 = vld [vmem:[%s10] sm:$0x1]
        %v2086 = vperm.slane %v2084, 0
        %v2088 = vadd.f32 %v2037, %v2086
        %v2089 = vadd.f32 %v2040, %v2086
        %v2090 = vadd.f32 %v2043, %v2086
        %v2091 = vadd.f32 %v2046, %v2086
        %v2092 = vadd.f32 %v2049, %v2086
        %v2093 = vadd.f32 %v2052, %v2086
        %v2094 = vadd.f32 %v2055, %v2086
        %v2095 = vadd.f32 %v2058, %v2086
        %v2096 = vadd.f32 %v2061, %v2086
        %v2097 = vadd.f32 %v2064, %v2086
        %v2098 = vadd.f32 %v2067, %v2086
        %v2099 = vadd.f32 %v2070, %v2086
        %v2100 = vadd.f32 %v2073, %v2086
        %v2101 = vadd.f32 %v2076, %v2086
        %v2102 = vadd.f32 %v2079, %v2086
        %v2103 = vadd.f32 %v2082, %v2086
        %v2104 = vmax.f32 %v2088, 0.0
        %v2105 = vmax.f32 %v2089, 0.0
        %v2106 = vmax.f32 %v2090, 0.0
        %v2107 = vmax.f32 %v2091, 0.0
        %v2108 = vmax.f32 %v2092, 0.0
        %v2109 = vmax.f32 %v2093, 0.0
        %v2110 = vmax.f32 %v2094, 0.0
        %v2111 = vmax.f32 %v2095, 0.0
        %v2112 = vmax.f32 %v2096, 0.0
        %v2113 = vmax.f32 %v2097, 0.0
        %v2114 = vmax.f32 %v2098, 0.0
        %v2115 = vmax.f32 %v2099, 0.0
        %v2116 = vmax.f32 %v2100, 0.0
        %v2117 = vmax.f32 %v2101, 0.0
        %v2118 = vmax.f32 %v2102, 0.0
        %v2119 = vmax.f32 %v2103, 0.0
        %v2120 = vsel %vm1359, %v2104, 0.0
        %2121 = vadd.xlane.f32.xlu0 %v2120
        %v2122 = vpop.xlane.xlu0 %2121
        %v2123 = vsel %vm1359, %v2105, 0.0
        %2124 = vadd.xlane.f32.xlu0 %v2123
        %v2125 = vpop.xlane.xlu0 %2124
        %v2126 = vsel %vm1359, %v2106, 0.0
        %2127 = vadd.xlane.f32.xlu0 %v2126
        %v2128 = vpop.xlane.xlu0 %2127
        %v2129 = vsel %vm1359, %v2107, 0.0
        %2130 = vadd.xlane.f32.xlu0 %v2129
        %v2131 = vpop.xlane.xlu0 %2130
        %v2132 = vsel %vm1359, %v2108, 0.0
        %2133 = vadd.xlane.f32.xlu0 %v2132
        %v2134 = vpop.xlane.xlu0 %2133
        %v2135 = vsel %vm1359, %v2109, 0.0
        %2136 = vadd.xlane.f32.xlu0 %v2135
        %v2137 = vpop.xlane.xlu0 %2136
        %v2138 = vsel %vm1359, %v2110, 0.0
        %2139 = vadd.xlane.f32.xlu0 %v2138
        %v2140 = vpop.xlane.xlu0 %2139
        %v2141 = vsel %vm1359, %v2111, 0.0
        %2142 = vadd.xlane.f32.xlu0 %v2141
        %v2143 = vpop.xlane.xlu0 %2142
        %v2144 = vsel %vm1359, %v2112, 0.0
        %2145 = vadd.xlane.f32.xlu0 %v2144
        %v2146 = vpop.xlane.xlu0 %2145
        %v2147 = vsel %vm1359, %v2113, 0.0
        %2148 = vadd.xlane.f32.xlu0 %v2147
        %v2149 = vpop.xlane.xlu0 %2148
        %v2150 = vsel %vm1359, %v2114, 0.0
        %2151 = vadd.xlane.f32.xlu0 %v2150
        %v2152 = vpop.xlane.xlu0 %2151
        %v2153 = vsel %vm1359, %v2115, 0.0
        %2154 = vadd.xlane.f32.xlu0 %v2153
        %v2155 = vpop.xlane.xlu0 %2154
        %v2156 = vsel %vm1359, %v2116, 0.0
        %2157 = vadd.xlane.f32.xlu0 %v2156
        %v2158 = vpop.xlane.xlu0 %2157
        %v2159 = vsel %vm1359, %v2117, 0.0
        %2160 = vadd.xlane.f32.xlu0 %v2159
        %v2161 = vpop.xlane.xlu0 %2160
        %v2162 = vsel %vm1359, %v2118, 0.0
        %2163 = vadd.xlane.f32.xlu0 %v2162
        %v2164 = vpop.xlane.xlu0 %2163
        %v2165 = vsel %vm1359, %v2119, 0.0
        %2166 = vadd.xlane.f32.xlu0 %v2165
        %v2167 = vpop.xlane.xlu0 %2166
        %v2168 = vmul.f32 %v2122, %v1414
        %v2169 = vmul.f32 %v2125, %v1414
        %v2170 = vmul.f32 %v2128, %v1414
        %v2171 = vmul.f32 %v2131, %v1414
        %v2172 = vmul.f32 %v2134, %v1414
        %v2173 = vmul.f32 %v2137, %v1414
        %v2174 = vmul.f32 %v2140, %v1414
        %v2175 = vmul.f32 %v2143, %v1414
        %v2176 = vmul.f32 %v2146, %v1414
        %v2177 = vmul.f32 %v2149, %v1414
        %v2178 = vmul.f32 %v2152, %v1414
        %v2179 = vmul.f32 %v2155, %v1414
        %v2180 = vmul.f32 %v2158, %v1414
        %v2181 = vmul.f32 %v2161, %v1414
        %v2182 = vmul.f32 %v2164, %v1414
        %v2183 = vmul.f32 %v2167, %v1414
        %v2184 = vsub.f32 %v2104, %v2168
        %v2185 = vsub.f32 %v2105, %v2169
        %v2186 = vsub.f32 %v2106, %v2170
        %v2187 = vsub.f32 %v2107, %v2171
        %v2188 = vsub.f32 %v2108, %v2172
        %v2189 = vsub.f32 %v2109, %v2173
        %v2190 = vsub.f32 %v2110, %v2174
        %v2191 = vsub.f32 %v2111, %v2175
        %v2192 = vsub.f32 %v2112, %v2176
        %v2193 = vsub.f32 %v2113, %v2177
        %v2194 = vsub.f32 %v2114, %v2178
        %v2195 = vsub.f32 %v2115, %v2179
        %v2196 = vsub.f32 %v2116, %v2180
        %v2197 = vsub.f32 %v2117, %v2181
        %v2198 = vsub.f32 %v2118, %v2182
        %v2199 = vsub.f32 %v2119, %v2183
        %v2200 = vmul.f32 %v2184, %v2184
        %v2201 = vmul.f32 %v2185, %v2185
        %v2202 = vmul.f32 %v2186, %v2186
        %v2203 = vmul.f32 %v2187, %v2187
        %v2204 = vmul.f32 %v2188, %v2188
        %v2205 = vmul.f32 %v2189, %v2189
        %v2206 = vmul.f32 %v2190, %v2190
        %v2207 = vmul.f32 %v2191, %v2191
        %v2208 = vmul.f32 %v2192, %v2192
        %v2209 = vmul.f32 %v2193, %v2193
        %v2210 = vmul.f32 %v2194, %v2194
        %v2211 = vmul.f32 %v2195, %v2195
        %v2212 = vmul.f32 %v2196, %v2196
        %v2213 = vmul.f32 %v2197, %v2197
        %v2214 = vmul.f32 %v2198, %v2198
        %v2215 = vmul.f32 %v2199, %v2199
        %v2216 = vsel %vm1359, %v2200, 0.0
        %2217 = vadd.xlane.f32.xlu0 %v2216
        %v2218 = vpop.xlane.xlu0 %2217
        %v2219 = vsel %vm1359, %v2201, 0.0
        %2220 = vadd.xlane.f32.xlu0 %v2219
        %v2221 = vpop.xlane.xlu0 %2220
        %v2222 = vsel %vm1359, %v2202, 0.0
        %2223 = vadd.xlane.f32.xlu0 %v2222
        %v2224 = vpop.xlane.xlu0 %2223
        %v2225 = vsel %vm1359, %v2203, 0.0
        %2226 = vadd.xlane.f32.xlu0 %v2225
        %v2227 = vpop.xlane.xlu0 %2226
        %v2228 = vsel %vm1359, %v2204, 0.0
        %2229 = vadd.xlane.f32.xlu0 %v2228
        %v2230 = vpop.xlane.xlu0 %2229
        %v2231 = vsel %vm1359, %v2205, 0.0
        %2232 = vadd.xlane.f32.xlu0 %v2231
        %v2233 = vpop.xlane.xlu0 %2232
        %v2234 = vsel %vm1359, %v2206, 0.0
        %2235 = vadd.xlane.f32.xlu0 %v2234
        %v2236 = vpop.xlane.xlu0 %2235
        %v2237 = vsel %vm1359, %v2207, 0.0
        %2238 = vadd.xlane.f32.xlu0 %v2237
        %v2239 = vpop.xlane.xlu0 %2238
        %v2240 = vsel %vm1359, %v2208, 0.0
        %2241 = vadd.xlane.f32.xlu0 %v2240
        %v2242 = vpop.xlane.xlu0 %2241
        %v2243 = vsel %vm1359, %v2209, 0.0
        %2244 = vadd.xlane.f32.xlu0 %v2243
        %v2245 = vpop.xlane.xlu0 %2244
        %v2246 = vsel %vm1359, %v2210, 0.0
        %2247 = vadd.xlane.f32.xlu0 %v2246
        %v2248 = vpop.xlane.xlu0 %2247
        %v2249 = vsel %vm1359, %v2211, 0.0
        %2250 = vadd.xlane.f32.xlu0 %v2249
        %v2251 = vpop.xlane.xlu0 %2250
        %v2252 = vsel %vm1359, %v2212, 0.0
        %2253 = vadd.xlane.f32.xlu0 %v2252
        %v2254 = vpop.xlane.xlu0 %2253
        %v2255 = vsel %vm1359, %v2213, 0.0
        %2256 = vadd.xlane.f32.xlu0 %v2255
        %v2257 = vpop.xlane.xlu0 %2256
        %v2258 = vsel %vm1359, %v2214, 0.0
        %2259 = vadd.xlane.f32.xlu0 %v2258
        %v2260 = vpop.xlane.xlu0 %2259
        %v2261 = vsel %vm1359, %v2215, 0.0
        %2262 = vadd.xlane.f32.xlu0 %v2261
        %v2263 = vpop.xlane.xlu0 %2262
        %v2264 = vmul.f32 %v2218, %v1414
        %v2265 = vmul.f32 %v2221, %v1414
        %v2266 = vmul.f32 %v2224, %v1414
        %v2267 = vmul.f32 %v2227, %v1414
        %v2268 = vmul.f32 %v2230, %v1414
        %v2269 = vmul.f32 %v2233, %v1414
        %v2270 = vmul.f32 %v2236, %v1414
        %v2271 = vmul.f32 %v2239, %v1414
        %v2272 = vmul.f32 %v2242, %v1414
        %v2273 = vmul.f32 %v2245, %v1414
        %v2274 = vmul.f32 %v2248, %v1414
        %v2275 = vmul.f32 %v2251, %v1414
        %v2276 = vmul.f32 %v2254, %v1414
        %v2277 = vmul.f32 %v2257, %v1414
        %v2278 = vmul.f32 %v2260, %v1414
        %v2279 = vmul.f32 %v2263, %v1414
        %v2280 = vadd.f32 %v2264, 1e-05
        %v2281 = vadd.f32 %v2265, 1e-05
        %v2282 = vadd.f32 %v2266, 1e-05
        %v2283 = vadd.f32 %v2267, 1e-05
        %v2284 = vadd.f32 %v2268, 1e-05
        %v2285 = vadd.f32 %v2269, 1e-05
        %v2286 = vadd.f32 %v2270, 1e-05
        %v2287 = vadd.f32 %v2271, 1e-05
        %v2288 = vadd.f32 %v2272, 1e-05
        %v2289 = vadd.f32 %v2273, 1e-05
        %v2290 = vadd.f32 %v2274, 1e-05
        %v2291 = vadd.f32 %v2275, 1e-05
        %v2292 = vadd.f32 %v2276, 1e-05
        %v2293 = vadd.f32 %v2277, 1e-05
        %v2294 = vadd.f32 %v2278, 1e-05
        %v2295 = vadd.f32 %v2279, 1e-05
        %v2296 = vrsqrt.pop %v2280
        %v2297 = vmul.f32 %v2296, %v2280
        %v2298 = vmul.f32 %v2297, %v2296
        %v2299 = vmul.f32 0.5, %v2298
        %v2300 = vsub.f32 1.5, %v2299
        %v2301 = vmul.f32 %v2296, %v2300
        %vm2302 = vweird.f32 %v2280
        %vm2303 = vweird.f32 %v2296
        %vm2304 = vmor %vm2302, %vm2303
        %v2305 = vsel %vm2304, %v2296, %v2301
        %v2306 = vrsqrt.pop %v2281
        %v2307 = vmul.f32 %v2306, %v2281
        %v2308 = vmul.f32 %v2307, %v2306
        %v2309 = vmul.f32 0.5, %v2308
        %v2310 = vsub.f32 1.5, %v2309
        %v2311 = vmul.f32 %v2306, %v2310
        %vm2312 = vweird.f32 %v2281
        %vm2313 = vweird.f32 %v2306
        %vm2314 = vmor %vm2312, %vm2313
        %v2315 = vsel %vm2314, %v2306, %v2311
        %v2316 = vrsqrt.pop %v2282
        %v2317 = vmul.f32 %v2316, %v2282
        %v2318 = vmul.f32 %v2317, %v2316
        %v2319 = vmul.f32 0.5, %v2318
        %v2320 = vsub.f32 1.5, %v2319
        %v2321 = vmul.f32 %v2316, %v2320
        %vm2322 = vweird.f32 %v2282
        %vm2323 = vweird.f32 %v2316
        %vm2324 = vmor %vm2322, %vm2323
        %v2325 = vsel %vm2324, %v2316, %v2321
        %v2326 = vrsqrt.pop %v2283
        %v2327 = vmul.f32 %v2326, %v2283
        %v2328 = vmul.f32 %v2327, %v2326
        %v2329 = vmul.f32 0.5, %v2328
        %v2330 = vsub.f32 1.5, %v2329
        %v2331 = vmul.f32 %v2326, %v2330
        %vm2332 = vweird.f32 %v2283
        %vm2333 = vweird.f32 %v2326
        %vm2334 = vmor %vm2332, %vm2333
        %v2335 = vsel %vm2334, %v2326, %v2331
        %v2336 = vrsqrt.pop %v2284
        %v2337 = vmul.f32 %v2336, %v2284
        %v2338 = vmul.f32 %v2337, %v2336
        %v2339 = vmul.f32 0.5, %v2338
        %v2340 = vsub.f32 1.5, %v2339
        %v2341 = vmul.f32 %v2336, %v2340
        %vm2342 = vweird.f32 %v2284
        %vm2343 = vweird.f32 %v2336
        %vm2344 = vmor %vm2342, %vm2343
        %v2345 = vsel %vm2344, %v2336, %v2341
        %v2346 = vrsqrt.pop %v2285
        %v2347 = vmul.f32 %v2346, %v2285
        %v2348 = vmul.f32 %v2347, %v2346
        %v2349 = vmul.f32 0.5, %v2348
        %v2350 = vsub.f32 1.5, %v2349
        %v2351 = vmul.f32 %v2346, %v2350
        %vm2352 = vweird.f32 %v2285
        %vm2353 = vweird.f32 %v2346
        %vm2354 = vmor %vm2352, %vm2353
        %v2355 = vsel %vm2354, %v2346, %v2351
        %v2356 = vrsqrt.pop %v2286
        %v2357 = vmul.f32 %v2356, %v2286
        %v2358 = vmul.f32 %v2357, %v2356
        %v2359 = vmul.f32 0.5, %v2358
        %v2360 = vsub.f32 1.5, %v2359
        %v2361 = vmul.f32 %v2356, %v2360
        %vm2362 = vweird.f32 %v2286
        %vm2363 = vweird.f32 %v2356
        %vm2364 = vmor %vm2362, %vm2363
        %v2365 = vsel %vm2364, %v2356, %v2361
        %v2366 = vrsqrt.pop %v2287
        %v2367 = vmul.f32 %v2366, %v2287
        %v2368 = vmul.f32 %v2367, %v2366
        %v2369 = vmul.f32 0.5, %v2368
        %v2370 = vsub.f32 1.5, %v2369
        %v2371 = vmul.f32 %v2366, %v2370
        %vm2372 = vweird.f32 %v2287
        %vm2373 = vweird.f32 %v2366
        %vm2374 = vmor %vm2372, %vm2373
        %v2375 = vsel %vm2374, %v2366, %v2371
        %v2376 = vrsqrt.pop %v2288
        %v2377 = vmul.f32 %v2376, %v2288
        %v2378 = vmul.f32 %v2377, %v2376
        %v2379 = vmul.f32 0.5, %v2378
        %v2380 = vsub.f32 1.5, %v2379
        %v2381 = vmul.f32 %v2376, %v2380
        %vm2382 = vweird.f32 %v2288
        %vm2383 = vweird.f32 %v2376
        %vm2384 = vmor %vm2382, %vm2383
        %v2385 = vsel %vm2384, %v2376, %v2381
        %v2386 = vrsqrt.pop %v2289
        %v2387 = vmul.f32 %v2386, %v2289
        %v2388 = vmul.f32 %v2387, %v2386
        %v2389 = vmul.f32 0.5, %v2388
        %v2390 = vsub.f32 1.5, %v2389
        %v2391 = vmul.f32 %v2386, %v2390
        %vm2392 = vweird.f32 %v2289
        %vm2393 = vweird.f32 %v2386
        %vm2394 = vmor %vm2392, %vm2393
        %v2395 = vsel %vm2394, %v2386, %v2391
        %v2396 = vrsqrt.pop %v2290
        %v2397 = vmul.f32 %v2396, %v2290
        %v2398 = vmul.f32 %v2397, %v2396
        %v2399 = vmul.f32 0.5, %v2398
        %v2400 = vsub.f32 1.5, %v2399
        %v2401 = vmul.f32 %v2396, %v2400
        %vm2402 = vweird.f32 %v2290
        %vm2403 = vweird.f32 %v2396
        %vm2404 = vmor %vm2402, %vm2403
        %v2405 = vsel %vm2404, %v2396, %v2401
        %v2406 = vrsqrt.pop %v2291
        %v2407 = vmul.f32 %v2406, %v2291
        %v2408 = vmul.f32 %v2407, %v2406
        %v2409 = vmul.f32 0.5, %v2408
        %v2410 = vsub.f32 1.5, %v2409
        %v2411 = vmul.f32 %v2406, %v2410
        %vm2412 = vweird.f32 %v2291
        %vm2413 = vweird.f32 %v2406
        %vm2414 = vmor %vm2412, %vm2413
        %v2415 = vsel %vm2414, %v2406, %v2411
        %v2416 = vrsqrt.pop %v2292
        %v2417 = vmul.f32 %v2416, %v2292
        %v2418 = vmul.f32 %v2417, %v2416
        %v2419 = vmul.f32 0.5, %v2418
        %v2420 = vsub.f32 1.5, %v2419
        %v2421 = vmul.f32 %v2416, %v2420
        %vm2422 = vweird.f32 %v2292
        %vm2423 = vweird.f32 %v2416
        %vm2424 = vmor %vm2422, %vm2423
        %v2425 = vsel %vm2424, %v2416, %v2421
        %v2426 = vrsqrt.pop %v2293
        %v2427 = vmul.f32 %v2426, %v2293
        %v2428 = vmul.f32 %v2427, %v2426
        %v2429 = vmul.f32 0.5, %v2428
        %v2430 = vsub.f32 1.5, %v2429
        %v2431 = vmul.f32 %v2426, %v2430
        %vm2432 = vweird.f32 %v2293
        %vm2433 = vweird.f32 %v2426
        %vm2434 = vmor %vm2432, %vm2433
        %v2435 = vsel %vm2434, %v2426, %v2431
        %v2436 = vrsqrt.pop %v2294
        %v2437 = vmul.f32 %v2436, %v2294
        %v2438 = vmul.f32 %v2437, %v2436
        %v2439 = vmul.f32 0.5, %v2438
        %v2440 = vsub.f32 1.5, %v2439
        %v2441 = vmul.f32 %v2436, %v2440
        %vm2442 = vweird.f32 %v2294
        %vm2443 = vweird.f32 %v2436
        %vm2444 = vmor %vm2442, %vm2443
        %v2445 = vsel %vm2444, %v2436, %v2441
        %v2446 = vrsqrt.pop %v2295
        %v2447 = vmul.f32 %v2446, %v2295
        %v2448 = vmul.f32 %v2447, %v2446
        %v2449 = vmul.f32 0.5, %v2448
        %v2450 = vsub.f32 1.5, %v2449
        %v2451 = vmul.f32 %v2446, %v2450
        %vm2452 = vweird.f32 %v2295
        %vm2453 = vweird.f32 %v2446
        %vm2454 = vmor %vm2452, %vm2453
        %v2455 = vsel %vm2454, %v2446, %v2451
        %v2456 = vmul.f32 %v2184, %v2305
        %v2457 = vmul.f32 %v2185, %v2315
        %v2458 = vmul.f32 %v2186, %v2325
        %v2459 = vmul.f32 %v2187, %v2335
        %v2460 = vmul.f32 %v2188, %v2345
        %v2461 = vmul.f32 %v2189, %v2355
        %v2462 = vmul.f32 %v2190, %v2365
        %v2463 = vmul.f32 %v2191, %v2375
        %v2464 = vmul.f32 %v2192, %v2385
        %v2465 = vmul.f32 %v2193, %v2395
        %v2466 = vmul.f32 %v2194, %v2405
        %v2467 = vmul.f32 %v2195, %v2415
        %v2468 = vmul.f32 %v2196, %v2425
        %v2469 = vmul.f32 %v2197, %v2435
        %v2470 = vmul.f32 %v2198, %v2445
        %v2471 = vmul.f32 %v2199, %v2455
        %v2472 = vld [vmem:[%s12] sm:$0x1]
        %v2473 = vld [vmem:[%s12 + $0x1] sm:$0x1]
        %v2474 = vld [vmem:[%s12 + $0x2] sm:$0x1]
        %v2475 = vld [vmem:[%s12 + $0x3] sm:$0x1]
        %v2476 = vld [vmem:[%s11] sm:$0xff]
        %v2477 = vld [vmem:[%s11 + $0x8] sm:$0xff]
        %v2478 = vld [vmem:[%s11 + $0x10] sm:$0xff]
        %v2479 = vld [vmem:[%s11 + $0x18] sm:$0xff]
        %v2480 = vperm.slane %v2472, 0
        %v2482 = vsel %vm1359, %v2456, 0
        %v2485 = vsel %vm1359, %v2457, 0
        %v2488 = vsel %vm1359, %v2458, 0
        %v2491 = vsel %vm1359, %v2459, 0
        %v2494 = vsel %vm1359, %v2460, 0
        %v2497 = vsel %vm1359, %v2461, 0
        %v2500 = vsel %vm1359, %v2462, 0
        %v2503 = vsel %vm1359, %v2463, 0
        %v2506 = vsel %vm1359, %v2464, 0
        %v2509 = vsel %vm1359, %v2465, 0
        %v2512 = vsel %vm1359, %v2466, 0
        %v2515 = vsel %vm1359, %v2467, 0
        %v2518 = vsel %vm1359, %v2468, 0
        %v2521 = vsel %vm1359, %v2469, 0
        %v2524 = vsel %vm1359, %v2470, 0
        %v2527 = vsel %vm1359, %v2471, 0
        %2529 = vmatpush.msra.mxu0 0.0
        %2530 = vmatpush.msra.mxu0 0.0
        %2531 = vmatpush.msra.mxu0 0.0
        %2532 = vmatpush.msra.mxu0 0.0
        %2533 = vmatpush.msra.mxu0 0.0
        %2534 = vmatpush.msra.mxu0 0.0
        %2535 = vmatpush.msra.mxu0 0.0
        %2536 = vmatpush.msra.mxu0 0.0
        %2537 = vmatpush.msra.mxu0 0.0
        %2538 = vmatpush.msra.mxu0 0.0
        %2539 = vmatpush.msra.mxu0 0.0
        %2540 = vmatpush.msra.mxu0 0.0
        %2541 = vmatpush.msra.mxu0 %v2479
        %2542 = vmatpush.msra.mxu0 %v2478
        %2543 = vmatpush.msra.mxu0 %v2477
        %2544 = vmatpush.msra.mxu0 %v2476
        %2545 = vmatmul.f32.gmra.mxu0 %v2482
        %v2546 = vpop.f32.mrf.mxu0
        %v2547 = vadd.f32 %v2480, %v2546
        %2548 = vmatmul.f32.gmra.mxu0 %v2485
        %v2549 = vpop.f32.mrf.mxu0
        %v2550 = vadd.f32 %v2480, %v2549
        %2551 = vmatmul.f32.gmra.mxu0 %v2488
        %v2552 = vpop.f32.mrf.mxu0
        %v2553 = vadd.f32 %v2480, %v2552
        %2554 = vmatmul.f32.gmra.mxu0 %v2491
        %v2555 = vpop.f32.mrf.mxu0
        %v2556 = vadd.f32 %v2480, %v2555
        %2557 = vmatmul.f32.gmra.mxu0 %v2494
        %v2558 = vpop.f32.mrf.mxu0
        %v2559 = vadd.f32 %v2480, %v2558
        %2560 = vmatmul.f32.gmra.mxu0 %v2497
        %v2561 = vpop.f32.mrf.mxu0
        %v2562 = vadd.f32 %v2480, %v2561
        %2563 = vmatmul.f32.gmra.mxu0 %v2500
        %v2564 = vpop.f32.mrf.mxu0
        %v2565 = vadd.f32 %v2480, %v2564
        %2566 = vmatmul.f32.gmra.mxu0 %v2503
        %v2567 = vpop.f32.mrf.mxu0
        %v2568 = vadd.f32 %v2480, %v2567
        %2569 = vmatmul.f32.gmra.mxu0 %v2506
        %v2570 = vpop.f32.mrf.mxu0
        %v2571 = vadd.f32 %v2480, %v2570
        %2572 = vmatmul.f32.gmra.mxu0 %v2509
        %v2573 = vpop.f32.mrf.mxu0
        %v2574 = vadd.f32 %v2480, %v2573
        %2575 = vmatmul.f32.gmra.mxu0 %v2512
        %v2576 = vpop.f32.mrf.mxu0
        %v2577 = vadd.f32 %v2480, %v2576
        %2578 = vmatmul.f32.gmra.mxu0 %v2515
        %v2579 = vpop.f32.mrf.mxu0
        %v2580 = vadd.f32 %v2480, %v2579
        %2581 = vmatmul.f32.gmra.mxu0 %v2518
        %v2582 = vpop.f32.mrf.mxu0
        %v2583 = vadd.f32 %v2480, %v2582
        %2584 = vmatmul.f32.gmra.mxu0 %v2521
        %v2585 = vpop.f32.mrf.mxu0
        %v2586 = vadd.f32 %v2480, %v2585
        %2587 = vmatmul.f32.gmra.mxu0 %v2524
        %v2588 = vpop.f32.mrf.mxu0
        %v2589 = vadd.f32 %v2480, %v2588
        %2590 = vmatmul.f32.gmra.mxu0 %v2527
        %v2591 = vpop.f32.mrf.mxu0
        %v2592 = vadd.f32 %v2480, %v2591
        %2593 = vdwg.mxu0
        %v2594 = vmax.f32 %v2547, 0.0
        %v2595 = vmax.f32 %v2550, 0.0
        %v2596 = vmax.f32 %v2553, 0.0
        %v2597 = vmax.f32 %v2556, 0.0
        %v2598 = vmax.f32 %v2559, 0.0
        %v2599 = vmax.f32 %v2562, 0.0
        %v2600 = vmax.f32 %v2565, 0.0
        %v2601 = vmax.f32 %v2568, 0.0
        %v2602 = vmax.f32 %v2571, 0.0
        %v2603 = vmax.f32 %v2574, 0.0
        %v2604 = vmax.f32 %v2577, 0.0
        %v2605 = vmax.f32 %v2580, 0.0
        %v2606 = vmax.f32 %v2583, 0.0
        %v2607 = vmax.f32 %v2586, 0.0
        %v2608 = vmax.f32 %v2589, 0.0
        %v2609 = vmax.f32 %v2592, 0.0
        %v2610 = vld [vmem:[%s13] sm:$0xff]
        %v2611 = vld [vmem:[%s13 + $0x8] sm:$0xff]
        %v2612 = vld [vmem:[%s13 + $0x10] sm:$0xff]
        %v2613 = vld [vmem:[%s13 + $0x18] sm:$0xff]
        %v2614 = vld [vmem:[%s13 + $0x20] sm:$0xff]
        %v2615 = vld [vmem:[%s13 + $0x28] sm:$0xff]
        %v2616 = vld [vmem:[%s13 + $0x30] sm:$0xff]
        %v2617 = vld [vmem:[%s13 + $0x38] sm:$0xff]
        %v2618 = vld [vmem:[%s13 + $0x40] sm:$0xff]
        %v2619 = vld [vmem:[%s13 + $0x48] sm:$0xff]
        %v2620 = vld [vmem:[%s13 + $0x50] sm:$0xff]
        %v2621 = vld [vmem:[%s13 + $0x58] sm:$0xff]
        %v2622 = vld [vmem:[%s13 + $0x60] sm:$0xff]
        %v2623 = vld [vmem:[%s13 + $0x68] sm:$0xff]
        %v2624 = vld [vmem:[%s13 + $0x70] sm:$0xff]
        %v2625 = vld [vmem:[%s13 + $0x78] sm:$0xff]
        %v2626 = vperm.slane %v2473, 0
        %2627 = vmatpush.msra.mxu0 %v2625
        %2628 = vmatpush.msra.mxu0 %v2624
        %2629 = vmatpush.msra.mxu0 %v2623
        %2630 = vmatpush.msra.mxu0 %v2622
        %2631 = vmatpush.msra.mxu0 %v2621
        %2632 = vmatpush.msra.mxu0 %v2620
        %2633 = vmatpush.msra.mxu0 %v2619
        %2634 = vmatpush.msra.mxu0 %v2618
        %2635 = vmatpush.msra.mxu0 %v2617
        %2636 = vmatpush.msra.mxu0 %v2616
        %2637 = vmatpush.msra.mxu0 %v2615
        %2638 = vmatpush.msra.mxu0 %v2614
        %2639 = vmatpush.msra.mxu0 %v2613
        %2640 = vmatpush.msra.mxu0 %v2612
        %2641 = vmatpush.msra.mxu0 %v2611
        %2642 = vmatpush.msra.mxu0 %v2610
        %2643 = vmatmul.f32.gmra.mxu0 %v2594
        %v2644 = vpop.f32.mrf.mxu0
        %v2645 = vadd.f32 %v2626, %v2644
        %2646 = vmatmul.f32.gmra.mxu0 %v2595
        %v2647 = vpop.f32.mrf.mxu0
        %v2648 = vadd.f32 %v2626, %v2647
        %2649 = vmatmul.f32.gmra.mxu0 %v2596
        %v2650 = vpop.f32.mrf.mxu0
        %v2651 = vadd.f32 %v2626, %v2650
        %2652 = vmatmul.f32.gmra.mxu0 %v2597
        %v2653 = vpop.f32.mrf.mxu0
        %v2654 = vadd.f32 %v2626, %v2653
        %2655 = vmatmul.f32.gmra.mxu0 %v2598
        %v2656 = vpop.f32.mrf.mxu0
        %v2657 = vadd.f32 %v2626, %v2656
        %2658 = vmatmul.f32.gmra.mxu0 %v2599
        %v2659 = vpop.f32.mrf.mxu0
        %v2660 = vadd.f32 %v2626, %v2659
        %2661 = vmatmul.f32.gmra.mxu0 %v2600
        %v2662 = vpop.f32.mrf.mxu0
        %v2663 = vadd.f32 %v2626, %v2662
        %2664 = vmatmul.f32.gmra.mxu0 %v2601
        %v2665 = vpop.f32.mrf.mxu0
        %v2666 = vadd.f32 %v2626, %v2665
        %2667 = vmatmul.f32.gmra.mxu0 %v2602
        %v2668 = vpop.f32.mrf.mxu0
        %v2669 = vadd.f32 %v2626, %v2668
        %2670 = vmatmul.f32.gmra.mxu0 %v2603
        %v2671 = vpop.f32.mrf.mxu0
        %v2672 = vadd.f32 %v2626, %v2671
        %2673 = vmatmul.f32.gmra.mxu0 %v2604
        %v2674 = vpop.f32.mrf.mxu0
        %v2675 = vadd.f32 %v2626, %v2674
        %2676 = vmatmul.f32.gmra.mxu0 %v2605
        %v2677 = vpop.f32.mrf.mxu0
        %v2678 = vadd.f32 %v2626, %v2677
        %2679 = vmatmul.f32.gmra.mxu0 %v2606
        %v2680 = vpop.f32.mrf.mxu0
        %v2681 = vadd.f32 %v2626, %v2680
        %2682 = vmatmul.f32.gmra.mxu0 %v2607
        %v2683 = vpop.f32.mrf.mxu0
        %v2684 = vadd.f32 %v2626, %v2683
        %2685 = vmatmul.f32.gmra.mxu0 %v2608
        %v2686 = vpop.f32.mrf.mxu0
        %v2687 = vadd.f32 %v2626, %v2686
        %2688 = vmatmul.f32.gmra.mxu0 %v2609
        %v2689 = vpop.f32.mrf.mxu0
        %v2690 = vadd.f32 %v2626, %v2689
        %2691 = vdwg.mxu0
        %vm2692 = vcmp.ge.f32.partialorder %v2645, 0.0
        %vm2693 = vcmp.ge.f32.partialorder %v2648, 0.0
        %vm2694 = vcmp.ge.f32.partialorder %v2651, 0.0
        %vm2695 = vcmp.ge.f32.partialorder %v2654, 0.0
        %vm2696 = vcmp.ge.f32.partialorder %v2657, 0.0
        %vm2697 = vcmp.ge.f32.partialorder %v2660, 0.0
        %vm2698 = vcmp.ge.f32.partialorder %v2663, 0.0
        %vm2699 = vcmp.ge.f32.partialorder %v2666, 0.0
        %vm2700 = vcmp.ge.f32.partialorder %v2669, 0.0
        %vm2701 = vcmp.ge.f32.partialorder %v2672, 0.0
        %vm2702 = vcmp.ge.f32.partialorder %v2675, 0.0
        %vm2703 = vcmp.ge.f32.partialorder %v2678, 0.0
        %vm2704 = vcmp.ge.f32.partialorder %v2681, 0.0
        %vm2705 = vcmp.ge.f32.partialorder %v2684, 0.0
        %vm2706 = vcmp.ge.f32.partialorder %v2687, 0.0
        %vm2707 = vcmp.ge.f32.partialorder %v2690, 0.0
        %v2708 = vmul.f32 %v2645, 0.01
        %v2709 = vmul.f32 %v2648, 0.01
        %v2710 = vmul.f32 %v2651, 0.01
        %v2711 = vmul.f32 %v2654, 0.01
        %v2712 = vmul.f32 %v2657, 0.01
        %v2713 = vmul.f32 %v2660, 0.01
        %v2714 = vmul.f32 %v2663, 0.01
        %v2715 = vmul.f32 %v2666, 0.01
        %v2716 = vmul.f32 %v2669, 0.01
        %v2717 = vmul.f32 %v2672, 0.01
        %v2718 = vmul.f32 %v2675, 0.01
        %v2719 = vmul.f32 %v2678, 0.01
        %v2720 = vmul.f32 %v2681, 0.01
        %v2721 = vmul.f32 %v2684, 0.01
        %v2722 = vmul.f32 %v2687, 0.01
        %v2723 = vmul.f32 %v2690, 0.01
        %v2724 = vsel %vm2692, %v2645, %v2708
        %v2725 = vsel %vm2693, %v2648, %v2709
        %v2726 = vsel %vm2694, %v2651, %v2710
        %v2727 = vsel %vm2695, %v2654, %v2711
        %v2728 = vsel %vm2696, %v2657, %v2712
        %v2729 = vsel %vm2697, %v2660, %v2713
        %v2730 = vsel %vm2698, %v2663, %v2714
        %v2731 = vsel %vm2699, %v2666, %v2715
        %v2732 = vsel %vm2700, %v2669, %v2716
        %v2733 = vsel %vm2701, %v2672, %v2717
        %v2734 = vsel %vm2702, %v2675, %v2718
        %v2735 = vsel %vm2703, %v2678, %v2719
        %v2736 = vsel %vm2704, %v2681, %v2720
        %v2737 = vsel %vm2705, %v2684, %v2721
        %v2738 = vsel %vm2706, %v2687, %v2722
        %v2739 = vsel %vm2707, %v2690, %v2723
        %v2740 = vld [vmem:[%s14] sm:$0xff]
        %v2741 = vld [vmem:[%s14 + $0x8] sm:$0xff]
        %v2742 = vld [vmem:[%s14 + $0x10] sm:$0xff]
        %v2743 = vld [vmem:[%s14 + $0x18] sm:$0xff]
        %v2744 = vld [vmem:[%s14 + $0x20] sm:$0xff]
        %v2745 = vld [vmem:[%s14 + $0x28] sm:$0xff]
        %v2746 = vld [vmem:[%s14 + $0x30] sm:$0xff]
        %v2747 = vld [vmem:[%s14 + $0x38] sm:$0xff]
        %v2748 = vld [vmem:[%s14 + $0x40] sm:$0xff]
        %v2749 = vld [vmem:[%s14 + $0x48] sm:$0xff]
        %v2750 = vld [vmem:[%s14 + $0x50] sm:$0xff]
        %v2751 = vld [vmem:[%s14 + $0x58] sm:$0xff]
        %v2752 = vld [vmem:[%s14 + $0x60] sm:$0xff]
        %v2753 = vld [vmem:[%s14 + $0x68] sm:$0xff]
        %v2754 = vld [vmem:[%s14 + $0x70] sm:$0xff]
        %v2755 = vld [vmem:[%s14 + $0x78] sm:$0xff]
        %v2756 = vperm.slane %v2474, 0
        %2757 = vmatpush.msra.mxu0 %v2755
        %2758 = vmatpush.msra.mxu0 %v2754
        %2759 = vmatpush.msra.mxu0 %v2753
        %2760 = vmatpush.msra.mxu0 %v2752
        %2761 = vmatpush.msra.mxu0 %v2751
        %2762 = vmatpush.msra.mxu0 %v2750
        %2763 = vmatpush.msra.mxu0 %v2749
        %2764 = vmatpush.msra.mxu0 %v2748
        %2765 = vmatpush.msra.mxu0 %v2747
        %2766 = vmatpush.msra.mxu0 %v2746
        %2767 = vmatpush.msra.mxu0 %v2745
        %2768 = vmatpush.msra.mxu0 %v2744
        %2769 = vmatpush.msra.mxu0 %v2743
        %2770 = vmatpush.msra.mxu0 %v2742
        %2771 = vmatpush.msra.mxu0 %v2741
        %2772 = vmatpush.msra.mxu0 %v2740
        %2773 = vmatmul.f32.gmra.mxu0 %v2724
        %v2774 = vpop.f32.mrf.mxu0
        %v2775 = vadd.f32 %v2756, %v2774
        %2776 = vmatmul.f32.gmra.mxu0 %v2725
        %v2777 = vpop.f32.mrf.mxu0
        %v2778 = vadd.f32 %v2756, %v2777
        %2779 = vmatmul.f32.gmra.mxu0 %v2726
        %v2780 = vpop.f32.mrf.mxu0
        %v2781 = vadd.f32 %v2756, %v2780
        %2782 = vmatmul.f32.gmra.mxu0 %v2727
        %v2783 = vpop.f32.mrf.mxu0
        %v2784 = vadd.f32 %v2756, %v2783
        %2785 = vmatmul.f32.gmra.mxu0 %v2728
        %v2786 = vpop.f32.mrf.mxu0
        %v2787 = vadd.f32 %v2756, %v2786
        %2788 = vmatmul.f32.gmra.mxu0 %v2729
        %v2789 = vpop.f32.mrf.mxu0
        %v2790 = vadd.f32 %v2756, %v2789
        %2791 = vmatmul.f32.gmra.mxu0 %v2730
        %v2792 = vpop.f32.mrf.mxu0
        %v2793 = vadd.f32 %v2756, %v2792
        %2794 = vmatmul.f32.gmra.mxu0 %v2731
        %v2795 = vpop.f32.mrf.mxu0
        %v2796 = vadd.f32 %v2756, %v2795
        %2797 = vmatmul.f32.gmra.mxu0 %v2732
        %v2798 = vpop.f32.mrf.mxu0
        %v2799 = vadd.f32 %v2756, %v2798
        %2800 = vmatmul.f32.gmra.mxu0 %v2733
        %v2801 = vpop.f32.mrf.mxu0
        %v2802 = vadd.f32 %v2756, %v2801
        %2803 = vmatmul.f32.gmra.mxu0 %v2734
        %v2804 = vpop.f32.mrf.mxu0
        %v2805 = vadd.f32 %v2756, %v2804
        %2806 = vmatmul.f32.gmra.mxu0 %v2735
        %v2807 = vpop.f32.mrf.mxu0
        %v2808 = vadd.f32 %v2756, %v2807
        %2809 = vmatmul.f32.gmra.mxu0 %v2736
        %v2810 = vpop.f32.mrf.mxu0
        %v2811 = vadd.f32 %v2756, %v2810
        %2812 = vmatmul.f32.gmra.mxu0 %v2737
        %v2813 = vpop.f32.mrf.mxu0
        %v2814 = vadd.f32 %v2756, %v2813
        %2815 = vmatmul.f32.gmra.mxu0 %v2738
        %v2816 = vpop.f32.mrf.mxu0
        %v2817 = vadd.f32 %v2756, %v2816
        %2818 = vmatmul.f32.gmra.mxu0 %v2739
        %v2819 = vpop.f32.mrf.mxu0
        %v2820 = vadd.f32 %v2756, %v2819
        %2821 = vdwg.mxu0
        %vm2822 = vcmp.ge.f32.partialorder %v2775, 0.0
        %vm2823 = vcmp.ge.f32.partialorder %v2778, 0.0
        %vm2824 = vcmp.ge.f32.partialorder %v2781, 0.0
        %vm2825 = vcmp.ge.f32.partialorder %v2784, 0.0
        %vm2826 = vcmp.ge.f32.partialorder %v2787, 0.0
        %vm2827 = vcmp.ge.f32.partialorder %v2790, 0.0
        %vm2828 = vcmp.ge.f32.partialorder %v2793, 0.0
        %vm2829 = vcmp.ge.f32.partialorder %v2796, 0.0
        %vm2830 = vcmp.ge.f32.partialorder %v2799, 0.0
        %vm2831 = vcmp.ge.f32.partialorder %v2802, 0.0
        %vm2832 = vcmp.ge.f32.partialorder %v2805, 0.0
        %vm2833 = vcmp.ge.f32.partialorder %v2808, 0.0
        %vm2834 = vcmp.ge.f32.partialorder %v2811, 0.0
        %vm2835 = vcmp.ge.f32.partialorder %v2814, 0.0
        %vm2836 = vcmp.ge.f32.partialorder %v2817, 0.0
        %vm2837 = vcmp.ge.f32.partialorder %v2820, 0.0
        %v2838 = vmul.f32 %v2775, 0.01
        %v2839 = vmul.f32 %v2778, 0.01
        %v2840 = vmul.f32 %v2781, 0.01
        %v2841 = vmul.f32 %v2784, 0.01
        %v2842 = vmul.f32 %v2787, 0.01
        %v2843 = vmul.f32 %v2790, 0.01
        %v2844 = vmul.f32 %v2793, 0.01
        %v2845 = vmul.f32 %v2796, 0.01
        %v2846 = vmul.f32 %v2799, 0.01
        %v2847 = vmul.f32 %v2802, 0.01
        %v2848 = vmul.f32 %v2805, 0.01
        %v2849 = vmul.f32 %v2808, 0.01
        %v2850 = vmul.f32 %v2811, 0.01
        %v2851 = vmul.f32 %v2814, 0.01
        %v2852 = vmul.f32 %v2817, 0.01
        %v2853 = vmul.f32 %v2820, 0.01
        %v2854 = vsel %vm2822, %v2775, %v2838
        %v2855 = vsel %vm2823, %v2778, %v2839
        %v2856 = vsel %vm2824, %v2781, %v2840
        %v2857 = vsel %vm2825, %v2784, %v2841
        %v2858 = vsel %vm2826, %v2787, %v2842
        %v2859 = vsel %vm2827, %v2790, %v2843
        %v2860 = vsel %vm2828, %v2793, %v2844
        %v2861 = vsel %vm2829, %v2796, %v2845
        %v2862 = vsel %vm2830, %v2799, %v2846
        %v2863 = vsel %vm2831, %v2802, %v2847
        %v2864 = vsel %vm2832, %v2805, %v2848
        %v2865 = vsel %vm2833, %v2808, %v2849
        %v2866 = vsel %vm2834, %v2811, %v2850
        %v2867 = vsel %vm2835, %v2814, %v2851
        %v2868 = vsel %vm2836, %v2817, %v2852
        %v2869 = vsel %vm2837, %v2820, %v2853
        %v2870 = vmax.f32 %v2854, 0.0
        %v2871 = vmax.f32 %v2855, 0.0
        %v2872 = vmax.f32 %v2856, 0.0
        %v2873 = vmax.f32 %v2857, 0.0
        %v2874 = vmax.f32 %v2858, 0.0
        %v2875 = vmax.f32 %v2859, 0.0
        %v2876 = vmax.f32 %v2860, 0.0
        %v2877 = vmax.f32 %v2861, 0.0
        %v2878 = vmax.f32 %v2862, 0.0
        %v2879 = vmax.f32 %v2863, 0.0
        %v2880 = vmax.f32 %v2864, 0.0
        %v2881 = vmax.f32 %v2865, 0.0
        %v2882 = vmax.f32 %v2866, 0.0
        %v2883 = vmax.f32 %v2867, 0.0
        %v2884 = vmax.f32 %v2868, 0.0
        %v2885 = vmax.f32 %v2869, 0.0
        %2886 = vadd.xlane.f32.xlu0 %v2870
        %v2887 = vpop.xlane.xlu0 %2886
        %2888 = vadd.xlane.f32.xlu0 %v2871
        %v2889 = vpop.xlane.xlu0 %2888
        %2890 = vadd.xlane.f32.xlu0 %v2872
        %v2891 = vpop.xlane.xlu0 %2890
        %2892 = vadd.xlane.f32.xlu0 %v2873
        %v2893 = vpop.xlane.xlu0 %2892
        %2894 = vadd.xlane.f32.xlu0 %v2874
        %v2895 = vpop.xlane.xlu0 %2894
        %2896 = vadd.xlane.f32.xlu0 %v2875
        %v2897 = vpop.xlane.xlu0 %2896
        %2898 = vadd.xlane.f32.xlu0 %v2876
        %v2899 = vpop.xlane.xlu0 %2898
        %2900 = vadd.xlane.f32.xlu0 %v2877
        %v2901 = vpop.xlane.xlu0 %2900
        %2902 = vadd.xlane.f32.xlu0 %v2878
        %v2903 = vpop.xlane.xlu0 %2902
        %2904 = vadd.xlane.f32.xlu0 %v2879
        %v2905 = vpop.xlane.xlu0 %2904
        %2906 = vadd.xlane.f32.xlu0 %v2880
        %v2907 = vpop.xlane.xlu0 %2906
        %2908 = vadd.xlane.f32.xlu0 %v2881
        %v2909 = vpop.xlane.xlu0 %2908
        %2910 = vadd.xlane.f32.xlu0 %v2882
        %v2911 = vpop.xlane.xlu0 %2910
        %2912 = vadd.xlane.f32.xlu0 %v2883
        %v2913 = vpop.xlane.xlu0 %2912
        %2914 = vadd.xlane.f32.xlu0 %v2884
        %v2915 = vpop.xlane.xlu0 %2914
        %2916 = vadd.xlane.f32.xlu0 %v2885
        %v2917 = vpop.xlane.xlu0 %2916
        %v2918 = vrcp.pop 128.0
        %v2919 = vmul.f32 128.0, %v2918
        %v2920 = vsub.f32 1.0, %v2919
        %v2921 = vmul.f32 %v2918, %v2920
        %v2922 = vadd.f32 %v2918, %v2921
        %vm2923 = vweird.f32 %v2918
        %v2924 = vsel %vm2923, %v2918, %v2922
        %v2925 = vmul.f32 %v2887, %v2924
        %v2926 = vmul.f32 %v2889, %v2924
        %v2927 = vmul.f32 %v2891, %v2924
        %v2928 = vmul.f32 %v2893, %v2924
        %v2929 = vmul.f32 %v2895, %v2924
        %v2930 = vmul.f32 %v2897, %v2924
        %v2931 = vmul.f32 %v2899, %v2924
        %v2932 = vmul.f32 %v2901, %v2924
        %v2933 = vmul.f32 %v2903, %v2924
        %v2934 = vmul.f32 %v2905, %v2924
        %v2935 = vmul.f32 %v2907, %v2924
        %v2936 = vmul.f32 %v2909, %v2924
        %v2937 = vmul.f32 %v2911, %v2924
        %v2938 = vmul.f32 %v2913, %v2924
        %v2939 = vmul.f32 %v2915, %v2924
        %v2940 = vmul.f32 %v2917, %v2924
        %v2941 = vsub.f32 %v2870, %v2925
        %v2942 = vsub.f32 %v2871, %v2926
        %v2943 = vsub.f32 %v2872, %v2927
        %v2944 = vsub.f32 %v2873, %v2928
        %v2945 = vsub.f32 %v2874, %v2929
        %v2946 = vsub.f32 %v2875, %v2930
        %v2947 = vsub.f32 %v2876, %v2931
        %v2948 = vsub.f32 %v2877, %v2932
        %v2949 = vsub.f32 %v2878, %v2933
        %v2950 = vsub.f32 %v2879, %v2934
        %v2951 = vsub.f32 %v2880, %v2935
        %v2952 = vsub.f32 %v2881, %v2936
        %v2953 = vsub.f32 %v2882, %v2937
        %v2954 = vsub.f32 %v2883, %v2938
        %v2955 = vsub.f32 %v2884, %v2939
        %v2956 = vsub.f32 %v2885, %v2940
        %v2957 = vmul.f32 %v2941, %v2941
        %v2958 = vmul.f32 %v2942, %v2942
        %v2959 = vmul.f32 %v2943, %v2943
        %v2960 = vmul.f32 %v2944, %v2944
        %v2961 = vmul.f32 %v2945, %v2945
        %v2962 = vmul.f32 %v2946, %v2946
        %v2963 = vmul.f32 %v2947, %v2947
        %v2964 = vmul.f32 %v2948, %v2948
        %v2965 = vmul.f32 %v2949, %v2949
        %v2966 = vmul.f32 %v2950, %v2950
        %v2967 = vmul.f32 %v2951, %v2951
        %v2968 = vmul.f32 %v2952, %v2952
        %v2969 = vmul.f32 %v2953, %v2953
        %v2970 = vmul.f32 %v2954, %v2954
        %v2971 = vmul.f32 %v2955, %v2955
        %v2972 = vmul.f32 %v2956, %v2956
        %2973 = vadd.xlane.f32.xlu0 %v2957
        %v2974 = vpop.xlane.xlu0 %2973
        %2975 = vadd.xlane.f32.xlu0 %v2958
        %v2976 = vpop.xlane.xlu0 %2975
        %2977 = vadd.xlane.f32.xlu0 %v2959
        %v2978 = vpop.xlane.xlu0 %2977
        %2979 = vadd.xlane.f32.xlu0 %v2960
        %v2980 = vpop.xlane.xlu0 %2979
        %2981 = vadd.xlane.f32.xlu0 %v2961
        %v2982 = vpop.xlane.xlu0 %2981
        %2983 = vadd.xlane.f32.xlu0 %v2962
        %v2984 = vpop.xlane.xlu0 %2983
        %2985 = vadd.xlane.f32.xlu0 %v2963
        %v2986 = vpop.xlane.xlu0 %2985
        %2987 = vadd.xlane.f32.xlu0 %v2964
        %v2988 = vpop.xlane.xlu0 %2987
        %2989 = vadd.xlane.f32.xlu0 %v2965
        %v2990 = vpop.xlane.xlu0 %2989
        %2991 = vadd.xlane.f32.xlu0 %v2966
        %v2992 = vpop.xlane.xlu0 %2991
        %2993 = vadd.xlane.f32.xlu0 %v2967
        %v2994 = vpop.xlane.xlu0 %2993
        %2995 = vadd.xlane.f32.xlu0 %v2968
        %v2996 = vpop.xlane.xlu0 %2995
        %2997 = vadd.xlane.f32.xlu0 %v2969
        %v2998 = vpop.xlane.xlu0 %2997
        %2999 = vadd.xlane.f32.xlu0 %v2970
        %v3000 = vpop.xlane.xlu0 %2999
        %3001 = vadd.xlane.f32.xlu0 %v2971
        %v3002 = vpop.xlane.xlu0 %3001
        %3003 = vadd.xlane.f32.xlu0 %v2972
        %v3004 = vpop.xlane.xlu0 %3003
        %v3005 = vmul.f32 %v2974, %v2924
        %v3006 = vmul.f32 %v2976, %v2924
        %v3007 = vmul.f32 %v2978, %v2924
        %v3008 = vmul.f32 %v2980, %v2924
        %v3009 = vmul.f32 %v2982, %v2924
        %v3010 = vmul.f32 %v2984, %v2924
        %v3011 = vmul.f32 %v2986, %v2924
        %v3012 = vmul.f32 %v2988, %v2924
        %v3013 = vmul.f32 %v2990, %v2924
        %v3014 = vmul.f32 %v2992, %v2924
        %v3015 = vmul.f32 %v2994, %v2924
        %v3016 = vmul.f32 %v2996, %v2924
        %v3017 = vmul.f32 %v2998, %v2924
        %v3018 = vmul.f32 %v3000, %v2924
        %v3019 = vmul.f32 %v3002, %v2924
        %v3020 = vmul.f32 %v3004, %v2924
        %v3021 = vadd.f32 %v3005, 1e-05
        %v3022 = vadd.f32 %v3006, 1e-05
        %v3023 = vadd.f32 %v3007, 1e-05
        %v3024 = vadd.f32 %v3008, 1e-05
        %v3025 = vadd.f32 %v3009, 1e-05
        %v3026 = vadd.f32 %v3010, 1e-05
        %v3027 = vadd.f32 %v3011, 1e-05
        %v3028 = vadd.f32 %v3012, 1e-05
        %v3029 = vadd.f32 %v3013, 1e-05
        %v3030 = vadd.f32 %v3014, 1e-05
        %v3031 = vadd.f32 %v3015, 1e-05
        %v3032 = vadd.f32 %v3016, 1e-05
        %v3033 = vadd.f32 %v3017, 1e-05
        %v3034 = vadd.f32 %v3018, 1e-05
        %v3035 = vadd.f32 %v3019, 1e-05
        %v3036 = vadd.f32 %v3020, 1e-05
        %v3037 = vrsqrt.pop %v3021
        %v3038 = vmul.f32 %v3037, %v3021
        %v3039 = vmul.f32 %v3038, %v3037
        %v3040 = vmul.f32 0.5, %v3039
        %v3041 = vsub.f32 1.5, %v3040
        %v3042 = vmul.f32 %v3037, %v3041
        %vm3043 = vweird.f32 %v3021
        %vm3044 = vweird.f32 %v3037
        %vm3045 = vmor %vm3043, %vm3044
        %v3046 = vsel %vm3045, %v3037, %v3042
        %v3047 = vrsqrt.pop %v3022
        %v3048 = vmul.f32 %v3047, %v3022
        %v3049 = vmul.f32 %v3048, %v3047
        %v3050 = vmul.f32 0.5, %v3049
        %v3051 = vsub.f32 1.5, %v3050
        %v3052 = vmul.f32 %v3047, %v3051
        %vm3053 = vweird.f32 %v3022
        %vm3054 = vweird.f32 %v3047
        %vm3055 = vmor %vm3053, %vm3054
        %v3056 = vsel %vm3055, %v3047, %v3052
        %v3057 = vrsqrt.pop %v3023
        %v3058 = vmul.f32 %v3057, %v3023
        %v3059 = vmul.f32 %v3058, %v3057
        %v3060 = vmul.f32 0.5, %v3059
        %v3061 = vsub.f32 1.5, %v3060
        %v3062 = vmul.f32 %v3057, %v3061
        %vm3063 = vweird.f32 %v3023
        %vm3064 = vweird.f32 %v3057
        %vm3065 = vmor %vm3063, %vm3064
        %v3066 = vsel %vm3065, %v3057, %v3062
        %v3067 = vrsqrt.pop %v3024
        %v3068 = vmul.f32 %v3067, %v3024
        %v3069 = vmul.f32 %v3068, %v3067
        %v3070 = vmul.f32 0.5, %v3069
        %v3071 = vsub.f32 1.5, %v3070
        %v3072 = vmul.f32 %v3067, %v3071
        %vm3073 = vweird.f32 %v3024
        %vm3074 = vweird.f32 %v3067
        %vm3075 = vmor %vm3073, %vm3074
        %v3076 = vsel %vm3075, %v3067, %v3072
        %v3077 = vrsqrt.pop %v3025
        %v3078 = vmul.f32 %v3077, %v3025
        %v3079 = vmul.f32 %v3078, %v3077
        %v3080 = vmul.f32 0.5, %v3079
        %v3081 = vsub.f32 1.5, %v3080
        %v3082 = vmul.f32 %v3077, %v3081
        %vm3083 = vweird.f32 %v3025
        %vm3084 = vweird.f32 %v3077
        %vm3085 = vmor %vm3083, %vm3084
        %v3086 = vsel %vm3085, %v3077, %v3082
        %v3087 = vrsqrt.pop %v3026
        %v3088 = vmul.f32 %v3087, %v3026
        %v3089 = vmul.f32 %v3088, %v3087
        %v3090 = vmul.f32 0.5, %v3089
        %v3091 = vsub.f32 1.5, %v3090
        %v3092 = vmul.f32 %v3087, %v3091
        %vm3093 = vweird.f32 %v3026
        %vm3094 = vweird.f32 %v3087
        %vm3095 = vmor %vm3093, %vm3094
        %v3096 = vsel %vm3095, %v3087, %v3092
        %v3097 = vrsqrt.pop %v3027
        %v3098 = vmul.f32 %v3097, %v3027
        %v3099 = vmul.f32 %v3098, %v3097
        %v3100 = vmul.f32 0.5, %v3099
        %v3101 = vsub.f32 1.5, %v3100
        %v3102 = vmul.f32 %v3097, %v3101
        %vm3103 = vweird.f32 %v3027
        %vm3104 = vweird.f32 %v3097
        %vm3105 = vmor %vm3103, %vm3104
        %v3106 = vsel %vm3105, %v3097, %v3102
        %v3107 = vrsqrt.pop %v3028
        %v3108 = vmul.f32 %v3107, %v3028
        %v3109 = vmul.f32 %v3108, %v3107
        %v3110 = vmul.f32 0.5, %v3109
        %v3111 = vsub.f32 1.5, %v3110
        %v3112 = vmul.f32 %v3107, %v3111
        %vm3113 = vweird.f32 %v3028
        %vm3114 = vweird.f32 %v3107
        %vm3115 = vmor %vm3113, %vm3114
        %v3116 = vsel %vm3115, %v3107, %v3112
        %v3117 = vrsqrt.pop %v3029
        %v3118 = vmul.f32 %v3117, %v3029
        %v3119 = vmul.f32 %v3118, %v3117
        %v3120 = vmul.f32 0.5, %v3119
        %v3121 = vsub.f32 1.5, %v3120
        %v3122 = vmul.f32 %v3117, %v3121
        %vm3123 = vweird.f32 %v3029
        %vm3124 = vweird.f32 %v3117
        %vm3125 = vmor %vm3123, %vm3124
        %v3126 = vsel %vm3125, %v3117, %v3122
        %v3127 = vrsqrt.pop %v3030
        %v3128 = vmul.f32 %v3127, %v3030
        %v3129 = vmul.f32 %v3128, %v3127
        %v3130 = vmul.f32 0.5, %v3129
        %v3131 = vsub.f32 1.5, %v3130
        %v3132 = vmul.f32 %v3127, %v3131
        %vm3133 = vweird.f32 %v3030
        %vm3134 = vweird.f32 %v3127
        %vm3135 = vmor %vm3133, %vm3134
        %v3136 = vsel %vm3135, %v3127, %v3132
        %v3137 = vrsqrt.pop %v3031
        %v3138 = vmul.f32 %v3137, %v3031
        %v3139 = vmul.f32 %v3138, %v3137
        %v3140 = vmul.f32 0.5, %v3139
        %v3141 = vsub.f32 1.5, %v3140
        %v3142 = vmul.f32 %v3137, %v3141
        %vm3143 = vweird.f32 %v3031
        %vm3144 = vweird.f32 %v3137
        %vm3145 = vmor %vm3143, %vm3144
        %v3146 = vsel %vm3145, %v3137, %v3142
        %v3147 = vrsqrt.pop %v3032
        %v3148 = vmul.f32 %v3147, %v3032
        %v3149 = vmul.f32 %v3148, %v3147
        %v3150 = vmul.f32 0.5, %v3149
        %v3151 = vsub.f32 1.5, %v3150
        %v3152 = vmul.f32 %v3147, %v3151
        %vm3153 = vweird.f32 %v3032
        %vm3154 = vweird.f32 %v3147
        %vm3155 = vmor %vm3153, %vm3154
        %v3156 = vsel %vm3155, %v3147, %v3152
        %v3157 = vrsqrt.pop %v3033
        %v3158 = vmul.f32 %v3157, %v3033
        %v3159 = vmul.f32 %v3158, %v3157
        %v3160 = vmul.f32 0.5, %v3159
        %v3161 = vsub.f32 1.5, %v3160
        %v3162 = vmul.f32 %v3157, %v3161
        %vm3163 = vweird.f32 %v3033
        %vm3164 = vweird.f32 %v3157
        %vm3165 = vmor %vm3163, %vm3164
        %v3166 = vsel %vm3165, %v3157, %v3162
        %v3167 = vrsqrt.pop %v3034
        %v3168 = vmul.f32 %v3167, %v3034
        %v3169 = vmul.f32 %v3168, %v3167
        %v3170 = vmul.f32 0.5, %v3169
        %v3171 = vsub.f32 1.5, %v3170
        %v3172 = vmul.f32 %v3167, %v3171
        %vm3173 = vweird.f32 %v3034
        %vm3174 = vweird.f32 %v3167
        %vm3175 = vmor %vm3173, %vm3174
        %v3176 = vsel %vm3175, %v3167, %v3172
        %v3177 = vrsqrt.pop %v3035
        %v3178 = vmul.f32 %v3177, %v3035
        %v3179 = vmul.f32 %v3178, %v3177
        %v3180 = vmul.f32 0.5, %v3179
        %v3181 = vsub.f32 1.5, %v3180
        %v3182 = vmul.f32 %v3177, %v3181
        %vm3183 = vweird.f32 %v3035
        %vm3184 = vweird.f32 %v3177
        %vm3185 = vmor %vm3183, %vm3184
        %v3186 = vsel %vm3185, %v3177, %v3182
        %v3187 = vrsqrt.pop %v3036
        %v3188 = vmul.f32 %v3187, %v3036
        %v3189 = vmul.f32 %v3188, %v3187
        %v3190 = vmul.f32 0.5, %v3189
        %v3191 = vsub.f32 1.5, %v3190
        %v3192 = vmul.f32 %v3187, %v3191
        %vm3193 = vweird.f32 %v3036
        %vm3194 = vweird.f32 %v3187
        %vm3195 = vmor %vm3193, %vm3194
        %v3196 = vsel %vm3195, %v3187, %v3192
        %v3197 = vmul.f32 %v2941, %v3046
        %v3198 = vmul.f32 %v2942, %v3056
        %v3199 = vmul.f32 %v2943, %v3066
        %v3200 = vmul.f32 %v2944, %v3076
        %v3201 = vmul.f32 %v2945, %v3086
        %v3202 = vmul.f32 %v2946, %v3096
        %v3203 = vmul.f32 %v2947, %v3106
        %v3204 = vmul.f32 %v2948, %v3116
        %v3205 = vmul.f32 %v2949, %v3126
        %v3206 = vmul.f32 %v2950, %v3136
        %v3207 = vmul.f32 %v2951, %v3146
        %v3208 = vmul.f32 %v2952, %v3156
        %v3209 = vmul.f32 %v2953, %v3166
        %v3210 = vmul.f32 %v2954, %v3176
        %v3211 = vmul.f32 %v2955, %v3186
        %v3212 = vmul.f32 %v2956, %v3196
        %3213 = vmatpush.xpose.msra.mxu0 0.0
        %3214 = vmatpush.xpose.msra.mxu0 0.0
        %3215 = vmatpush.xpose.msra.mxu0 0.0
        %3216 = vmatpush.xpose.msra.mxu0 0.0
        %3217 = vmatpush.xpose.msra.mxu0 0.0
        %3218 = vmatpush.xpose.msra.mxu0 0.0
        %3219 = vmatpush.xpose.msra.mxu0 0.0
        %3220 = vmatpush.xpose.msra.mxu0 0.0
        %3221 = vmatpush.xpose.msra.mxu0 %v3204
        %3222 = vmatpush.xpose.msra.mxu0 %v3203
        %3223 = vmatpush.xpose.msra.mxu0 %v3202
        %3224 = vmatpush.xpose.msra.mxu0 %v3201
        %3225 = vmatpush.xpose.msra.mxu0 %v3200
        %3226 = vmatpush.xpose.msra.mxu0 %v3199
        %3227 = vmatpush.xpose.msra.mxu0 %v3198
        %3228 = vmatpush.xpose.msra.mxu0 %v3197
        %3229 = vmatmul.f32.gmra.mxu0 %v2475
        %v3230 = vpop.f32.mrf.mxu0
        %v3231 = vadd.f32 0.0, %v3230
        %3232 = vdwg.mxu0
        %3233 = vmatpush.xpose.msra.mxu0 0.0
        %3234 = vmatpush.xpose.msra.mxu0 0.0
        %3235 = vmatpush.xpose.msra.mxu0 0.0
        %3236 = vmatpush.xpose.msra.mxu0 0.0
        %3237 = vmatpush.xpose.msra.mxu0 0.0
        %3238 = vmatpush.xpose.msra.mxu0 0.0
        %3239 = vmatpush.xpose.msra.mxu0 0.0
        %3240 = vmatpush.xpose.msra.mxu0 0.0
        %3241 = vmatpush.xpose.msra.mxu0 %v3212
        %3242 = vmatpush.xpose.msra.mxu0 %v3211
        %3243 = vmatpush.xpose.msra.mxu0 %v3210
        %3244 = vmatpush.xpose.msra.mxu0 %v3209
        %3245 = vmatpush.xpose.msra.mxu0 %v3208
        %3246 = vmatpush.xpose.msra.mxu0 %v3207
        %3247 = vmatpush.xpose.msra.mxu0 %v3206
        %3248 = vmatpush.xpose.msra.mxu0 %v3205
        %3249 = vmatmul.f32.gmra.mxu0 %v2475
        %v3250 = vpop.f32.mrf.mxu0
        %v3251 = vadd.f32 0.0, %v3250
        %3252 = vdwg.mxu0
        %vm3253 = vcmask 516096
        %v3254 = vsel %vm3253, %v3231, -inf
        %3255 = vmax.xlane.f32.xlu0 %v3254
        %v3256 = vpop.xlane.xlu0 %3255
        %v3257 = vsel %vm3253, %v3251, -inf
        %3258 = vmax.xlane.f32.xlu0 %v3257
        %v3259 = vpop.xlane.xlu0 %3258
        %v3260 = vsub.f32 %v3231, %v3256
        %v3261 = vsub.f32 %v3251, %v3259
        %v3262 = vmul.f32 %v3260, 1.442695
        %v3263 = vpow.pop %v3262
        %v3264 = vmul.f32 %v3261, 1.442695
        %v3265 = vpow.pop %v3264
        %v3266 = vsel %vm3253, %v3263, 0.0
        %3267 = vadd.xlane.f32.xlu0 %v3266
        %v3268 = vpop.xlane.xlu0 %3267
        %v3269 = vsel %vm3253, %v3265, 0.0
        %3270 = vadd.xlane.f32.xlu0 %v3269
        %v3271 = vpop.xlane.xlu0 %3270
        %v3272 = vrcp.pop %v3268
        %v3273 = vmul.f32 %v3268, %v3272
        %v3274 = vsub.f32 1.0, %v3273
        %v3275 = vmul.f32 %v3272, %v3274
        %v3276 = vadd.f32 %v3272, %v3275
        %vm3277 = vweird.f32 %v3268
        %vm3278 = vweird.f32 %v3272
        %vm3279 = vmor %vm3277, %vm3278
        %v3280 = vsel %vm3279, %v3272, %v3276
        %v3281 = vand.u32 2147483647, %v3268
        %vm3282 = vcmp.eq.f32.partialorder %v3281, 8.507059e+37
        %v3283 = vand.u32 %v3268, 2147483648
        %v3284 = vor.u32 1.1754944e-38, %v3283
        %v3285 = vsel %vm3282, %v3284, %v3280
        %v3286 = vmul.f32 %v3263, %v3285
        %v3287 = vrcp.pop %v3271
        %v3288 = vmul.f32 %v3271, %v3287
        %v3289 = vsub.f32 1.0, %v3288
        %v3290 = vmul.f32 %v3287, %v3289
        %v3291 = vadd.f32 %v3287, %v3290
        %vm3292 = vweird.f32 %v3271
        %vm3293 = vweird.f32 %v3287
        %vm3294 = vmor %vm3292, %vm3293
        %v3295 = vsel %vm3294, %v3287, %v3291
        %v3296 = vand.u32 2147483647, %v3271
        %vm3297 = vcmp.eq.f32.partialorder %v3296, 8.507059e+37
        %v3298 = vand.u32 %v3271, 2147483648
        %v3299 = vor.u32 1.1754944e-38, %v3298
        %v3300 = vsel %vm3297, %v3299, %v3295
        %v3301 = vmul.f32 %v3265, %v3300
        %v3302 = vlaneseq
        %v3303 = vand.u32 %v3302, 127
        %v3304 = vadd.s32 %v3303, 128
        %3305 = vset.pattern.permute.xlu0 0
        %3306 = vperm.xlu0 %3305, %v714
        %v3307 = vpop.permute.xlu0 %3306
        %3308 = vset.pattern.permute.xlu0 0
        %3309 = vperm.xlu0 %3308, %v715
        %v3310 = vpop.permute.xlu0 %3309
        %3311 = vset.pattern.permute.xlu0 0
        %3312 = vperm.xlu0 %3311, %v716
        %v3313 = vpop.permute.xlu0 %3312
        %3314 = vset.pattern.permute.xlu0 0
        %3315 = vperm.xlu0 %3314, %v717
        %v3316 = vpop.permute.xlu0 %3315
        %3317 = vset.pattern.permute.xlu0 0
        %3318 = vperm.xlu0 %3317, %v718
        %v3319 = vpop.permute.xlu0 %3318
        %3320 = vset.pattern.permute.xlu0 0
        %3321 = vperm.xlu0 %3320, %v719
        %v3322 = vpop.permute.xlu0 %3321
        %3323 = vset.pattern.permute.xlu0 0
        %3324 = vperm.xlu0 %3323, %v720
        %v3325 = vpop.permute.xlu0 %3324
        %3326 = vset.pattern.permute.xlu0 0
        %3327 = vperm.xlu0 %3326, %v721
        %v3328 = vpop.permute.xlu0 %3327
        %3329 = vset.pattern.permute.xlu0 0
        %3330 = vperm.xlu0 %3329, %v722
        %v3331 = vpop.permute.xlu0 %3330
        %3332 = vset.pattern.permute.xlu0 0
        %3333 = vperm.xlu0 %3332, %v723
        %v3334 = vpop.permute.xlu0 %3333
        %3335 = vset.pattern.permute.xlu0 0
        %3336 = vperm.xlu0 %3335, %v724
        %v3337 = vpop.permute.xlu0 %3336
        %3338 = vset.pattern.permute.xlu0 0
        %3339 = vperm.xlu0 %3338, %v725
        %v3340 = vpop.permute.xlu0 %3339
        %3341 = vset.pattern.permute.xlu0 0
        %3342 = vperm.xlu0 %3341, %v726
        %v3343 = vpop.permute.xlu0 %3342
        %3344 = vset.pattern.permute.xlu0 0
        %3345 = vperm.xlu0 %3344, %v727
        %v3346 = vpop.permute.xlu0 %3345
        %3347 = vset.pattern.permute.xlu0 0
        %3348 = vperm.xlu0 %3347, %v728
        %v3349 = vpop.permute.xlu0 %3348
        %3350 = vset.pattern.permute.xlu0 0
        %3351 = vperm.xlu0 %3350, %v729
        %v3352 = vpop.permute.xlu0 %3351
        %vm3353 = vcmp.eq.s32.totalorder %v3307, %v3303
        %vm3354 = vcmp.eq.s32.totalorder %v3307, %v3304
        %vm3355 = vcmp.eq.s32.totalorder %v3310, %v3303
        %vm3356 = vcmp.eq.s32.totalorder %v3310, %v3304
        %vm3357 = vcmp.eq.s32.totalorder %v3313, %v3303
        %vm3358 = vcmp.eq.s32.totalorder %v3313, %v3304
        %vm3359 = vcmp.eq.s32.totalorder %v3316, %v3303
        %vm3360 = vcmp.eq.s32.totalorder %v3316, %v3304
        %vm3361 = vcmp.eq.s32.totalorder %v3319, %v3303
        %vm3362 = vcmp.eq.s32.totalorder %v3319, %v3304
        %vm3363 = vcmp.eq.s32.totalorder %v3322, %v3303
        %vm3364 = vcmp.eq.s32.totalorder %v3322, %v3304
        %vm3365 = vcmp.eq.s32.totalorder %v3325, %v3303
        %vm3366 = vcmp.eq.s32.totalorder %v3325, %v3304
        %vm3367 = vcmp.eq.s32.totalorder %v3328, %v3303
        %vm3368 = vcmp.eq.s32.totalorder %v3328, %v3304
        %vm3369 = vcmp.eq.s32.totalorder %v3331, %v3303
        %vm3370 = vcmp.eq.s32.totalorder %v3331, %v3304
        %vm3371 = vcmp.eq.s32.totalorder %v3334, %v3303
        %vm3372 = vcmp.eq.s32.totalorder %v3334, %v3304
        %vm3373 = vcmp.eq.s32.totalorder %v3337, %v3303
        %vm3374 = vcmp.eq.s32.totalorder %v3337, %v3304
        %vm3375 = vcmp.eq.s32.totalorder %v3340, %v3303
        %vm3376 = vcmp.eq.s32.totalorder %v3340, %v3304
        %vm3377 = vcmp.eq.s32.totalorder %v3343, %v3303
        %vm3378 = vcmp.eq.s32.totalorder %v3343, %v3304
        %vm3379 = vcmp.eq.s32.totalorder %v3346, %v3303
        %vm3380 = vcmp.eq.s32.totalorder %v3346, %v3304
        %vm3381 = vcmp.eq.s32.totalorder %v3349, %v3303
        %vm3382 = vcmp.eq.s32.totalorder %v3349, %v3304
        %vm3383 = vcmp.eq.s32.totalorder %v3352, %v3303
        %vm3384 = vcmp.eq.s32.totalorder %v3352, %v3304
        %v3385 = vsel %vm3353, 1, 0
        %v3386 = vsel %vm3354, 1, 0
        %v3387 = vsel %vm3355, 1, 0
        %v3388 = vsel %vm3356, 1, 0
        %v3389 = vsel %vm3357, 1, 0
        %v3390 = vsel %vm3358, 1, 0
        %v3391 = vsel %vm3359, 1, 0
        %v3392 = vsel %vm3360, 1, 0
        %v3393 = vsel %vm3361, 1, 0
        %v3394 = vsel %vm3362, 1, 0
        %v3395 = vsel %vm3363, 1, 0
        %v3396 = vsel %vm3364, 1, 0
        %v3397 = vsel %vm3365, 1, 0
        %v3398 = vsel %vm3366, 1, 0
        %v3399 = vsel %vm3367, 1, 0
        %v3400 = vsel %vm3368, 1, 0
        %v3401 = vsel %vm3369, 1, 0
        %v3402 = vsel %vm3370, 1, 0
        %v3403 = vsel %vm3371, 1, 0
        %v3404 = vsel %vm3372, 1, 0
        %v3405 = vsel %vm3373, 1, 0
        %v3406 = vsel %vm3374, 1, 0
        %v3407 = vsel %vm3375, 1, 0
        %v3408 = vsel %vm3376, 1, 0
        %v3409 = vsel %vm3377, 1, 0
        %v3410 = vsel %vm3378, 1, 0
        %v3411 = vsel %vm3379, 1, 0
        %v3412 = vsel %vm3380, 1, 0
        %v3413 = vsel %vm3381, 1, 0
        %v3414 = vsel %vm3382, 1, 0
        %v3415 = vsel %vm3383, 1, 0
        %v3416 = vsel %vm3384, 1, 0
        %v3417 = vcvt.s32.f32 %v3385
        %v3418 = vcvt.s32.f32 %v3386
        %v3419 = vcvt.s32.f32 %v3387
        %v3420 = vcvt.s32.f32 %v3388
        %v3421 = vcvt.s32.f32 %v3389
        %v3422 = vcvt.s32.f32 %v3390
        %v3423 = vcvt.s32.f32 %v3391
        %v3424 = vcvt.s32.f32 %v3392
        %v3425 = vcvt.s32.f32 %v3393
        %v3426 = vcvt.s32.f32 %v3394
        %v3427 = vcvt.s32.f32 %v3395
        %v3428 = vcvt.s32.f32 %v3396
        %v3429 = vcvt.s32.f32 %v3397
        %v3430 = vcvt.s32.f32 %v3398
        %v3431 = vcvt.s32.f32 %v3399
        %v3432 = vcvt.s32.f32 %v3400
        %v3433 = vcvt.s32.f32 %v3401
        %v3434 = vcvt.s32.f32 %v3402
        %v3435 = vcvt.s32.f32 %v3403
        %v3436 = vcvt.s32.f32 %v3404
        %v3437 = vcvt.s32.f32 %v3405
        %v3438 = vcvt.s32.f32 %v3406
        %v3439 = vcvt.s32.f32 %v3407
        %v3440 = vcvt.s32.f32 %v3408
        %v3441 = vcvt.s32.f32 %v3409
        %v3442 = vcvt.s32.f32 %v3410
        %v3443 = vcvt.s32.f32 %v3411
        %v3444 = vcvt.s32.f32 %v3412
        %v3445 = vcvt.s32.f32 %v3413
        %v3446 = vcvt.s32.f32 %v3414
        %v3447 = vcvt.s32.f32 %v3415
        %v3448 = vcvt.s32.f32 %v3416
        %3450 = vset.pattern.permute.xlu0 0
        %3451 = vperm.xlu0 %3450, %v730
        %v3452 = vpop.permute.xlu0 %3451
        %3455 = vset.pattern.permute.xlu0 0
        %3456 = vperm.xlu0 %3455, %v731
        %v3457 = vpop.permute.xlu0 %3456
        %3460 = vset.pattern.permute.xlu0 0
        %3461 = vperm.xlu0 %3460, %v732
        %v3462 = vpop.permute.xlu0 %3461
        %3465 = vset.pattern.permute.xlu0 0
        %3466 = vperm.xlu0 %3465, %v733
        %v3467 = vpop.permute.xlu0 %3466
        %3470 = vset.pattern.permute.xlu0 0
        %3471 = vperm.xlu0 %3470, %v734
        %v3472 = vpop.permute.xlu0 %3471
        %3475 = vset.pattern.permute.xlu0 0
        %3476 = vperm.xlu0 %3475, %v735
        %v3477 = vpop.permute.xlu0 %3476
        %3480 = vset.pattern.permute.xlu0 0
        %3481 = vperm.xlu0 %3480, %v736
        %v3482 = vpop.permute.xlu0 %3481
        %3485 = vset.pattern.permute.xlu0 0
        %3486 = vperm.xlu0 %3485, %v737
        %v3487 = vpop.permute.xlu0 %3486
        %3490 = vset.pattern.permute.xlu0 0
        %3491 = vperm.xlu0 %3490, %v738
        %v3492 = vpop.permute.xlu0 %3491
        %3495 = vset.pattern.permute.xlu0 0
        %3496 = vperm.xlu0 %3495, %v739
        %v3497 = vpop.permute.xlu0 %3496
        %3500 = vset.pattern.permute.xlu0 0
        %3501 = vperm.xlu0 %3500, %v740
        %v3502 = vpop.permute.xlu0 %3501
        %3505 = vset.pattern.permute.xlu0 0
        %3506 = vperm.xlu0 %3505, %v741
        %v3507 = vpop.permute.xlu0 %3506
        %3510 = vset.pattern.permute.xlu0 0
        %3511 = vperm.xlu0 %3510, %v742
        %v3512 = vpop.permute.xlu0 %3511
        %3515 = vset.pattern.permute.xlu0 0
        %3516 = vperm.xlu0 %3515, %v743
        %v3517 = vpop.permute.xlu0 %3516
        %3520 = vset.pattern.permute.xlu0 0
        %3521 = vperm.xlu0 %3520, %v744
        %v3522 = vpop.permute.xlu0 %3521
        %3525 = vset.pattern.permute.xlu0 0
        %3526 = vperm.xlu0 %3525, %v745
        %v3527 = vpop.permute.xlu0 %3526
        %v3529 = vmul.f32 %v3417, %v3452
        %v3530 = vmul.f32 %v3418, %v3452
        %v3531 = vmul.f32 %v3419, %v3457
        %v3532 = vmul.f32 %v3420, %v3457
        %v3533 = vmul.f32 %v3421, %v3462
        %v3534 = vmul.f32 %v3422, %v3462
        %v3535 = vmul.f32 %v3423, %v3467
        %v3536 = vmul.f32 %v3424, %v3467
        %v3537 = vmul.f32 %v3425, %v3472
        %v3538 = vmul.f32 %v3426, %v3472
        %v3539 = vmul.f32 %v3427, %v3477
        %v3540 = vmul.f32 %v3428, %v3477
        %v3541 = vmul.f32 %v3429, %v3482
        %v3542 = vmul.f32 %v3430, %v3482
        %v3543 = vmul.f32 %v3431, %v3487
        %v3544 = vmul.f32 %v3432, %v3487
        %v3545 = vmul.f32 %v3433, %v3492
        %v3546 = vmul.f32 %v3434, %v3492
        %v3547 = vmul.f32 %v3435, %v3497
        %v3548 = vmul.f32 %v3436, %v3497
        %v3549 = vmul.f32 %v3437, %v3502
        %v3550 = vmul.f32 %v3438, %v3502
        %v3551 = vmul.f32 %v3439, %v3507
        %v3552 = vmul.f32 %v3440, %v3507
        %v3553 = vmul.f32 %v3441, %v3512
        %v3554 = vmul.f32 %v3442, %v3512
        %v3555 = vmul.f32 %v3443, %v3517
        %v3556 = vmul.f32 %v3444, %v3517
        %v3557 = vmul.f32 %v3445, %v3522
        %v3558 = vmul.f32 %v3446, %v3522
        %v3559 = vmul.f32 %v3447, %v3527
        %v3560 = vmul.f32 %v3448, %v3527
        %v3561 = vadd.f32 %v3529, 0.0
        %v3562 = vadd.f32 %v3530, 0.0
        %v3563 = vadd.f32 %v3531, 0.0
        %v3564 = vadd.f32 %v3532, 0.0
        %v3565 = vadd.f32 %v3533, 0.0
        %v3566 = vadd.f32 %v3534, 0.0
        %v3567 = vadd.f32 %v3535, 0.0
        %v3568 = vadd.f32 %v3536, 0.0
        %v3569 = vadd.f32 %v3537, 0.0
        %v3570 = vadd.f32 %v3538, 0.0
        %v3571 = vadd.f32 %v3539, 0.0
        %v3572 = vadd.f32 %v3540, 0.0
        %v3573 = vadd.f32 %v3541, 0.0
        %v3574 = vadd.f32 %v3542, 0.0
        %v3575 = vadd.f32 %v3543, 0.0
        %v3576 = vadd.f32 %v3544, 0.0
        %v3577 = vadd.f32 %v3545, 0.0
        %v3578 = vadd.f32 %v3546, 0.0
        %v3579 = vadd.f32 %v3547, 0.0
        %v3580 = vadd.f32 %v3548, 0.0
        %v3581 = vadd.f32 %v3549, 0.0
        %v3582 = vadd.f32 %v3550, 0.0
        %v3583 = vadd.f32 %v3551, 0.0
        %v3584 = vadd.f32 %v3552, 0.0
        %v3585 = vadd.f32 %v3553, 0.0
        %v3586 = vadd.f32 %v3554, 0.0
        %v3587 = vadd.f32 %v3555, 0.0
        %v3588 = vadd.f32 %v3556, 0.0
        %v3589 = vadd.f32 %v3557, 0.0
        %v3590 = vadd.f32 %v3558, 0.0
        %v3591 = vadd.f32 %v3559, 0.0
        %v3592 = vadd.f32 %v3560, 0.0
        %3593 = vset.pattern.permute.xlu0 1
        %3594 = vperm.xlu0 %3593, %v714
        %v3595 = vpop.permute.xlu0 %3594
        %3596 = vset.pattern.permute.xlu0 1
        %3597 = vperm.xlu0 %3596, %v715
        %v3598 = vpop.permute.xlu0 %3597
        %3599 = vset.pattern.permute.xlu0 1
        %3600 = vperm.xlu0 %3599, %v716
        %v3601 = vpop.permute.xlu0 %3600
        %3602 = vset.pattern.permute.xlu0 1
        %3603 = vperm.xlu0 %3602, %v717
        %v3604 = vpop.permute.xlu0 %3603
        %3605 = vset.pattern.permute.xlu0 1
        %3606 = vperm.xlu0 %3605, %v718
        %v3607 = vpop.permute.xlu0 %3606
        %3608 = vset.pattern.permute.xlu0 1
        %3609 = vperm.xlu0 %3608, %v719
        %v3610 = vpop.permute.xlu0 %3609
        %3611 = vset.pattern.permute.xlu0 1
        %3612 = vperm.xlu0 %3611, %v720
        %v3613 = vpop.permute.xlu0 %3612
        %3614 = vset.pattern.permute.xlu0 1
        %3615 = vperm.xlu0 %3614, %v721
        %v3616 = vpop.permute.xlu0 %3615
        %3617 = vset.pattern.permute.xlu0 1
        %3618 = vperm.xlu0 %3617, %v722
        %v3619 = vpop.permute.xlu0 %3618
        %3620 = vset.pattern.permute.xlu0 1
        %3621 = vperm.xlu0 %3620, %v723
        %v3622 = vpop.permute.xlu0 %3621
        %3623 = vset.pattern.permute.xlu0 1
        %3624 = vperm.xlu0 %3623, %v724
        %v3625 = vpop.permute.xlu0 %3624
        %3626 = vset.pattern.permute.xlu0 1
        %3627 = vperm.xlu0 %3626, %v725
        %v3628 = vpop.permute.xlu0 %3627
        %3629 = vset.pattern.permute.xlu0 1
        %3630 = vperm.xlu0 %3629, %v726
        %v3631 = vpop.permute.xlu0 %3630
        %3632 = vset.pattern.permute.xlu0 1
        %3633 = vperm.xlu0 %3632, %v727
        %v3634 = vpop.permute.xlu0 %3633
        %3635 = vset.pattern.permute.xlu0 1
        %3636 = vperm.xlu0 %3635, %v728
        %v3637 = vpop.permute.xlu0 %3636
        %3638 = vset.pattern.permute.xlu0 1
        %3639 = vperm.xlu0 %3638, %v729
        %v3640 = vpop.permute.xlu0 %3639
        %vm3641 = vcmp.eq.s32.totalorder %v3595, %v3303
        %vm3642 = vcmp.eq.s32.totalorder %v3595, %v3304
        %vm3643 = vcmp.eq.s32.totalorder %v3598, %v3303
        %vm3644 = vcmp.eq.s32.totalorder %v3598, %v3304
        %vm3645 = vcmp.eq.s32.totalorder %v3601, %v3303
        %vm3646 = vcmp.eq.s32.totalorder %v3601, %v3304
        %vm3647 = vcmp.eq.s32.totalorder %v3604, %v3303
        %vm3648 = vcmp.eq.s32.totalorder %v3604, %v3304
        %vm3649 = vcmp.eq.s32.totalorder %v3607, %v3303
        %vm3650 = vcmp.eq.s32.totalorder %v3607, %v3304
        %vm3651 = vcmp.eq.s32.totalorder %v3610, %v3303
        %vm3652 = vcmp.eq.s32.totalorder %v3610, %v3304
        %vm3653 = vcmp.eq.s32.totalorder %v3613, %v3303
        %vm3654 = vcmp.eq.s32.totalorder %v3613, %v3304
        %vm3655 = vcmp.eq.s32.totalorder %v3616, %v3303
        %vm3656 = vcmp.eq.s32.totalorder %v3616, %v3304
        %vm3657 = vcmp.eq.s32.totalorder %v3619, %v3303
        %vm3658 = vcmp.eq.s32.totalorder %v3619, %v3304
        %vm3659 = vcmp.eq.s32.totalorder %v3622, %v3303
        %vm3660 = vcmp.eq.s32.totalorder %v3622, %v3304
        %vm3661 = vcmp.eq.s32.totalorder %v3625, %v3303
        %vm3662 = vcmp.eq.s32.totalorder %v3625, %v3304
        %vm3663 = vcmp.eq.s32.totalorder %v3628, %v3303
        %vm3664 = vcmp.eq.s32.totalorder %v3628, %v3304
        %vm3665 = vcmp.eq.s32.totalorder %v3631, %v3303
        %vm3666 = vcmp.eq.s32.totalorder %v3631, %v3304
        %vm3667 = vcmp.eq.s32.totalorder %v3634, %v3303
        %vm3668 = vcmp.eq.s32.totalorder %v3634, %v3304
        %vm3669 = vcmp.eq.s32.totalorder %v3637, %v3303
        %vm3670 = vcmp.eq.s32.totalorder %v3637, %v3304
        %vm3671 = vcmp.eq.s32.totalorder %v3640, %v3303
        %vm3672 = vcmp.eq.s32.totalorder %v3640, %v3304
        %v3673 = vsel %vm3641, 1, 0
        %v3674 = vsel %vm3642, 1, 0
        %v3675 = vsel %vm3643, 1, 0
        %v3676 = vsel %vm3644, 1, 0
        %v3677 = vsel %vm3645, 1, 0
        %v3678 = vsel %vm3646, 1, 0
        %v3679 = vsel %vm3647, 1, 0
        %v3680 = vsel %vm3648, 1, 0
        %v3681 = vsel %vm3649, 1, 0
        %v3682 = vsel %vm3650, 1, 0
        %v3683 = vsel %vm3651, 1, 0
        %v3684 = vsel %vm3652, 1, 0
        %v3685 = vsel %vm3653, 1, 0
        %v3686 = vsel %vm3654, 1, 0
        %v3687 = vsel %vm3655, 1, 0
        %v3688 = vsel %vm3656, 1, 0
        %v3689 = vsel %vm3657, 1, 0
        %v3690 = vsel %vm3658, 1, 0
        %v3691 = vsel %vm3659, 1, 0
        %v3692 = vsel %vm3660, 1, 0
        %v3693 = vsel %vm3661, 1, 0
        %v3694 = vsel %vm3662, 1, 0
        %v3695 = vsel %vm3663, 1, 0
        %v3696 = vsel %vm3664, 1, 0
        %v3697 = vsel %vm3665, 1, 0
        %v3698 = vsel %vm3666, 1, 0
        %v3699 = vsel %vm3667, 1, 0
        %v3700 = vsel %vm3668, 1, 0
        %v3701 = vsel %vm3669, 1, 0
        %v3702 = vsel %vm3670, 1, 0
        %v3703 = vsel %vm3671, 1, 0
        %v3704 = vsel %vm3672, 1, 0
        %v3705 = vcvt.s32.f32 %v3673
        %v3706 = vcvt.s32.f32 %v3674
        %v3707 = vcvt.s32.f32 %v3675
        %v3708 = vcvt.s32.f32 %v3676
        %v3709 = vcvt.s32.f32 %v3677
        %v3710 = vcvt.s32.f32 %v3678
        %v3711 = vcvt.s32.f32 %v3679
        %v3712 = vcvt.s32.f32 %v3680
        %v3713 = vcvt.s32.f32 %v3681
        %v3714 = vcvt.s32.f32 %v3682
        %v3715 = vcvt.s32.f32 %v3683
        %v3716 = vcvt.s32.f32 %v3684
        %v3717 = vcvt.s32.f32 %v3685
        %v3718 = vcvt.s32.f32 %v3686
        %v3719 = vcvt.s32.f32 %v3687
        %v3720 = vcvt.s32.f32 %v3688
        %v3721 = vcvt.s32.f32 %v3689
        %v3722 = vcvt.s32.f32 %v3690
        %v3723 = vcvt.s32.f32 %v3691
        %v3724 = vcvt.s32.f32 %v3692
        %v3725 = vcvt.s32.f32 %v3693
        %v3726 = vcvt.s32.f32 %v3694
        %v3727 = vcvt.s32.f32 %v3695
        %v3728 = vcvt.s32.f32 %v3696
        %v3729 = vcvt.s32.f32 %v3697
        %v3730 = vcvt.s32.f32 %v3698
        %v3731 = vcvt.s32.f32 %v3699
        %v3732 = vcvt.s32.f32 %v3700
        %v3733 = vcvt.s32.f32 %v3701
        %v3734 = vcvt.s32.f32 %v3702
        %v3735 = vcvt.s32.f32 %v3703
        %v3736 = vcvt.s32.f32 %v3704
        %3737 = vset.pattern.permute.xlu0 1
        %3738 = vperm.xlu0 %3737, %v730
        %v3739 = vpop.permute.xlu0 %3738
        %3741 = vset.pattern.permute.xlu0 1
        %3742 = vperm.xlu0 %3741, %v731
        %v3743 = vpop.permute.xlu0 %3742
        %3745 = vset.pattern.permute.xlu0 1
        %3746 = vperm.xlu0 %3745, %v732
        %v3747 = vpop.permute.xlu0 %3746
        %3749 = vset.pattern.permute.xlu0 1
        %3750 = vperm.xlu0 %3749, %v733
        %v3751 = vpop.permute.xlu0 %3750
        %3753 = vset.pattern.permute.xlu0 1
        %3754 = vperm.xlu0 %3753, %v734
        %v3755 = vpop.permute.xlu0 %3754
        %3757 = vset.pattern.permute.xlu0 1
        %3758 = vperm.xlu0 %3757, %v735
        %v3759 = vpop.permute.xlu0 %3758
        %3761 = vset.pattern.permute.xlu0 1
        %3762 = vperm.xlu0 %3761, %v736
        %v3763 = vpop.permute.xlu0 %3762
        %3765 = vset.pattern.permute.xlu0 1
        %3766 = vperm.xlu0 %3765, %v737
        %v3767 = vpop.permute.xlu0 %3766
        %3769 = vset.pattern.permute.xlu0 1
        %3770 = vperm.xlu0 %3769, %v738
        %v3771 = vpop.permute.xlu0 %3770
        %3773 = vset.pattern.permute.xlu0 1
        %3774 = vperm.xlu0 %3773, %v739
        %v3775 = vpop.permute.xlu0 %3774
        %3777 = vset.pattern.permute.xlu0 1
        %3778 = vperm.xlu0 %3777, %v740
        %v3779 = vpop.permute.xlu0 %3778
        %3781 = vset.pattern.permute.xlu0 1
        %3782 = vperm.xlu0 %3781, %v741
        %v3783 = vpop.permute.xlu0 %3782
        %3785 = vset.pattern.permute.xlu0 1
        %3786 = vperm.xlu0 %3785, %v742
        %v3787 = vpop.permute.xlu0 %3786
        %3789 = vset.pattern.permute.xlu0 1
        %3790 = vperm.xlu0 %3789, %v743
        %v3791 = vpop.permute.xlu0 %3790
        %3793 = vset.pattern.permute.xlu0 1
        %3794 = vperm.xlu0 %3793, %v744
        %v3795 = vpop.permute.xlu0 %3794
        %3797 = vset.pattern.permute.xlu0 1
        %3798 = vperm.xlu0 %3797, %v745
        %v3799 = vpop.permute.xlu0 %3798
        %v3801 = vmul.f32 %v3705, %v3739
        %v3802 = vmul.f32 %v3706, %v3739
        %v3803 = vmul.f32 %v3707, %v3743
        %v3804 = vmul.f32 %v3708, %v3743
        %v3805 = vmul.f32 %v3709, %v3747
        %v3806 = vmul.f32 %v3710, %v3747
        %v3807 = vmul.f32 %v3711, %v3751
        %v3808 = vmul.f32 %v3712, %v3751
        %v3809 = vmul.f32 %v3713, %v3755
        %v3810 = vmul.f32 %v3714, %v3755
        %v3811 = vmul.f32 %v3715, %v3759
        %v3812 = vmul.f32 %v3716, %v3759
        %v3813 = vmul.f32 %v3717, %v3763
        %v3814 = vmul.f32 %v3718, %v3763
        %v3815 = vmul.f32 %v3719, %v3767
        %v3816 = vmul.f32 %v3720, %v3767
        %v3817 = vmul.f32 %v3721, %v3771
        %v3818 = vmul.f32 %v3722, %v3771
        %v3819 = vmul.f32 %v3723, %v3775
        %v3820 = vmul.f32 %v3724, %v3775
        %v3821 = vmul.f32 %v3725, %v3779
        %v3822 = vmul.f32 %v3726, %v3779
        %v3823 = vmul.f32 %v3727, %v3783
        %v3824 = vmul.f32 %v3728, %v3783
        %v3825 = vmul.f32 %v3729, %v3787
        %v3826 = vmul.f32 %v3730, %v3787
        %v3827 = vmul.f32 %v3731, %v3791
        %v3828 = vmul.f32 %v3732, %v3791
        %v3829 = vmul.f32 %v3733, %v3795
        %v3830 = vmul.f32 %v3734, %v3795
        %v3831 = vmul.f32 %v3735, %v3799
        %v3832 = vmul.f32 %v3736, %v3799
        %v3833 = vadd.f32 %v3561, %v3801
        %v3834 = vadd.f32 %v3562, %v3802
        %v3835 = vadd.f32 %v3563, %v3803
        %v3836 = vadd.f32 %v3564, %v3804
        %v3837 = vadd.f32 %v3565, %v3805
        %v3838 = vadd.f32 %v3566, %v3806
        %v3839 = vadd.f32 %v3567, %v3807
        %v3840 = vadd.f32 %v3568, %v3808
        %v3841 = vadd.f32 %v3569, %v3809
        %v3842 = vadd.f32 %v3570, %v3810
        %v3843 = vadd.f32 %v3571, %v3811
        %v3844 = vadd.f32 %v3572, %v3812
        %v3845 = vadd.f32 %v3573, %v3813
        %v3846 = vadd.f32 %v3574, %v3814
        %v3847 = vadd.f32 %v3575, %v3815
        %v3848 = vadd.f32 %v3576, %v3816
        %v3849 = vadd.f32 %v3577, %v3817
        %v3850 = vadd.f32 %v3578, %v3818
        %v3851 = vadd.f32 %v3579, %v3819
        %v3852 = vadd.f32 %v3580, %v3820
        %v3853 = vadd.f32 %v3581, %v3821
        %v3854 = vadd.f32 %v3582, %v3822
        %v3855 = vadd.f32 %v3583, %v3823
        %v3856 = vadd.f32 %v3584, %v3824
        %v3857 = vadd.f32 %v3585, %v3825
        %v3858 = vadd.f32 %v3586, %v3826
        %v3859 = vadd.f32 %v3587, %v3827
        %v3860 = vadd.f32 %v3588, %v3828
        %v3861 = vadd.f32 %v3589, %v3829
        %v3862 = vadd.f32 %v3590, %v3830
        %v3863 = vadd.f32 %v3591, %v3831
        %v3864 = vadd.f32 %v3592, %v3832
        %3865 = vset.pattern.permute.xlu0 2
        %3866 = vperm.xlu0 %3865, %v714
        %v3867 = vpop.permute.xlu0 %3866
        %3868 = vset.pattern.permute.xlu0 2
        %3869 = vperm.xlu0 %3868, %v715
        %v3870 = vpop.permute.xlu0 %3869
        %3871 = vset.pattern.permute.xlu0 2
        %3872 = vperm.xlu0 %3871, %v716
        %v3873 = vpop.permute.xlu0 %3872
        %3874 = vset.pattern.permute.xlu0 2
        %3875 = vperm.xlu0 %3874, %v717
        %v3876 = vpop.permute.xlu0 %3875
        %3877 = vset.pattern.permute.xlu0 2
        %3878 = vperm.xlu0 %3877, %v718
        %v3879 = vpop.permute.xlu0 %3878
        %3880 = vset.pattern.permute.xlu0 2
        %3881 = vperm.xlu0 %3880, %v719
        %v3882 = vpop.permute.xlu0 %3881
        %3883 = vset.pattern.permute.xlu0 2
        %3884 = vperm.xlu0 %3883, %v720
        %v3885 = vpop.permute.xlu0 %3884
        %3886 = vset.pattern.permute.xlu0 2
        %3887 = vperm.xlu0 %3886, %v721
        %v3888 = vpop.permute.xlu0 %3887
        %3889 = vset.pattern.permute.xlu0 2
        %3890 = vperm.xlu0 %3889, %v722
        %v3891 = vpop.permute.xlu0 %3890
        %3892 = vset.pattern.permute.xlu0 2
        %3893 = vperm.xlu0 %3892, %v723
        %v3894 = vpop.permute.xlu0 %3893
        %3895 = vset.pattern.permute.xlu0 2
        %3896 = vperm.xlu0 %3895, %v724
        %v3897 = vpop.permute.xlu0 %3896
        %3898 = vset.pattern.permute.xlu0 2
        %3899 = vperm.xlu0 %3898, %v725
        %v3900 = vpop.permute.xlu0 %3899
        %3901 = vset.pattern.permute.xlu0 2
        %3902 = vperm.xlu0 %3901, %v726
        %v3903 = vpop.permute.xlu0 %3902
        %3904 = vset.pattern.permute.xlu0 2
        %3905 = vperm.xlu0 %3904, %v727
        %v3906 = vpop.permute.xlu0 %3905
        %3907 = vset.pattern.permute.xlu0 2
        %3908 = vperm.xlu0 %3907, %v728
        %v3909 = vpop.permute.xlu0 %3908
        %3910 = vset.pattern.permute.xlu0 2
        %3911 = vperm.xlu0 %3910, %v729
        %v3912 = vpop.permute.xlu0 %3911
        %vm3913 = vcmp.eq.s32.totalorder %v3867, %v3303
        %vm3914 = vcmp.eq.s32.totalorder %v3867, %v3304
        %vm3915 = vcmp.eq.s32.totalorder %v3870, %v3303
        %vm3916 = vcmp.eq.s32.totalorder %v3870, %v3304
        %vm3917 = vcmp.eq.s32.totalorder %v3873, %v3303
        %vm3918 = vcmp.eq.s32.totalorder %v3873, %v3304
        %vm3919 = vcmp.eq.s32.totalorder %v3876, %v3303
        %vm3920 = vcmp.eq.s32.totalorder %v3876, %v3304
        %vm3921 = vcmp.eq.s32.totalorder %v3879, %v3303
        %vm3922 = vcmp.eq.s32.totalorder %v3879, %v3304
        %vm3923 = vcmp.eq.s32.totalorder %v3882, %v3303
        %vm3924 = vcmp.eq.s32.totalorder %v3882, %v3304
        %vm3925 = vcmp.eq.s32.totalorder %v3885, %v3303
        %vm3926 = vcmp.eq.s32.totalorder %v3885, %v3304
        %vm3927 = vcmp.eq.s32.totalorder %v3888, %v3303
        %vm3928 = vcmp.eq.s32.totalorder %v3888, %v3304
        %vm3929 = vcmp.eq.s32.totalorder %v3891, %v3303
        %vm3930 = vcmp.eq.s32.totalorder %v3891, %v3304
        %vm3931 = vcmp.eq.s32.totalorder %v3894, %v3303
        %vm3932 = vcmp.eq.s32.totalorder %v3894, %v3304
        %vm3933 = vcmp.eq.s32.totalorder %v3897, %v3303
        %vm3934 = vcmp.eq.s32.totalorder %v3897, %v3304
        %vm3935 = vcmp.eq.s32.totalorder %v3900, %v3303
        %vm3936 = vcmp.eq.s32.totalorder %v3900, %v3304
        %vm3937 = vcmp.eq.s32.totalorder %v3903, %v3303
        %vm3938 = vcmp.eq.s32.totalorder %v3903, %v3304
        %vm3939 = vcmp.eq.s32.totalorder %v3906, %v3303
        %vm3940 = vcmp.eq.s32.totalorder %v3906, %v3304
        %vm3941 = vcmp.eq.s32.totalorder %v3909, %v3303
        %vm3942 = vcmp.eq.s32.totalorder %v3909, %v3304
        %vm3943 = vcmp.eq.s32.totalorder %v3912, %v3303
        %vm3944 = vcmp.eq.s32.totalorder %v3912, %v3304
        %v3945 = vsel %vm3913, 1, 0
        %v3946 = vsel %vm3914, 1, 0
        %v3947 = vsel %vm3915, 1, 0
        %v3948 = vsel %vm3916, 1, 0
        %v3949 = vsel %vm3917, 1, 0
        %v3950 = vsel %vm3918, 1, 0
        %v3951 = vsel %vm3919, 1, 0
        %v3952 = vsel %vm3920, 1, 0
        %v3953 = vsel %vm3921, 1, 0
        %v3954 = vsel %vm3922, 1, 0
        %v3955 = vsel %vm3923, 1, 0
        %v3956 = vsel %vm3924, 1, 0
        %v3957 = vsel %vm3925, 1, 0
        %v3958 = vsel %vm3926, 1, 0
        %v3959 = vsel %vm3927, 1, 0
        %v3960 = vsel %vm3928, 1, 0
        %v3961 = vsel %vm3929, 1, 0
        %v3962 = vsel %vm3930, 1, 0
        %v3963 = vsel %vm3931, 1, 0
        %v3964 = vsel %vm3932, 1, 0
        %v3965 = vsel %vm3933, 1, 0
        %v3966 = vsel %vm3934, 1, 0
        %v3967 = vsel %vm3935, 1, 0
        %v3968 = vsel %vm3936, 1, 0
        %v3969 = vsel %vm3937, 1, 0
        %v3970 = vsel %vm3938, 1, 0
        %v3971 = vsel %vm3939, 1, 0
        %v3972 = vsel %vm3940, 1, 0
        %v3973 = vsel %vm3941, 1, 0
        %v3974 = vsel %vm3942, 1, 0
        %v3975 = vsel %vm3943, 1, 0
        %v3976 = vsel %vm3944, 1, 0
        %v3977 = vcvt.s32.f32 %v3945
        %v3978 = vcvt.s32.f32 %v3946
        %v3979 = vcvt.s32.f32 %v3947
        %v3980 = vcvt.s32.f32 %v3948
        %v3981 = vcvt.s32.f32 %v3949
        %v3982 = vcvt.s32.f32 %v3950
        %v3983 = vcvt.s32.f32 %v3951
        %v3984 = vcvt.s32.f32 %v3952
        %v3985 = vcvt.s32.f32 %v3953
        %v3986 = vcvt.s32.f32 %v3954
        %v3987 = vcvt.s32.f32 %v3955
        %v3988 = vcvt.s32.f32 %v3956
        %v3989 = vcvt.s32.f32 %v3957
        %v3990 = vcvt.s32.f32 %v3958
        %v3991 = vcvt.s32.f32 %v3959
        %v3992 = vcvt.s32.f32 %v3960
        %v3993 = vcvt.s32.f32 %v3961
        %v3994 = vcvt.s32.f32 %v3962
        %v3995 = vcvt.s32.f32 %v3963
        %v3996 = vcvt.s32.f32 %v3964
        %v3997 = vcvt.s32.f32 %v3965
        %v3998 = vcvt.s32.f32 %v3966
        %v3999 = vcvt.s32.f32 %v3967
        %v4000 = vcvt.s32.f32 %v3968
        %v4001 = vcvt.s32.f32 %v3969
        %v4002 = vcvt.s32.f32 %v3970
        %v4003 = vcvt.s32.f32 %v3971
        %v4004 = vcvt.s32.f32 %v3972
        %v4005 = vcvt.s32.f32 %v3973
        %v4006 = vcvt.s32.f32 %v3974
        %v4007 = vcvt.s32.f32 %v3975
        %v4008 = vcvt.s32.f32 %v3976
        %4009 = vset.pattern.permute.xlu0 2
        %4010 = vperm.xlu0 %4009, %v730
        %v4011 = vpop.permute.xlu0 %4010
        %4013 = vset.pattern.permute.xlu0 2
        %4014 = vperm.xlu0 %4013, %v731
        %v4015 = vpop.permute.xlu0 %4014
        %4017 = vset.pattern.permute.xlu0 2
        %4018 = vperm.xlu0 %4017, %v732
        %v4019 = vpop.permute.xlu0 %4018
        %4021 = vset.pattern.permute.xlu0 2
        %4022 = vperm.xlu0 %4021, %v733
        %v4023 = vpop.permute.xlu0 %4022
        %4025 = vset.pattern.permute.xlu0 2
        %4026 = vperm.xlu0 %4025, %v734
        %v4027 = vpop.permute.xlu0 %4026
        %4029 = vset.pattern.permute.xlu0 2
        %4030 = vperm.xlu0 %4029, %v735
        %v4031 = vpop.permute.xlu0 %4030
        %4033 = vset.pattern.permute.xlu0 2
        %4034 = vperm.xlu0 %4033, %v736
        %v4035 = vpop.permute.xlu0 %4034
        %4037 = vset.pattern.permute.xlu0 2
        %4038 = vperm.xlu0 %4037, %v737
        %v4039 = vpop.permute.xlu0 %4038
        %4041 = vset.pattern.permute.xlu0 2
        %4042 = vperm.xlu0 %4041, %v738
        %v4043 = vpop.permute.xlu0 %4042
        %4045 = vset.pattern.permute.xlu0 2
        %4046 = vperm.xlu0 %4045, %v739
        %v4047 = vpop.permute.xlu0 %4046
        %4049 = vset.pattern.permute.xlu0 2
        %4050 = vperm.xlu0 %4049, %v740
        %v4051 = vpop.permute.xlu0 %4050
        %4053 = vset.pattern.permute.xlu0 2
        %4054 = vperm.xlu0 %4053, %v741
        %v4055 = vpop.permute.xlu0 %4054
        %4057 = vset.pattern.permute.xlu0 2
        %4058 = vperm.xlu0 %4057, %v742
        %v4059 = vpop.permute.xlu0 %4058
        %4061 = vset.pattern.permute.xlu0 2
        %4062 = vperm.xlu0 %4061, %v743
        %v4063 = vpop.permute.xlu0 %4062
        %4065 = vset.pattern.permute.xlu0 2
        %4066 = vperm.xlu0 %4065, %v744
        %v4067 = vpop.permute.xlu0 %4066
        %4069 = vset.pattern.permute.xlu0 2
        %4070 = vperm.xlu0 %4069, %v745
        %v4071 = vpop.permute.xlu0 %4070
        %v4073 = vmul.f32 %v3977, %v4011
        %v4074 = vmul.f32 %v3978, %v4011
        %v4075 = vmul.f32 %v3979, %v4015
        %v4076 = vmul.f32 %v3980, %v4015
        %v4077 = vmul.f32 %v3981, %v4019
        %v4078 = vmul.f32 %v3982, %v4019
        %v4079 = vmul.f32 %v3983, %v4023
        %v4080 = vmul.f32 %v3984, %v4023
        %v4081 = vmul.f32 %v3985, %v4027
        %v4082 = vmul.f32 %v3986, %v4027
        %v4083 = vmul.f32 %v3987, %v4031
        %v4084 = vmul.f32 %v3988, %v4031
        %v4085 = vmul.f32 %v3989, %v4035
        %v4086 = vmul.f32 %v3990, %v4035
        %v4087 = vmul.f32 %v3991, %v4039
        %v4088 = vmul.f32 %v3992, %v4039
        %v4089 = vmul.f32 %v3993, %v4043
        %v4090 = vmul.f32 %v3994, %v4043
        %v4091 = vmul.f32 %v3995, %v4047
        %v4092 = vmul.f32 %v3996, %v4047
        %v4093 = vmul.f32 %v3997, %v4051
        %v4094 = vmul.f32 %v3998, %v4051
        %v4095 = vmul.f32 %v3999, %v4055
        %v4096 = vmul.f32 %v4000, %v4055
        %v4097 = vmul.f32 %v4001, %v4059
        %v4098 = vmul.f32 %v4002, %v4059
        %v4099 = vmul.f32 %v4003, %v4063
        %v4100 = vmul.f32 %v4004, %v4063
        %v4101 = vmul.f32 %v4005, %v4067
        %v4102 = vmul.f32 %v4006, %v4067
        %v4103 = vmul.f32 %v4007, %v4071
        %v4104 = vmul.f32 %v4008, %v4071
        %v4105 = vadd.f32 %v3833, %v4073
        %v4106 = vadd.f32 %v3834, %v4074
        %v4107 = vadd.f32 %v3835, %v4075
        %v4108 = vadd.f32 %v3836, %v4076
        %v4109 = vadd.f32 %v3837, %v4077
        %v4110 = vadd.f32 %v3838, %v4078
        %v4111 = vadd.f32 %v3839, %v4079
        %v4112 = vadd.f32 %v3840, %v4080
        %v4113 = vadd.f32 %v3841, %v4081
        %v4114 = vadd.f32 %v3842, %v4082
        %v4115 = vadd.f32 %v3843, %v4083
        %v4116 = vadd.f32 %v3844, %v4084
        %v4117 = vadd.f32 %v3845, %v4085
        %v4118 = vadd.f32 %v3846, %v4086
        %v4119 = vadd.f32 %v3847, %v4087
        %v4120 = vadd.f32 %v3848, %v4088
        %v4121 = vadd.f32 %v3849, %v4089
        %v4122 = vadd.f32 %v3850, %v4090
        %v4123 = vadd.f32 %v3851, %v4091
        %v4124 = vadd.f32 %v3852, %v4092
        %v4125 = vadd.f32 %v3853, %v4093
        %v4126 = vadd.f32 %v3854, %v4094
        %v4127 = vadd.f32 %v3855, %v4095
        %v4128 = vadd.f32 %v3856, %v4096
        %v4129 = vadd.f32 %v3857, %v4097
        %v4130 = vadd.f32 %v3858, %v4098
        %v4131 = vadd.f32 %v3859, %v4099
        %v4132 = vadd.f32 %v3860, %v4100
        %v4133 = vadd.f32 %v3861, %v4101
        %v4134 = vadd.f32 %v3862, %v4102
        %v4135 = vadd.f32 %v3863, %v4103
        %v4136 = vadd.f32 %v3864, %v4104
        %vm4137 = vcmask 523264
        %v4139 = vsel %vm4137, %v3286, 0
        %4141 = vmatpush.msra.mxu0 0.0
        %4142 = vmatpush.msra.mxu0 0.0
        %4143 = vmatpush.msra.mxu0 0.0
        %4144 = vmatpush.msra.mxu0 0.0
        %4145 = vmatpush.msra.mxu0 0.0
        %4146 = vmatpush.msra.mxu0 0.0
        %4147 = vmatpush.msra.mxu0 0.0
        %4148 = vmatpush.msra.mxu0 0.0
        %4149 = vmatpush.msra.mxu0 %v4119
        %4150 = vmatpush.msra.mxu0 %v4117
        %4151 = vmatpush.msra.mxu0 %v4115
        %4152 = vmatpush.msra.mxu0 %v4113
        %4153 = vmatpush.msra.mxu0 %v4111
        %4154 = vmatpush.msra.mxu0 %v4109
        %4155 = vmatpush.msra.mxu0 %v4107
        %4156 = vmatpush.msra.mxu0 %v4105
        %4157 = vmatmul.f32.gmra.mxu0 %v4139
        %v4158 = vpop.f32.mrf.mxu0
        %v4159 = vadd.f32 0.0, %v4158
        %4160 = vdwg.mxu0
        %4161 = vmatpush.msra.mxu0 0.0
        %4162 = vmatpush.msra.mxu0 0.0
        %4163 = vmatpush.msra.mxu0 0.0
        %4164 = vmatpush.msra.mxu0 0.0
        %4165 = vmatpush.msra.mxu0 0.0
        %4166 = vmatpush.msra.mxu0 0.0
        %4167 = vmatpush.msra.mxu0 0.0
        %4168 = vmatpush.msra.mxu0 0.0
        %4169 = vmatpush.msra.mxu0 %v4120
        %4170 = vmatpush.msra.mxu0 %v4118
        %4171 = vmatpush.msra.mxu0 %v4116
        %4172 = vmatpush.msra.mxu0 %v4114
        %4173 = vmatpush.msra.mxu0 %v4112
        %4174 = vmatpush.msra.mxu0 %v4110
        %4175 = vmatpush.msra.mxu0 %v4108
        %4176 = vmatpush.msra.mxu0 %v4106
        %4177 = vmatmul.f32.gmra.mxu0 %v4139
        %v4178 = vpop.f32.mrf.mxu0
        %v4179 = vadd.f32 0.0, %v4178
        %4180 = vdwg.mxu0
        %v4182 = vsel %vm4137, %v3301, 0
        %4184 = vmatpush.msra.mxu0 0.0
        %4185 = vmatpush.msra.mxu0 0.0
        %4186 = vmatpush.msra.mxu0 0.0
        %4187 = vmatpush.msra.mxu0 0.0
        %4188 = vmatpush.msra.mxu0 0.0
        %4189 = vmatpush.msra.mxu0 0.0
        %4190 = vmatpush.msra.mxu0 0.0
        %4191 = vmatpush.msra.mxu0 0.0
        %4192 = vmatpush.msra.mxu0 %v4135
        %4193 = vmatpush.msra.mxu0 %v4133
        %4194 = vmatpush.msra.mxu0 %v4131
        %4195 = vmatpush.msra.mxu0 %v4129
        %4196 = vmatpush.msra.mxu0 %v4127
        %4197 = vmatpush.msra.mxu0 %v4125
        %4198 = vmatpush.msra.mxu0 %v4123
        %4199 = vmatpush.msra.mxu0 %v4121
        %4200 = vmatmul.f32.gmra.mxu0 %v4182
        %v4201 = vpop.f32.mrf.mxu0
        %v4202 = vadd.f32 0.0, %v4201
        %4203 = vdwg.mxu0
        %4204 = vmatpush.msra.mxu0 0.0
        %4205 = vmatpush.msra.mxu0 0.0
        %4206 = vmatpush.msra.mxu0 0.0
        %4207 = vmatpush.msra.mxu0 0.0
        %4208 = vmatpush.msra.mxu0 0.0
        %4209 = vmatpush.msra.mxu0 0.0
        %4210 = vmatpush.msra.mxu0 0.0
        %4211 = vmatpush.msra.mxu0 0.0
        %4212 = vmatpush.msra.mxu0 %v4136
        %4213 = vmatpush.msra.mxu0 %v4134
        %4214 = vmatpush.msra.mxu0 %v4132
        %4215 = vmatpush.msra.mxu0 %v4130
        %4216 = vmatpush.msra.mxu0 %v4128
        %4217 = vmatpush.msra.mxu0 %v4126
        %4218 = vmatpush.msra.mxu0 %v4124
        %4219 = vmatpush.msra.mxu0 %v4122
        %4220 = vmatmul.f32.gmra.mxu0 %v4182
        %v4221 = vpop.f32.mrf.mxu0
        %v4222 = vadd.f32 0.0, %v4221
        %4223 = vdwg.mxu0
        %4224 = vst.msk [vmem:[%s622] sm:$0x1] %vm3253, %v3286
        %4225 = vst.msk [vmem:[%s622 + $0x1] sm:$0x1] %vm3253, %v3301
        %v4230 = vrot.slane %v4179, 7
        %v4231 = vrot.slane %v4222, 7
        %vm4232 = vcmask 1040384
        %v4233 = vsel %vm4232, %v4159, %v4230
        %v4234 = vsel %vm4232, %v4202, %v4231
        %v4237 = vlaneseq
        %vm4238 = vcmp.ge.s32.totalorder %v4237, 0
        %vm4239 = vcmp.lt.s32.totalorder %v4237, 256
        %vm4240 = vmand %vm4238, %vm4239
        %4241 = vst.msk [vmem:[%s682] sm:$0x3] %vm4240, %v4233
        %4242 = vst.msk [vmem:[%s682 + $0x2] sm:$0x3] %vm4240, %v4234
        %s4243 = sand.u32 %s389, 1
        %s4244 = scalar_lea.sflag [#allocation3], %s4243
        %s4245 = sand.u32 %s389, 1
        %s4246 = smul.addr %s4245, 2
        %s4247 = scalar_lea.vmem [#allocation2], %s4246
        %s4248 = smul.u32 2, %s31
        %p4249 = scmp.lt.s32.totalorder %s4248, 3
        %s4250 = scalar_select %p4249, %s4248, 3
        %s4251 = smul.addr %s4250, 2
        %s4252 = scalar_lea.vmem %s16, %s4251
        // Predicated region
        $region81: #{subsets_forward.1} parent=79 // pred_check
          %p4253 = pneg %p399
        $region82: #{subsets_forward.1} parent=79 // pred_check_branch
          %4255 = sbr.rel (%p4253) target = $region84
        $region83: #{subsets_forward.1} parent=79 // pred_region
          %s4256 = smul.u32 2, %s31
          %4258 = vsyncadd %s4244, 0
          %s4259 = scalar_lea.hbm %s15, %s4256
          %s4260 = sshll.u32 %s4247, 4
          %s4261 = int_to_ptr.vmem [resolvable:$true] %s4260
          %s4262 = sshll.u32 %s4259, 4
          %s4263 = int_to_ptr.hbm [resolvable:$true] %s4262
          %4268 = dma.vmem_to_hbm [thread:$0]  %s4261, 32, %s4263, %s4244, 16, 16, 1
        $region84: #{subsets_forward.1} parent=79 // pred_fallthru
          _
        // Predicated region
        $region85: #{subsets_forward.1} parent=79 // pred_check
          %p4269 = pneg %p425
        $region86: #{subsets_forward.1} parent=79 // pred_check_branch
          %4271 = sbr.rel (%p4269) target = $region88
        $region87: #{subsets_forward.1} parent=79 // pred_region
          %s4272 = smul.u32 2, %s31
        $region88: #{subsets_forward.1} parent=79 // pred_fallthru
          _
      $region80: #{subsets_forward.1} parent=5 // pred_fallthru
        _
      %p4273 = scmp.le.s32.totalorder 2, %s26
      // Predicated region
      $region89: #{subsets_forward.1} parent=5 // pred_check
        %p4274 = pneg %p4273
      $region90: #{subsets_forward.1} parent=5 // pred_check_branch
        %4276 = sbr.rel (%p4274) target = $region92
      $region91: #{subsets_forward.1} parent=5 // pred_region
        %s4277 = ssub.s32 %s26, 2
        // Predicated region
        $region93: #{subsets_forward.1} parent=91 // pred_check
          %p4278 = pneg %p405
        $region94: #{subsets_forward.1} parent=91 // pred_check_branch
          %4280 = sbr.rel (%p4278) target = $region96
        $region95: #{subsets_forward.1} parent=91 // pred_region
          %s4281 = sand.u32 %s390, 1
          %s4282 = scalar_lea.sflag [#allocation3], %s4281
          %s4283 = sand.u32 %s390, 1
          %s4284 = smul.addr %s4283, 2
          %s4285 = scalar_lea.vmem [#allocation2], %s4284
          %4287 = dma.done %s4282, 32
        $region96: #{subsets_forward.1} parent=91 // pred_fallthru
          _
        // Predicated region
        $region97: #{subsets_forward.1} parent=91 // pred_check
          %p4288 = pneg %p431
        $region98: #{subsets_forward.1} parent=91 // pred_check_branch
          %4290 = sbr.rel (%p4288) target = $region100
        $region99: #{subsets_forward.1} parent=91 // pred_region
          %s4291 = smul.u32 2, %s32
          %p4292 = scmp.lt.s32.totalorder %s4291, 3
          %s4293 = scalar_select %p4292, %s4291, 3
          %s4294 = smul.addr %s4293, 2
          %s4295 = scalar_lea.vmem %s16, %s4294
        $region100: #{subsets_forward.1} parent=91 // pred_fallthru
          _
      $region92: #{subsets_forward.1} parent=5 // pred_fallthru
        _
    $region6: #{subsets_forward.1} parent=1 // loop_footer
      %s30 = sadd.s32 1, %s26
    $region7: #{subsets_forward.1} parent=1 // loop_footer_branch
      %25 = sbr.rel target = $region3
    $region8: #{subsets_forward.1} parent=1 // loop_exit
      _
    %4296 = vsyncpa [#allocation3], 1
    %s4297 = scalar_lea.sflag [#allocation3], 1
    %4298 = vsyncpa %s4297, 1

</llo_original>
